<compile_context>
chip_gen: v5e
topology: v5e:2x2
jax: 0.10.0
libtpu: 0.0.40
codegen_flags: <defaults>
</compile_context>

<pallas_src>
import functools
from math import sqrt

import jax
import jax.numpy as jnp
from jax.experimental import pallas as pl
from jax.experimental.pallas import tpu as pltpu


def _conv_transpose_kernel(x_ref, w_ref, b_ref, o_ref, *, scale):
    """One grid step computes one batch element.

    x_ref : VMEM (1, Hp, Wp, Cin)    dilated + padded input, channels-last
    w_ref : VMEM (kH, kW, Cin, Cout) spatially flipped ConvTranspose weight
    b_ref : VMEM (1, Cout)           bias
    o_ref : VMEM (1, Ho, Wo, Cout)   output, channels-last
    """
    kH, kW, Cin, Cout = w_ref.shape
    Ho, Wo = o_ref.shape[1], o_ref.shape[2]

    acc = jnp.zeros((Ho * Wo, Cout), jnp.float32)
    # kH*kW shifted matmuls on the MXU; the small static tap loop is unrolled.
    for kh in range(kH):
        for kw in range(kW):
            patch = x_ref[0, kh:kh + Ho, kw:kw + Wo, :]          # (Ho, Wo, Cin)
            acc = acc + jnp.dot(
                patch.reshape(Ho * Wo, Cin),                     # Wo multiple of 8 -> free collapse
                w_ref[kh, kw],                                   # (Cin, Cout)
                preferred_element_type=jnp.float32,
            )
    # EqualLR scale + bias fused into the epilogue (VPU, essentially free).
    out = acc * scale + b_ref[...]                               # (Ho*Wo, Cout)
    o_ref[0] = out.reshape(Ho, Wo, Cout).astype(o_ref.dtype)


def equal_conv_transpose2d(x, weight, bias, *, stride=1, padding=0, output_padding=0):
    """Forward pass of EqualConvTranspose2d.

    x      : (B, Cin, H, W)      NCHW, float32 (PyTorch layout)
    weight : (Cin, Cout, kH, kW) the raw `weight_orig` parameter (normal init)
    bias   : (Cout,)
    """
    B, Cin, H, W = x.shape
    wCin, Cout, kH, kW = weight.shape
    assert wCin == Cin
    assert padding <= kH - 1 and padding <= kW - 1, "padding > k-1 would need output cropping"
    # TODO(synk): groups != 1 and dilation != 1 of nn.ConvTranspose2d are not supported here.

    # EqualLR: sqrt(2 / fan_in), fan_in = weight.size(1) * kH * kW (applied in-kernel).
    scale = float(sqrt(2.0 / (Cout * kH * kW)))

    # Rearrange weight once (small): flip spatial dims, move to (kH, kW, Cin, Cout).
    w_hwio = jnp.transpose(weight[:, :, ::-1, ::-1], (2, 3, 0, 1)).astype(jnp.float32)

    # Zero-dilate by `stride`, pad by (k - 1 - padding), channels-last.
    x_nhwc = jnp.transpose(x, (0, 2, 3, 1)).astype(jnp.float32)          # (B, H, W, Cin)
    Hd, Wd = (H - 1) * stride + 1, (W - 1) * stride + 1
    x_dil = jnp.zeros((B, Hd, Wd, Cin), jnp.float32)
    x_dil = x_dil.at[:, ::stride, ::stride, :].set(x_nhwc)
    ph = (kH - 1 - padding, kH - 1 - padding + output_padding)
    pw = (kW - 1 - padding, kW - 1 - padding + output_padding)
    x_pad = jnp.pad(x_dil, ((0, 0), ph, pw, (0, 0)))
    Hp, Wp = x_pad.shape[1], x_pad.shape[2]
    Ho, Wo = Hp - kH + 1, Wp - kW + 1        # == (H-1)*stride - 2*padding + k + output_padding

    bias2d = bias.reshape(1, Cout).astype(jnp.float32)

    # Grid over batch only (weight/bias index maps are constant -> single DMA,
    # kept resident in VMEM).  For large feature maps, tile Ho with a second
    # parallel grid axis; at these sizes one block per batch element fits VMEM.
    out_nhwc = pl.pallas_call(
        functools.partial(_conv_transpose_kernel, scale=scale),
        out_shape=jax.ShapeDtypeStruct((B, Ho, Wo, Cout), jnp.float32),
        grid=(B,),
        in_specs=[
            pl.BlockSpec((1, Hp, Wp, Cin), lambda b: (b, 0, 0, 0)),
            pl.BlockSpec((kH, kW, Cin, Cout), lambda b: (0, 0, 0, 0)),
            pl.BlockSpec((1, Cout), lambda b: (0, 0)),
        ],
        out_specs=pl.BlockSpec((1, Ho, Wo, Cout), lambda b: (b, 0, 0, 0)),
        compiler_params=pltpu.CompilerParams(
            dimension_semantics=("parallel",),
        ),
    )(x_pad, w_hwio, bias2d)

    return jnp.transpose(out_nhwc, (0, 3, 1, 2))                          # back to NCHW


if __name__ == "__main__":
    # Small ProGAN-style upsampling block: (B, Cin, 8, 8) -> (B, Cout, 16, 16), k=4, s=2, p=1.
    B, Cin, Cout, H, W = 2, 16, 32, 8, 8
    kH = kW = 4
    stride, padding = 2, 1

    root = jax.random.PRNGKey(0)
    kx, kwt = jax.random.split(root)
    x = jax.random.normal(kx, (B, Cin, H, W), dtype=jnp.float32)
    # conv.weight.data.normal_()  /  conv.bias.data.zero_()
    weight = jax.random.normal(kwt, (Cin, Cout, kH, kW), dtype=jnp.float32)
    bias = jnp.zeros((Cout,), dtype=jnp.float32)

    out = equal_conv_transpose2d(x, weight, bias, stride=stride, padding=padding)
    out = jax.block_until_ready(out)

    # Pure-JAX reference with identical EqualLR scaling + PyTorch conv_transpose2d semantics.
    scale = sqrt(2.0 / (Cout * kH * kW))
    rhs = jnp.transpose((weight * scale)[:, :, ::-1, ::-1], (1, 0, 2, 3))   # (Cout, Cin, kH, kW)
    ref = jax.lax.conv_general_dilated(
        x, rhs,
        window_strides=(1, 1),
        padding=((kH - 1 - padding, kH - 1 - padding),
                 (kW - 1 - padding, kW - 1 - padding)),
        lhs_dilation=(stride, stride),
        rhs_dilation=(1, 1),
        dimension_numbers=("NCHW", "OIHW", "NCHW"),
        precision=jax.lax.Precision.HIGHEST,
    ) + bias[None, :, None, None]

    Ho = (H - 1) * stride - 2 * padding + kH
    assert out.shape == (B, Cout, Ho, Ho), out.shape
    err = float(jnp.max(jnp.abs(out - ref)))
    assert jnp.allclose(out, ref, atol=2e-3, rtol=2e-3), err

    print("KERNEL_OK")
</pallas_src>

<mosaic_0001>
module attributes {stable_mosaic.version = 11 : i64} {
  func.func @_conv_transpose_kernel(%arg0: i32, %arg1: memref<1x19x19x16xf32, #tpu.memory_space<vmem>>, %arg2: memref<4x4x16x32xf32, #tpu.memory_space<vmem>>, %arg3: memref<1x32xf32, #tpu.memory_space<vmem>>, %arg4: memref<1x16x16x32xf32, #tpu.memory_space<vmem>>) attributes {dimension_semantics = [#tpu.dimension_semantics<parallel>], iteration_bounds = array<i64: 2>, scalar_prefetch = 0 : i64, scratch_operands = 0 : i64, tpu.core_type = #tpu.core_type<tc>, window_params = [{transform_indices = @transform_0, window_bounds = array<i64: 1, 19, 19, 16>}, {pipeline_mode = #tpu.pipeline_mode<synchronous>, transform_indices = @transform_1, window_bounds = array<i64: 4, 4, 16, 32>}, {pipeline_mode = #tpu.pipeline_mode<synchronous>, transform_indices = @transform_2, window_bounds = array<i64: 1, 32>}, {transform_indices = @transform_3, window_bounds = array<i64: 1, 16, 16, 32>}]} {
    %cst = arith.constant 0.000000e+00 : f32
    %0 = vector.broadcast %cst : f32 to vector<256x32xf32>
    %c0 = arith.constant 0 : index
    %c0_0 = arith.constant 0 : index
    %c0_1 = arith.constant 0 : index
    %c0_2 = arith.constant 0 : index
    %1 = vector.load %arg1[%c0, %c0_0, %c0_1, %c0_2] : memref<1x19x19x16xf32, #tpu.memory_space<vmem>>, vector<1x16x16x16xf32>
    %2 = vector.shape_cast %1 : vector<1x16x16x16xf32> to vector<16x16x16xf32>
    %3 = vector.shape_cast %2 : vector<16x16x16xf32> to vector<256x16xf32>
    %c0_3 = arith.constant 0 : index
    %c0_4 = arith.constant 0 : index
    %c0_5 = arith.constant 0 : index
    %c0_6 = arith.constant 0 : index
    %4 = vector.load %arg2[%c0_3, %c0_4, %c0_5, %c0_6] : memref<4x4x16x32xf32, #tpu.memory_space<vmem>>, vector<1x1x16x32xf32>
    %5 = vector.shape_cast %4 : vector<1x1x16x32xf32> to vector<16x32xf32>
    %cst_7 = arith.constant dense<0.000000e+00> : vector<256x32xf32>
    %6 = tpu.matmul %3, %5, %cst_7 {dimension_numbers = #tpu.dot_dimension_numbers<[1], [0], [0], [1], [0, 0, 1, 1], [], []>} : vector<256x16xf32>, vector<16x32xf32>, vector<256x32xf32> -> vector<256x32xf32>
    %7 = arith.addf %0, %6 : vector<256x32xf32>
    %c0_8 = arith.constant 0 : index
    %c0_9 = arith.constant 0 : index
    %c1 = arith.constant 1 : index
    %c0_10 = arith.constant 0 : index
    %8 = vector.load %arg1[%c0_8, %c0_9, %c1, %c0_10] : memref<1x19x19x16xf32, #tpu.memory_space<vmem>>, vector<1x16x16x16xf32>
    %9 = vector.shape_cast %8 : vector<1x16x16x16xf32> to vector<16x16x16xf32>
    %10 = vector.shape_cast %9 : vector<16x16x16xf32> to vector<256x16xf32>
    %c0_11 = arith.constant 0 : index
    %c1_12 = arith.constant 1 : index
    %c0_13 = arith.constant 0 : index
    %c0_14 = arith.constant 0 : index
    %11 = vector.load %arg2[%c0_11, %c1_12, %c0_13, %c0_14] : memref<4x4x16x32xf32, #tpu.memory_space<vmem>>, vector<1x1x16x32xf32>
    %12 = vector.shape_cast %11 : vector<1x1x16x32xf32> to vector<16x32xf32>
    %cst_15 = arith.constant dense<0.000000e+00> : vector<256x32xf32>
    %13 = tpu.matmul %10, %12, %cst_15 {dimension_numbers = #tpu.dot_dimension_numbers<[1], [0], [0], [1], [0, 0, 1, 1], [], []>} : vector<256x16xf32>, vector<16x32xf32>, vector<256x32xf32> -> vector<256x32xf32>
    %14 = arith.addf %7, %13 : vector<256x32xf32>
    %c0_16 = arith.constant 0 : index
    %c0_17 = arith.constant 0 : index
    %c2 = arith.constant 2 : index
    %c0_18 = arith.constant 0 : index
    %15 = vector.load %arg1[%c0_16, %c0_17, %c2, %c0_18] : memref<1x19x19x16xf32, #tpu.memory_space<vmem>>, vector<1x16x16x16xf32>
    %16 = vector.shape_cast %15 : vector<1x16x16x16xf32> to vector<16x16x16xf32>
    %17 = vector.shape_cast %16 : vector<16x16x16xf32> to vector<256x16xf32>
    %c0_19 = arith.constant 0 : index
    %c2_20 = arith.constant 2 : index
    %c0_21 = arith.constant 0 : index
    %c0_22 = arith.constant 0 : index
    %18 = vector.load %arg2[%c0_19, %c2_20, %c0_21, %c0_22] : memref<4x4x16x32xf32, #tpu.memory_space<vmem>>, vector<1x1x16x32xf32>
    %19 = vector.shape_cast %18 : vector<1x1x16x32xf32> to vector<16x32xf32>
    %cst_23 = arith.constant dense<0.000000e+00> : vector<256x32xf32>
    %20 = tpu.matmul %17, %19, %cst_23 {dimension_numbers = #tpu.dot_dimension_numbers<[1], [0], [0], [1], [0, 0, 1, 1], [], []>} : vector<256x16xf32>, vector<16x32xf32>, vector<256x32xf32> -> vector<256x32xf32>
    %21 = arith.addf %14, %20 : vector<256x32xf32>
    %c0_24 = arith.constant 0 : index
    %c0_25 = arith.constant 0 : index
    %c3 = arith.constant 3 : index
    %c0_26 = arith.constant 0 : index
    %22 = vector.load %arg1[%c0_24, %c0_25, %c3, %c0_26] : memref<1x19x19x16xf32, #tpu.memory_space<vmem>>, vector<1x16x16x16xf32>
    %23 = vector.shape_cast %22 : vector<1x16x16x16xf32> to vector<16x16x16xf32>
    %24 = vector.shape_cast %23 : vector<16x16x16xf32> to vector<256x16xf32>
    %c0_27 = arith.constant 0 : index
    %c3_28 = arith.constant 3 : index
    %c0_29 = arith.constant 0 : index
    %c0_30 = arith.constant 0 : index
    %25 = vector.load %arg2[%c0_27, %c3_28, %c0_29, %c0_30] : memref<4x4x16x32xf32, #tpu.memory_space<vmem>>, vector<1x1x16x32xf32>
    %26 = vector.shape_cast %25 : vector<1x1x16x32xf32> to vector<16x32xf32>
    %cst_31 = arith.constant dense<0.000000e+00> : vector<256x32xf32>
    %27 = tpu.matmul %24, %26, %cst_31 {dimension_numbers = #tpu.dot_dimension_numbers<[1], [0], [0], [1], [0, 0, 1, 1], [], []>} : vector<256x16xf32>, vector<16x32xf32>, vector<256x32xf32> -> vector<256x32xf32>
    %28 = arith.addf %21, %27 : vector<256x32xf32>
    %c0_32 = arith.constant 0 : index
    %c1_33 = arith.constant 1 : index
    %c0_34 = arith.constant 0 : index
    %c0_35 = arith.constant 0 : index
    %29 = vector.load %arg1[%c0_32, %c1_33, %c0_34, %c0_35] : memref<1x19x19x16xf32, #tpu.memory_space<vmem>>, vector<1x16x16x16xf32>
    %30 = vector.shape_cast %29 : vector<1x16x16x16xf32> to vector<16x16x16xf32>
    %31 = vector.shape_cast %30 : vector<16x16x16xf32> to vector<256x16xf32>
    %c1_36 = arith.constant 1 : index
    %c0_37 = arith.constant 0 : index
    %c0_38 = arith.constant 0 : index
    %c0_39 = arith.constant 0 : index
    %32 = vector.load %arg2[%c1_36, %c0_37, %c0_38, %c0_39] : memref<4x4x16x32xf32, #tpu.memory_space<vmem>>, vector<1x1x16x32xf32>
    %33 = vector.shape_cast %32 : vector<1x1x16x32xf32> to vector<16x32xf32>
    %cst_40 = arith.constant dense<0.000000e+00> : vector<256x32xf32>
    %34 = tpu.matmul %31, %33, %cst_40 {dimension_numbers = #tpu.dot_dimension_numbers<[1], [0], [0], [1], [0, 0, 1, 1], [], []>} : vector<256x16xf32>, vector<16x32xf32>, vector<256x32xf32> -> vector<256x32xf32>
    %35 = arith.addf %28, %34 : vector<256x32xf32>
    %c0_41 = arith.constant 0 : index
    %c1_42 = arith.constant 1 : index
    %c1_43 = arith.constant 1 : index
    %c0_44 = arith.constant 0 : index
    %36 = vector.load %arg1[%c0_41, %c1_42, %c1_43, %c0_44] : memref<1x19x19x16xf32, #tpu.memory_space<vmem>>, vector<1x16x16x16xf32>
    %37 = vector.shape_cast %36 : vector<1x16x16x16xf32> to vector<16x16x16xf32>
    %38 = vector.shape_cast %37 : vector<16x16x16xf32> to vector<256x16xf32>
    %c1_45 = arith.constant 1 : index
    %c1_46 = arith.constant 1 : index
    %c0_47 = arith.constant 0 : index
    %c0_48 = arith.constant 0 : index
    %39 = vector.load %arg2[%c1_45, %c1_46, %c0_47, %c0_48] : memref<4x4x16x32xf32, #tpu.memory_space<vmem>>, vector<1x1x16x32xf32>
    %40 = vector.shape_cast %39 : vector<1x1x16x32xf32> to vector<16x32xf32>
    %cst_49 = arith.constant dense<0.000000e+00> : vector<256x32xf32>
    %41 = tpu.matmul %38, %40, %cst_49 {dimension_numbers = #tpu.dot_dimension_numbers<[1], [0], [0], [1], [0, 0, 1, 1], [], []>} : vector<256x16xf32>, vector<16x32xf32>, vector<256x32xf32> -> vector<256x32xf32>
    %42 = arith.addf %35, %41 : vector<256x32xf32>
    %c0_50 = arith.constant 0 : index
    %c1_51 = arith.constant 1 : index
    %c2_52 = arith.constant 2 : index
    %c0_53 = arith.constant 0 : index
    %43 = vector.load %arg1[%c0_50, %c1_51, %c2_52, %c0_53] : memref<1x19x19x16xf32, #tpu.memory_space<vmem>>, vector<1x16x16x16xf32>
    %44 = vector.shape_cast %43 : vector<1x16x16x16xf32> to vector<16x16x16xf32>
    %45 = vector.shape_cast %44 : vector<16x16x16xf32> to vector<256x16xf32>
    %c1_54 = arith.constant 1 : index
    %c2_55 = arith.constant 2 : index
    %c0_56 = arith.constant 0 : index
    %c0_57 = arith.constant 0 : index
    %46 = vector.load %arg2[%c1_54, %c2_55, %c0_56, %c0_57] : memref<4x4x16x32xf32, #tpu.memory_space<vmem>>, vector<1x1x16x32xf32>
    %47 = vector.shape_cast %46 : vector<1x1x16x32xf32> to vector<16x32xf32>
    %cst_58 = arith.constant dense<0.000000e+00> : vector<256x32xf32>
    %48 = tpu.matmul %45, %47, %cst_58 {dimension_numbers = #tpu.dot_dimension_numbers<[1], [0], [0], [1], [0, 0, 1, 1], [], []>} : vector<256x16xf32>, vector<16x32xf32>, vector<256x32xf32> -> vector<256x32xf32>
    %49 = arith.addf %42, %48 : vector<256x32xf32>
    %c0_59 = arith.constant 0 : index
    %c1_60 = arith.constant 1 : index
    %c3_61 = arith.constant 3 : index
    %c0_62 = arith.constant 0 : index
    %50 = vector.load %arg1[%c0_59, %c1_60, %c3_61, %c0_62] : memref<1x19x19x16xf32, #tpu.memory_space<vmem>>, vector<1x16x16x16xf32>
    %51 = vector.shape_cast %50 : vector<1x16x16x16xf32> to vector<16x16x16xf32>
    %52 = vector.shape_cast %51 : vector<16x16x16xf32> to vector<256x16xf32>
    %c1_63 = arith.constant 1 : index
    %c3_64 = arith.constant 3 : index
    %c0_65 = arith.constant 0 : index
    %c0_66 = arith.constant 0 : index
    %53 = vector.load %arg2[%c1_63, %c3_64, %c0_65, %c0_66] : memref<4x4x16x32xf32, #tpu.memory_space<vmem>>, vector<1x1x16x32xf32>
    %54 = vector.shape_cast %53 : vector<1x1x16x32xf32> to vector<16x32xf32>
    %cst_67 = arith.constant dense<0.000000e+00> : vector<256x32xf32>
    %55 = tpu.matmul %52, %54, %cst_67 {dimension_numbers = #tpu.dot_dimension_numbers<[1], [0], [0], [1], [0, 0, 1, 1], [], []>} : vector<256x16xf32>, vector<16x32xf32>, vector<256x32xf32> -> vector<256x32xf32>
    %56 = arith.addf %49, %55 : vector<256x32xf32>
    %c0_68 = arith.constant 0 : index
    %c2_69 = arith.constant 2 : index
    %c0_70 = arith.constant 0 : index
    %c0_71 = arith.constant 0 : index
    %57 = vector.load %arg1[%c0_68, %c2_69, %c0_70, %c0_71] : memref<1x19x19x16xf32, #tpu.memory_space<vmem>>, vector<1x16x16x16xf32>
    %58 = vector.shape_cast %57 : vector<1x16x16x16xf32> to vector<16x16x16xf32>
    %59 = vector.shape_cast %58 : vector<16x16x16xf32> to vector<256x16xf32>
    %c2_72 = arith.constant 2 : index
    %c0_73 = arith.constant 0 : index
    %c0_74 = arith.constant 0 : index
    %c0_75 = arith.constant 0 : index
    %60 = vector.load %arg2[%c2_72, %c0_73, %c0_74, %c0_75] : memref<4x4x16x32xf32, #tpu.memory_space<vmem>>, vector<1x1x16x32xf32>
    %61 = vector.shape_cast %60 : vector<1x1x16x32xf32> to vector<16x32xf32>
    %cst_76 = arith.constant dense<0.000000e+00> : vector<256x32xf32>
    %62 = tpu.matmul %59, %61, %cst_76 {dimension_numbers = #tpu.dot_dimension_numbers<[1], [0], [0], [1], [0, 0, 1, 1], [], []>} : vector<256x16xf32>, vector<16x32xf32>, vector<256x32xf32> -> vector<256x32xf32>
    %63 = arith.addf %56, %62 : vector<256x32xf32>
    %c0_77 = arith.constant 0 : index
    %c2_78 = arith.constant 2 : index
    %c1_79 = arith.constant 1 : index
    %c0_80 = arith.constant 0 : index
    %64 = vector.load %arg1[%c0_77, %c2_78, %c1_79, %c0_80] : memref<1x19x19x16xf32, #tpu.memory_space<vmem>>, vector<1x16x16x16xf32>
    %65 = vector.shape_cast %64 : vector<1x16x16x16xf32> to vector<16x16x16xf32>
    %66 = vector.shape_cast %65 : vector<16x16x16xf32> to vector<256x16xf32>
    %c2_81 = arith.constant 2 : index
    %c1_82 = arith.constant 1 : index
    %c0_83 = arith.constant 0 : index
    %c0_84 = arith.constant 0 : index
    %67 = vector.load %arg2[%c2_81, %c1_82, %c0_83, %c0_84] : memref<4x4x16x32xf32, #tpu.memory_space<vmem>>, vector<1x1x16x32xf32>
    %68 = vector.shape_cast %67 : vector<1x1x16x32xf32> to vector<16x32xf32>
    %cst_85 = arith.constant dense<0.000000e+00> : vector<256x32xf32>
    %69 = tpu.matmul %66, %68, %cst_85 {dimension_numbers = #tpu.dot_dimension_numbers<[1], [0], [0], [1], [0, 0, 1, 1], [], []>} : vector<256x16xf32>, vector<16x32xf32>, vector<256x32xf32> -> vector<256x32xf32>
    %70 = arith.addf %63, %69 : vector<256x32xf32>
    %c0_86 = arith.constant 0 : index
    %c2_87 = arith.constant 2 : index
    %c2_88 = arith.constant 2 : index
    %c0_89 = arith.constant 0 : index
    %71 = vector.load %arg1[%c0_86, %c2_87, %c2_88, %c0_89] : memref<1x19x19x16xf32, #tpu.memory_space<vmem>>, vector<1x16x16x16xf32>
    %72 = vector.shape_cast %71 : vector<1x16x16x16xf32> to vector<16x16x16xf32>
    %73 = vector.shape_cast %72 : vector<16x16x16xf32> to vector<256x16xf32>
    %c2_90 = arith.constant 2 : index
    %c2_91 = arith.constant 2 : index
    %c0_92 = arith.constant 0 : index
    %c0_93 = arith.constant 0 : index
    %74 = vector.load %arg2[%c2_90, %c2_91, %c0_92, %c0_93] : memref<4x4x16x32xf32, #tpu.memory_space<vmem>>, vector<1x1x16x32xf32>
    %75 = vector.shape_cast %74 : vector<1x1x16x32xf32> to vector<16x32xf32>
    %cst_94 = arith.constant dense<0.000000e+00> : vector<256x32xf32>
    %76 = tpu.matmul %73, %75, %cst_94 {dimension_numbers = #tpu.dot_dimension_numbers<[1], [0], [0], [1], [0, 0, 1, 1], [], []>} : vector<256x16xf32>, vector<16x32xf32>, vector<256x32xf32> -> vector<256x32xf32>
    %77 = arith.addf %70, %76 : vector<256x32xf32>
    %c0_95 = arith.constant 0 : index
    %c2_96 = arith.constant 2 : index
    %c3_97 = arith.constant 3 : index
    %c0_98 = arith.constant 0 : index
    %78 = vector.load %arg1[%c0_95, %c2_96, %c3_97, %c0_98] : memref<1x19x19x16xf32, #tpu.memory_space<vmem>>, vector<1x16x16x16xf32>
    %79 = vector.shape_cast %78 : vector<1x16x16x16xf32> to vector<16x16x16xf32>
    %80 = vector.shape_cast %79 : vector<16x16x16xf32> to vector<256x16xf32>
    %c2_99 = arith.constant 2 : index
    %c3_100 = arith.constant 3 : index
    %c0_101 = arith.constant 0 : index
    %c0_102 = arith.constant 0 : index
    %81 = vector.load %arg2[%c2_99, %c3_100, %c0_101, %c0_102] : memref<4x4x16x32xf32, #tpu.memory_space<vmem>>, vector<1x1x16x32xf32>
    %82 = vector.shape_cast %81 : vector<1x1x16x32xf32> to vector<16x32xf32>
    %cst_103 = arith.constant dense<0.000000e+00> : vector<256x32xf32>
    %83 = tpu.matmul %80, %82, %cst_103 {dimension_numbers = #tpu.dot_dimension_numbers<[1], [0], [0], [1], [0, 0, 1, 1], [], []>} : vector<256x16xf32>, vector<16x32xf32>, vector<256x32xf32> -> vector<256x32xf32>
    %84 = arith.addf %77, %83 : vector<256x32xf32>
    %c0_104 = arith.constant 0 : index
    %c3_105 = arith.constant 3 : index
    %c0_106 = arith.constant 0 : index
    %c0_107 = arith.constant 0 : index
    %85 = vector.load %arg1[%c0_104, %c3_105, %c0_106, %c0_107] : memref<1x19x19x16xf32, #tpu.memory_space<vmem>>, vector<1x16x16x16xf32>
    %86 = vector.shape_cast %85 : vector<1x16x16x16xf32> to vector<16x16x16xf32>
    %87 = vector.shape_cast %86 : vector<16x16x16xf32> to vector<256x16xf32>
    %c3_108 = arith.constant 3 : index
    %c0_109 = arith.constant 0 : index
    %c0_110 = arith.constant 0 : index
    %c0_111 = arith.constant 0 : index
    %88 = vector.load %arg2[%c3_108, %c0_109, %c0_110, %c0_111] : memref<4x4x16x32xf32, #tpu.memory_space<vmem>>, vector<1x1x16x32xf32>
    %89 = vector.shape_cast %88 : vector<1x1x16x32xf32> to vector<16x32xf32>
    %cst_112 = arith.constant dense<0.000000e+00> : vector<256x32xf32>
    %90 = tpu.matmul %87, %89, %cst_112 {dimension_numbers = #tpu.dot_dimension_numbers<[1], [0], [0], [1], [0, 0, 1, 1], [], []>} : vector<256x16xf32>, vector<16x32xf32>, vector<256x32xf32> -> vector<256x32xf32>
    %91 = arith.addf %84, %90 : vector<256x32xf32>
    %c0_113 = arith.constant 0 : index
    %c3_114 = arith.constant 3 : index
    %c1_115 = arith.constant 1 : index
    %c0_116 = arith.constant 0 : index
    %92 = vector.load %arg1[%c0_113, %c3_114, %c1_115, %c0_116] : memref<1x19x19x16xf32, #tpu.memory_space<vmem>>, vector<1x16x16x16xf32>
    %93 = vector.shape_cast %92 : vector<1x16x16x16xf32> to vector<16x16x16xf32>
    %94 = vector.shape_cast %93 : vector<16x16x16xf32> to vector<256x16xf32>
    %c3_117 = arith.constant 3 : index
    %c1_118 = arith.constant 1 : index
    %c0_119 = arith.constant 0 : index
    %c0_120 = arith.constant 0 : index
    %95 = vector.load %arg2[%c3_117, %c1_118, %c0_119, %c0_120] : memref<4x4x16x32xf32, #tpu.memory_space<vmem>>, vector<1x1x16x32xf32>
    %96 = vector.shape_cast %95 : vector<1x1x16x32xf32> to vector<16x32xf32>
    %cst_121 = arith.constant dense<0.000000e+00> : vector<256x32xf32>
    %97 = tpu.matmul %94, %96, %cst_121 {dimension_numbers = #tpu.dot_dimension_numbers<[1], [0], [0], [1], [0, 0, 1, 1], [], []>} : vector<256x16xf32>, vector<16x32xf32>, vector<256x32xf32> -> vector<256x32xf32>
    %98 = arith.addf %91, %97 : vector<256x32xf32>
    %c0_122 = arith.constant 0 : index
    %c3_123 = arith.constant 3 : index
    %c2_124 = arith.constant 2 : index
    %c0_125 = arith.constant 0 : index
    %99 = vector.load %arg1[%c0_122, %c3_123, %c2_124, %c0_125] : memref<1x19x19x16xf32, #tpu.memory_space<vmem>>, vector<1x16x16x16xf32>
    %100 = vector.shape_cast %99 : vector<1x16x16x16xf32> to vector<16x16x16xf32>
    %101 = vector.shape_cast %100 : vector<16x16x16xf32> to vector<256x16xf32>
    %c3_126 = arith.constant 3 : index
    %c2_127 = arith.constant 2 : index
    %c0_128 = arith.constant 0 : index
    %c0_129 = arith.constant 0 : index
    %102 = vector.load %arg2[%c3_126, %c2_127, %c0_128, %c0_129] : memref<4x4x16x32xf32, #tpu.memory_space<vmem>>, vector<1x1x16x32xf32>
    %103 = vector.shape_cast %102 : vector<1x1x16x32xf32> to vector<16x32xf32>
    %cst_130 = arith.constant dense<0.000000e+00> : vector<256x32xf32>
    %104 = tpu.matmul %101, %103, %cst_130 {dimension_numbers = #tpu.dot_dimension_numbers<[1], [0], [0], [1], [0, 0, 1, 1], [], []>} : vector<256x16xf32>, vector<16x32xf32>, vector<256x32xf32> -> vector<256x32xf32>
    %105 = arith.addf %98, %104 : vector<256x32xf32>
    %c0_131 = arith.constant 0 : index
    %c3_132 = arith.constant 3 : index
    %c3_133 = arith.constant 3 : index
    %c0_134 = arith.constant 0 : index
    %106 = vector.load %arg1[%c0_131, %c3_132, %c3_133, %c0_134] : memref<1x19x19x16xf32, #tpu.memory_space<vmem>>, vector<1x16x16x16xf32>
    %107 = vector.shape_cast %106 : vector<1x16x16x16xf32> to vector<16x16x16xf32>
    %108 = vector.shape_cast %107 : vector<16x16x16xf32> to vector<256x16xf32>
    %c3_135 = arith.constant 3 : index
    %c3_136 = arith.constant 3 : index
    %c0_137 = arith.constant 0 : index
    %c0_138 = arith.constant 0 : index
    %109 = vector.load %arg2[%c3_135, %c3_136, %c0_137, %c0_138] : memref<4x4x16x32xf32, #tpu.memory_space<vmem>>, vector<1x1x16x32xf32>
    %110 = vector.shape_cast %109 : vector<1x1x16x32xf32> to vector<16x32xf32>
    %cst_139 = arith.constant dense<0.000000e+00> : vector<256x32xf32>
    %111 = tpu.matmul %108, %110, %cst_139 {dimension_numbers = #tpu.dot_dimension_numbers<[1], [0], [0], [1], [0, 0, 1, 1], [], []>} : vector<256x16xf32>, vector<16x32xf32>, vector<256x32xf32> -> vector<256x32xf32>
    %112 = arith.addf %105, %111 : vector<256x32xf32>
    %cst_140 = arith.constant 6.250000e-02 : f32
    %113 = vector.broadcast %cst_140 : f32 to vector<256x32xf32>
    %114 = arith.mulf %112, %113 : vector<256x32xf32>
    %c0_141 = arith.constant 0 : index
    %c0_142 = arith.constant 0 : index
    %115 = vector.load %arg3[%c0_141, %c0_142] : memref<1x32xf32, #tpu.memory_space<vmem>>, vector<1x32xf32>
    %116 = vector.broadcast %115 : vector<1x32xf32> to vector<256x32xf32>
    %117 = arith.addf %114, %116 : vector<256x32xf32>
    %118 = vector.shape_cast %117 : vector<256x32xf32> to vector<16x16x32xf32>
    %c0_143 = arith.constant 0 : index
    %c0_144 = arith.constant 0 : index
    %c0_145 = arith.constant 0 : index
    %c0_146 = arith.constant 0 : index
    %119 = vector.load %arg4[%c0_143, %c0_144, %c0_145, %c0_146] : memref<1x16x16x32xf32, #tpu.memory_space<vmem>>, vector<1x16x16x32xf32>
    %120 = vector.shape_cast %119 : vector<1x16x16x32xf32> to vector<16x16x32xf32>
    %121 = vector.shape_cast %118 : vector<16x16x32xf32> to vector<1x16x16x32xf32>
    tpu.vector_store %arg4[%c0_143, %c0_144, %c0_145, %c0_146], %121 {strides = array<i32>} : memref<1x16x16x32xf32, #tpu.memory_space<vmem>>, vector<1x16x16x32xf32>,
    return
  }
  func.func @transform_0(%arg0: i32) -> (i32, i32, i32, i32) {
    %c0_i32 = arith.constant 0 : i32
    %c0_i32_0 = arith.constant 0 : i32
    %c0_i32_1 = arith.constant 0 : i32
    %c0_i32_2 = arith.constant 0 : i32
    return %arg0, %c0_i32, %c0_i32_0, %c0_i32_1 : i32, i32, i32, i32
  }
  func.func @transform_1(%arg0: i32) -> (i32, i32, i32, i32) {
    %c0_i32 = arith.constant 0 : i32
    %c0_i32_0 = arith.constant 0 : i32
    %c0_i32_1 = arith.constant 0 : i32
    %c0_i32_2 = arith.constant 0 : i32
    %c0_i32_3 = arith.constant 0 : i32
    return %c0_i32, %c0_i32_0, %c0_i32_1, %c0_i32_2 : i32, i32, i32, i32
  }
  func.func @transform_2(%arg0: i32) -> (i32, i32) {
    %c0_i32 = arith.constant 0 : i32
    %c0_i32_0 = arith.constant 0 : i32
    %c0_i32_1 = arith.constant 0 : i32
    return %c0_i32, %c0_i32_0 : i32, i32
  }
  func.func @transform_3(%arg0: i32) -> (i32, i32, i32, i32) {
    %c0_i32 = arith.constant 0 : i32
    %c0_i32_0 = arith.constant 0 : i32
    %c0_i32_1 = arith.constant 0 : i32
    %c0_i32_2 = arith.constant 0 : i32
    return %arg0, %c0_i32, %c0_i32_0, %c0_i32_1 : i32, i32, i32, i32
  }
}

</mosaic_0001>

<llo_original>
// kernel: tpu_custom_call.1
$region0: #{tpu_custom_call.1}
  #allocation0 [shape = 'u32[]', space=smem, size = 0x4, offset = 0x4, fixed_abs, tag = 'smem constant byte address 0x4 - core index']
  #allocation1 [shape = 'u32[72,128]{1,0:T(1,128)}', space=vmem, size = 0x9000, scoped, tag = 'internal scratch']
  %s0 = inlined_call_operand.vmem [shape: f32[2,19,19,16], index: 0, kind: input, shape index: {}]
  %s1 = inlined_call_operand.vmem [shape: f32[4,4,16,32], index: 1, kind: input, shape index: {}]
  %s2 = inlined_call_operand.vmem [shape: f32[1,32], index: 2, kind: input, shape index: {}]
  %s3 = inlined_call_operand.hbm [shape: f32[2,16,16,32], index: 3, kind: output, shape index: {}]
  %s4 = sld [smem:[#allocation0]]
  $region45: #{tpu_custom_call.1} parent=0
    _
  %s6 = ssub.s32 1, %s4
  %s7 = scalar_select 0, %s6, %s4
  $region1: #{tpu_custom_call.1} parent=0
    #allocation2 [shape = 'u8[262144]{0}', space=vmem, size = 0x40000, scoped, tag = 'output window, operand 0']
    #allocation3 [shape = 's32[2]{0}', space=sflag, size = 0x8, scoped, tag = 'scoped memory for tpu_custom_call.1']
    %8 = vsyncpa [#allocation3], 0
    %s9 = scalar_lea.sflag [#allocation3], 1
    %10 = vsyncpa %s9, 0
    loop: start=0, step=1, limit=4
    $region2: #{tpu_custom_call.1} parent=1 // loop_pre_header
      _
    $region3: #{tpu_custom_call.1} parent=1 // loop_header
      %s12 = sphi 0, %s16
      %p13 = scmp.ge.s32.totalorder %s12, 4
      %s22 = sphi 0, %s24
      %s25 = sphi 0, %s22
      %s26 = sphi 0, %s25
      %s42 = sphi 0, %s26
      %s46 = sphi 0, %s46
      %s48 = sphi 0, %s46
      %s49 = sphi 0, %s48
      %s63 = sphi 0, %s49
      %s67 = sphi 0, %s67
      %s69 = sphi 0, %s67
      %s70 = sphi 0, %s69
      %s84 = sphi 0, %s70
      %s90 = sphi 0, %s92
      %s93 = sphi 0, %s90
      %s94 = sphi 0, %s93
      %s110 = sphi 0, %s94
    $region4: #{tpu_custom_call.1} parent=1 // loop_header_branch
      %15 = sbr.rel (%p13) target = $region8
    $region5: #{tpu_custom_call.1} parent=1 // loop_body
      %s17 = ssub.s32 %s12, 1
      %s18 = ssub.s32 %s12, 2
      %s19 = sadd.s32 %s12, 1
      %s20 = ssub.s32 %s12, %s19
      %p21 = scmp.eq.s32.totalorder %s20, 0
      %s23 = sadd.s32 %s22, 1
      %s24 = scalar_select %p21, %s22, %s23
      %p27 = pneg %p21
      %p28 = scmp.eq.s32.totalorder %s12, 1
      %p29 = por %p27, %p28
      %p30 = scmp.ne.s32.totalorder %s22, %s25
      %p31 = scmp.eq.s32.totalorder %s12, 0
      %p32 = por %p30, %p31
      %p33 = scmp.ne.s32.totalorder %s22, %s25
      %p34 = scmp.eq.s32.totalorder %s17, 1
      %p35 = por %p33, %p34
      %p36 = scmp.ne.s32.totalorder %s25, %s26
      %p37 = scmp.eq.s32.totalorder %s17, 0
      %p38 = por %p36, %p37
      %p39 = scmp.ne.s32.totalorder %s25, %s26
      %p40 = scmp.eq.s32.totalorder %s18, 1
      %p41 = por %p39, %p40
      %p43 = scmp.ne.s32.totalorder %s26, %s42
      %p44 = scmp.eq.s32.totalorder %s18, 0
      %p45 = por %p43, %p44
      %s47 = sadd.s32 %s46, 1
      %p50 = scmp.eq.s32.totalorder %s12, 1
      %p51 = scmp.ne.s32.totalorder %s46, %s48
      %p52 = scmp.eq.s32.totalorder %s12, 0
      %p53 = por %p51, %p52
      %p54 = scmp.ne.s32.totalorder %s46, %s48
      %p55 = scmp.eq.s32.totalorder %s17, 1
      %p56 = por %p54, %p55
      %p57 = scmp.ne.s32.totalorder %s48, %s49
      %p58 = scmp.eq.s32.totalorder %s17, 0
      %p59 = por %p57, %p58
      %p60 = scmp.ne.s32.totalorder %s48, %s49
      %p61 = scmp.eq.s32.totalorder %s18, 1
      %p62 = por %p60, %p61
      %p64 = scmp.ne.s32.totalorder %s49, %s63
      %p65 = scmp.eq.s32.totalorder %s18, 0
      %p66 = por %p64, %p65
      %s68 = sadd.s32 %s67, 1
      %p71 = scmp.eq.s32.totalorder %s12, 1
      %p72 = scmp.ne.s32.totalorder %s67, %s69
      %p73 = scmp.eq.s32.totalorder %s12, 0
      %p74 = por %p72, %p73
      %p75 = scmp.ne.s32.totalorder %s67, %s69
      %p76 = scmp.eq.s32.totalorder %s17, 1
      %p77 = por %p75, %p76
      %p78 = scmp.ne.s32.totalorder %s69, %s70
      %p79 = scmp.eq.s32.totalorder %s17, 0
      %p80 = por %p78, %p79
      %p81 = scmp.ne.s32.totalorder %s69, %s70
      %p82 = scmp.eq.s32.totalorder %s18, 1
      %p83 = por %p81, %p82
      %p85 = scmp.ne.s32.totalorder %s70, %s84
      %p86 = scmp.eq.s32.totalorder %s18, 0
      %p87 = por %p85, %p86
      %s88 = ssub.s32 %s12, %s19
      %p89 = scmp.eq.s32.totalorder %s88, 0
      %s91 = sadd.s32 %s90, 1
      %s92 = scalar_select %p89, %s90, %s91
      %p95 = pneg %p89
      %p96 = scmp.eq.s32.totalorder %s12, 1
      %p97 = por %p95, %p96
      %p98 = scmp.ne.s32.totalorder %s90, %s93
      %p99 = scmp.eq.s32.totalorder %s12, 0
      %p100 = por %p98, %p99
      %p101 = scmp.ne.s32.totalorder %s90, %s93
      %p102 = scmp.eq.s32.totalorder %s17, 1
      %p103 = por %p101, %p102
      %p104 = scmp.ne.s32.totalorder %s93, %s94
      %p105 = scmp.eq.s32.totalorder %s17, 0
      %p106 = por %p104, %p105
      %p107 = scmp.ne.s32.totalorder %s93, %s94
      %p108 = scmp.eq.s32.totalorder %s18, 1
      %p109 = por %p107, %p108
      %p111 = scmp.ne.s32.totalorder %s94, %s110
      %p112 = scmp.eq.s32.totalorder %s18, 0
      %p113 = por %p111, %p112
      %p114 = scmp.le.s32.totalorder 1, %s12
      %p115 = scmp.lt.s32.totalorder %s12, 3
      %p116 = pnand %p114, %p115
      %p117 = pneg %p116
      // Predicated region
      $region9: #{tpu_custom_call.1} parent=5 // pred_check
        _
      $region10: #{tpu_custom_call.1} parent=5 // pred_check_branch
        %119 = sbr.rel (%p116) target = $region12
      $region11: #{tpu_custom_call.1} parent=5 // pred_region
        %s120 = ssub.s32 %s12, 1
        // Predicated region
        $region13: #{tpu_custom_call.1} parent=11 // pred_check
          %p121 = pneg %p59
        $region14: #{tpu_custom_call.1} parent=11 // pred_check_branch
          %123 = sbr.rel (%p121) target = $region16
        $region15: #{tpu_custom_call.1} parent=11 // pred_region
          _
        $region16: #{tpu_custom_call.1} parent=11 // pred_fallthru
          _
        // Predicated region
        $region17: #{tpu_custom_call.1} parent=11 // pred_check
          %p124 = pneg %p80
        $region18: #{tpu_custom_call.1} parent=11 // pred_check_branch
          %126 = sbr.rel (%p124) target = $region20
        $region19: #{tpu_custom_call.1} parent=11 // pred_region
          _
        $region20: #{tpu_custom_call.1} parent=11 // pred_fallthru
          _
      $region12: #{tpu_custom_call.1} parent=5 // pred_fallthru
        _
      %p127 = scmp.lt.s32.totalorder %s12, 2
      // Predicated region
      $region21: #{tpu_custom_call.1} parent=5 // pred_check
        %p128 = pneg %p127
      $region22: #{tpu_custom_call.1} parent=5 // pred_check_branch
        %130 = sbr.rel (%p128) target = $region24
      $region23: #{tpu_custom_call.1} parent=5 // pred_region
        // Predicated region
        $region25: #{tpu_custom_call.1} parent=23 // pred_check
          %p131 = pneg %p32
        $region26: #{tpu_custom_call.1} parent=23 // pred_check_branch
          %133 = sbr.rel (%p131) target = $region28
        $region27: #{tpu_custom_call.1} parent=23 // pred_region
          %p134 = scmp.lt.s32.totalorder %s12, 1
          %s135 = scalar_select %p134, %s12, 1
          %s136 = smul.addr %s135, 57
          %s137 = smul.addr %s136, 8
          %s138 = scalar_lea.vmem %s0, %s137
        $region28: #{tpu_custom_call.1} parent=23 // pred_fallthru
          _
      $region24: #{tpu_custom_call.1} parent=5 // pred_fallthru
        _
      %p139 = scmp.le.s32.totalorder 1, %s12
      %p140 = scmp.lt.s32.totalorder %s12, 3
      %p141 = pnand %p139, %p140
      %p142 = pneg %p141
      // Predicated region
      $region29: #{tpu_custom_call.1} parent=5 // pred_check
        _
      $region30: #{tpu_custom_call.1} parent=5 // pred_check_branch
        %144 = sbr.rel (%p141) target = $region32
      $region31: #{tpu_custom_call.1} parent=5 // pred_region
        %s145 = ssub.s32 %s12, 1
        %p146 = scmp.lt.s32.totalorder %s17, 1
        %s147 = scalar_select %p146, %s17, 1
        %s148 = smul.addr %s147, 57
        %s149 = smul.addr %s148, 8
        %s150 = scalar_lea.vmem %s0, %s149
        %p151 = pneg %p38
        %p152 = pneg %p35
        %p153 = pneg %p59
        %p154 = pneg %p56
        %p155 = pneg %p80
        %p156 = pneg %p77
        %p157 = pneg %p106
        %p158 = pneg %p103
        %s159 = sand.u32 %s93, 1
        %s160 = scalar_lea.sflag [#allocation3], %s159
        %s161 = sand.u32 %s93, 1
        %s162 = smul.addr %s161, 256
        %s163 = scalar_lea.vmem [#allocation2], %s162
        %p164 = scmp.lt.s32.totalorder %s17, 1
        %s165 = scalar_select %p164, %s17, 1
        %s166 = smul.addr %s165, 57
        %s167 = smul.addr %s166, 8
        %s168 = scalar_lea.vmem %s0, %s167
        %v169 = vld [vmem:[%s168] sm:$0xff]
        %v170 = vld [vmem:[%s168 + $0x8] sm:$0xff]
        %v171 = vld [vmem:[%s168 + $0x18] sm:$0xff]
        %v172 = vld [vmem:[%s168 + $0x20] sm:$0xff]
        %v173 = vld [vmem:[%s168 + $0x30] sm:$0xff]
        %v174 = vld [vmem:[%s168 + $0x38] sm:$0xff]
        %v175 = vld [vmem:[%s168 + $0x48] sm:$0xff]
        %v176 = vld [vmem:[%s168 + $0x50] sm:$0xff]
        %v177 = vld [vmem:[%s168 + $0x60] sm:$0xff]
        %v178 = vld [vmem:[%s168 + $0x68] sm:$0xff]
        %v179 = vld [vmem:[%s168 + $0x78] sm:$0xff]
        %v180 = vld [vmem:[%s168 + $0x80] sm:$0xff]
        %v181 = vld [vmem:[%s168 + $0x90] sm:$0xff]
        %v182 = vld [vmem:[%s168 + $0x98] sm:$0xff]
        %v183 = vld [vmem:[%s168 + $0xa8] sm:$0xff]
        %v184 = vld [vmem:[%s168 + $0xb0] sm:$0xff]
        %v185 = vld [vmem:[%s168 + $0xc0] sm:$0xff]
        %v186 = vld [vmem:[%s168 + $0xc8] sm:$0xff]
        %v187 = vld [vmem:[%s168 + $0xd8] sm:$0xff]
        %v188 = vld [vmem:[%s168 + $0xe0] sm:$0xff]
        %v189 = vld [vmem:[%s168 + $0xf0] sm:$0xff]
        %v190 = vld [vmem:[%s168 + $0xf8] sm:$0xff]
        %v191 = vld [vmem:[%s168 + $0x108] sm:$0xff]
        %v192 = vld [vmem:[%s168 + $0x110] sm:$0xff]
        %v193 = vld [vmem:[%s168 + $0x120] sm:$0xff]
        %v194 = vld [vmem:[%s168 + $0x128] sm:$0xff]
        %v195 = vld [vmem:[%s168 + $0x138] sm:$0xff]
        %v196 = vld [vmem:[%s168 + $0x140] sm:$0xff]
        %v197 = vld [vmem:[%s168 + $0x150] sm:$0xff]
        %v198 = vld [vmem:[%s168 + $0x158] sm:$0xff]
        %v199 = vld [vmem:[%s168 + $0x168] sm:$0xff]
        %v200 = vld [vmem:[%s168 + $0x170] sm:$0xff]
        %v201 = vld [vmem:[%s1] sm:$0xff]
        %v202 = vld [vmem:[%s1 + $0x8] sm:$0xff]
        %v203 = vld [vmem:[%s168 + $0x1] sm:$0xff]
        %v204 = vld [vmem:[%s168 + $0x9] sm:$0xff]
        %v205 = vld [vmem:[%s168 + $0x19] sm:$0xff]
        %v206 = vld [vmem:[%s168 + $0x21] sm:$0xff]
        %v207 = vld [vmem:[%s168 + $0x31] sm:$0xff]
        %v208 = vld [vmem:[%s168 + $0x39] sm:$0xff]
        %v209 = vld [vmem:[%s168 + $0x49] sm:$0xff]
        %v210 = vld [vmem:[%s168 + $0x51] sm:$0xff]
        %v211 = vld [vmem:[%s168 + $0x61] sm:$0xff]
        %v212 = vld [vmem:[%s168 + $0x69] sm:$0xff]
        %v213 = vld [vmem:[%s168 + $0x79] sm:$0xff]
        %v214 = vld [vmem:[%s168 + $0x81] sm:$0xff]
        %v215 = vld [vmem:[%s168 + $0x91] sm:$0xff]
        %v216 = vld [vmem:[%s168 + $0x99] sm:$0xff]
        %v217 = vld [vmem:[%s168 + $0xa9] sm:$0xff]
        %v218 = vld [vmem:[%s168 + $0xb1] sm:$0xff]
        %v219 = vld [vmem:[%s168 + $0xc1] sm:$0xff]
        %v220 = vld [vmem:[%s168 + $0xc9] sm:$0xff]
        %v221 = vld [vmem:[%s168 + $0xd9] sm:$0xff]
        %v222 = vld [vmem:[%s168 + $0xe1] sm:$0xff]
        %v223 = vld [vmem:[%s168 + $0xf1] sm:$0xff]
        %v224 = vld [vmem:[%s168 + $0xf9] sm:$0xff]
        %v225 = vld [vmem:[%s168 + $0x109] sm:$0xff]
        %v226 = vld [vmem:[%s168 + $0x111] sm:$0xff]
        %v227 = vld [vmem:[%s168 + $0x121] sm:$0xff]
        %v228 = vld [vmem:[%s168 + $0x129] sm:$0xff]
        %v229 = vld [vmem:[%s168 + $0x139] sm:$0xff]
        %v230 = vld [vmem:[%s168 + $0x141] sm:$0xff]
        %v231 = vld [vmem:[%s168 + $0x151] sm:$0xff]
        %v232 = vld [vmem:[%s168 + $0x159] sm:$0xff]
        %v233 = vld [vmem:[%s168 + $0x169] sm:$0xff]
        %v234 = vld [vmem:[%s168 + $0x171] sm:$0xff]
        %s235 = scalar_lea.vmem %s1, 16
        %v236 = vld [vmem:[%s235] sm:$0xff]
        %v237 = vld [vmem:[%s235 + $0x8] sm:$0xff]
        %vm238 = vcmask 130048
        %v240 = vsel %vm238, %v203, 0
        %v243 = vsel %vm238, %v204, 0
        %v246 = vsel %vm238, %v205, 0
        %v249 = vsel %vm238, %v206, 0
        %v252 = vsel %vm238, %v207, 0
        %v255 = vsel %vm238, %v208, 0
        %v258 = vsel %vm238, %v209, 0
        %v261 = vsel %vm238, %v210, 0
        %v264 = vsel %vm238, %v211, 0
        %v267 = vsel %vm238, %v212, 0
        %v270 = vsel %vm238, %v213, 0
        %v273 = vsel %vm238, %v214, 0
        %v276 = vsel %vm238, %v215, 0
        %v279 = vsel %vm238, %v216, 0
        %v282 = vsel %vm238, %v217, 0
        %v285 = vsel %vm238, %v218, 0
        %v288 = vsel %vm238, %v219, 0
        %v291 = vsel %vm238, %v220, 0
        %v294 = vsel %vm238, %v221, 0
        %v297 = vsel %vm238, %v222, 0
        %v300 = vsel %vm238, %v223, 0
        %v303 = vsel %vm238, %v224, 0
        %v306 = vsel %vm238, %v225, 0
        %v309 = vsel %vm238, %v226, 0
        %v312 = vsel %vm238, %v227, 0
        %v315 = vsel %vm238, %v228, 0
        %v318 = vsel %vm238, %v229, 0
        %v321 = vsel %vm238, %v230, 0
        %v324 = vsel %vm238, %v231, 0
        %v327 = vsel %vm238, %v232, 0
        %v330 = vsel %vm238, %v233, 0
        %v333 = vsel %vm238, %v234, 0
        %335 = vmatpush.msra.mxu0 0.0
        %336 = vmatpush.msra.mxu0 0.0
        %337 = vmatpush.msra.mxu0 0.0
        %338 = vmatpush.msra.mxu0 0.0
        %339 = vmatpush.msra.mxu0 0.0
        %340 = vmatpush.msra.mxu0 0.0
        %341 = vmatpush.msra.mxu0 0.0
        %342 = vmatpush.msra.mxu0 0.0
        %343 = vmatpush.msra.mxu0 0.0
        %344 = vmatpush.msra.mxu0 0.0
        %345 = vmatpush.msra.mxu0 0.0
        %346 = vmatpush.msra.mxu0 0.0
        %347 = vmatpush.msra.mxu0 0.0
        %348 = vmatpush.msra.mxu0 0.0
        %349 = vmatpush.msra.mxu0 %v237
        %350 = vmatpush.msra.mxu0 %v236
        %351 = vmatmul.f32.gmra.mxu0 %v240
        %v352 = vpop.f32.mrf.mxu0
        %v353 = vadd.f32 0.0, %v352
        %354 = vmatmul.f32.gmra.mxu0 %v243
        %v355 = vpop.f32.mrf.mxu0
        %v356 = vadd.f32 0.0, %v355
        %357 = vmatmul.f32.gmra.mxu0 %v246
        %v358 = vpop.f32.mrf.mxu0
        %v359 = vadd.f32 0.0, %v358
        %360 = vmatmul.f32.gmra.mxu0 %v249
        %v361 = vpop.f32.mrf.mxu0
        %v362 = vadd.f32 0.0, %v361
        %363 = vmatmul.f32.gmra.mxu0 %v252
        %v364 = vpop.f32.mrf.mxu0
        %v365 = vadd.f32 0.0, %v364
        %366 = vmatmul.f32.gmra.mxu0 %v255
        %v367 = vpop.f32.mrf.mxu0
        %v368 = vadd.f32 0.0, %v367
        %369 = vmatmul.f32.gmra.mxu0 %v258
        %v370 = vpop.f32.mrf.mxu0
        %v371 = vadd.f32 0.0, %v370
        %372 = vmatmul.f32.gmra.mxu0 %v261
        %v373 = vpop.f32.mrf.mxu0
        %v374 = vadd.f32 0.0, %v373
        %375 = vmatmul.f32.gmra.mxu0 %v264
        %v376 = vpop.f32.mrf.mxu0
        %v377 = vadd.f32 0.0, %v376
        %378 = vmatmul.f32.gmra.mxu0 %v267
        %v379 = vpop.f32.mrf.mxu0
        %v380 = vadd.f32 0.0, %v379
        %381 = vmatmul.f32.gmra.mxu0 %v270
        %v382 = vpop.f32.mrf.mxu0
        %v383 = vadd.f32 0.0, %v382
        %384 = vmatmul.f32.gmra.mxu0 %v273
        %v385 = vpop.f32.mrf.mxu0
        %v386 = vadd.f32 0.0, %v385
        %387 = vmatmul.f32.gmra.mxu0 %v276
        %v388 = vpop.f32.mrf.mxu0
        %v389 = vadd.f32 0.0, %v388
        %390 = vmatmul.f32.gmra.mxu0 %v279
        %v391 = vpop.f32.mrf.mxu0
        %v392 = vadd.f32 0.0, %v391
        %393 = vmatmul.f32.gmra.mxu0 %v282
        %v394 = vpop.f32.mrf.mxu0
        %v395 = vadd.f32 0.0, %v394
        %396 = vmatmul.f32.gmra.mxu0 %v285
        %v397 = vpop.f32.mrf.mxu0
        %v398 = vadd.f32 0.0, %v397
        %399 = vmatmul.f32.gmra.mxu0 %v288
        %v400 = vpop.f32.mrf.mxu0
        %v401 = vadd.f32 0.0, %v400
        %402 = vmatmul.f32.gmra.mxu0 %v291
        %v403 = vpop.f32.mrf.mxu0
        %v404 = vadd.f32 0.0, %v403
        %405 = vmatmul.f32.gmra.mxu0 %v294
        %v406 = vpop.f32.mrf.mxu0
        %v407 = vadd.f32 0.0, %v406
        %408 = vmatmul.f32.gmra.mxu0 %v297
        %v409 = vpop.f32.mrf.mxu0
        %v410 = vadd.f32 0.0, %v409
        %411 = vmatmul.f32.gmra.mxu0 %v300
        %v412 = vpop.f32.mrf.mxu0
        %v413 = vadd.f32 0.0, %v412
        %414 = vmatmul.f32.gmra.mxu0 %v303
        %v415 = vpop.f32.mrf.mxu0
        %v416 = vadd.f32 0.0, %v415
        %417 = vmatmul.f32.gmra.mxu0 %v306
        %v418 = vpop.f32.mrf.mxu0
        %v419 = vadd.f32 0.0, %v418
        %420 = vmatmul.f32.gmra.mxu0 %v309
        %v421 = vpop.f32.mrf.mxu0
        %v422 = vadd.f32 0.0, %v421
        %423 = vmatmul.f32.gmra.mxu0 %v312
        %v424 = vpop.f32.mrf.mxu0
        %v425 = vadd.f32 0.0, %v424
        %426 = vmatmul.f32.gmra.mxu0 %v315
        %v427 = vpop.f32.mrf.mxu0
        %v428 = vadd.f32 0.0, %v427
        %429 = vmatmul.f32.gmra.mxu0 %v318
        %v430 = vpop.f32.mrf.mxu0
        %v431 = vadd.f32 0.0, %v430
        %432 = vmatmul.f32.gmra.mxu0 %v321
        %v433 = vpop.f32.mrf.mxu0
        %v434 = vadd.f32 0.0, %v433
        %435 = vmatmul.f32.gmra.mxu0 %v324
        %v436 = vpop.f32.mrf.mxu0
        %v437 = vadd.f32 0.0, %v436
        %438 = vmatmul.f32.gmra.mxu0 %v327
        %v439 = vpop.f32.mrf.mxu0
        %v440 = vadd.f32 0.0, %v439
        %441 = vmatmul.f32.gmra.mxu0 %v330
        %v442 = vpop.f32.mrf.mxu0
        %v443 = vadd.f32 0.0, %v442
        %444 = vmatmul.f32.gmra.mxu0 %v333
        %v445 = vpop.f32.mrf.mxu0
        %v446 = vadd.f32 0.0, %v445
        %447 = vdwg.mxu0
        %v449 = vsel %vm238, %v169, 0
        %v452 = vsel %vm238, %v170, 0
        %v455 = vsel %vm238, %v171, 0
        %v458 = vsel %vm238, %v172, 0
        %v461 = vsel %vm238, %v173, 0
        %v464 = vsel %vm238, %v174, 0
        %v467 = vsel %vm238, %v175, 0
        %v470 = vsel %vm238, %v176, 0
        %v473 = vsel %vm238, %v177, 0
        %v476 = vsel %vm238, %v178, 0
        %v479 = vsel %vm238, %v179, 0
        %v482 = vsel %vm238, %v180, 0
        %v485 = vsel %vm238, %v181, 0
        %v488 = vsel %vm238, %v182, 0
        %v491 = vsel %vm238, %v183, 0
        %v494 = vsel %vm238, %v184, 0
        %v497 = vsel %vm238, %v185, 0
        %v500 = vsel %vm238, %v186, 0
        %v503 = vsel %vm238, %v187, 0
        %v506 = vsel %vm238, %v188, 0
        %v509 = vsel %vm238, %v189, 0
        %v512 = vsel %vm238, %v190, 0
        %v515 = vsel %vm238, %v191, 0
        %v518 = vsel %vm238, %v192, 0
        %v521 = vsel %vm238, %v193, 0
        %v524 = vsel %vm238, %v194, 0
        %v527 = vsel %vm238, %v195, 0
        %v530 = vsel %vm238, %v196, 0
        %v533 = vsel %vm238, %v197, 0
        %v536 = vsel %vm238, %v198, 0
        %v539 = vsel %vm238, %v199, 0
        %v542 = vsel %vm238, %v200, 0
        %544 = vmatpush.msra.mxu0 0.0
        %545 = vmatpush.msra.mxu0 0.0
        %546 = vmatpush.msra.mxu0 0.0
        %547 = vmatpush.msra.mxu0 0.0
        %548 = vmatpush.msra.mxu0 0.0
        %549 = vmatpush.msra.mxu0 0.0
        %550 = vmatpush.msra.mxu0 0.0
        %551 = vmatpush.msra.mxu0 0.0
        %552 = vmatpush.msra.mxu0 0.0
        %553 = vmatpush.msra.mxu0 0.0
        %554 = vmatpush.msra.mxu0 0.0
        %555 = vmatpush.msra.mxu0 0.0
        %556 = vmatpush.msra.mxu0 0.0
        %557 = vmatpush.msra.mxu0 0.0
        %558 = vmatpush.msra.mxu0 %v202
        %559 = vmatpush.msra.mxu0 %v201
        %560 = vmatmul.f32.gmra.mxu0 %v449
        %v561 = vpop.f32.mrf.mxu0
        %v562 = vadd.f32 %v353, %v561
        %563 = vmatmul.f32.gmra.mxu0 %v452
        %v564 = vpop.f32.mrf.mxu0
        %v565 = vadd.f32 %v356, %v564
        %566 = vmatmul.f32.gmra.mxu0 %v455
        %v567 = vpop.f32.mrf.mxu0
        %v568 = vadd.f32 %v359, %v567
        %569 = vmatmul.f32.gmra.mxu0 %v458
        %v570 = vpop.f32.mrf.mxu0
        %v571 = vadd.f32 %v362, %v570
        %572 = vmatmul.f32.gmra.mxu0 %v461
        %v573 = vpop.f32.mrf.mxu0
        %v574 = vadd.f32 %v365, %v573
        %575 = vmatmul.f32.gmra.mxu0 %v464
        %v576 = vpop.f32.mrf.mxu0
        %v577 = vadd.f32 %v368, %v576
        %578 = vmatmul.f32.gmra.mxu0 %v467
        %v579 = vpop.f32.mrf.mxu0
        %v580 = vadd.f32 %v371, %v579
        %581 = vmatmul.f32.gmra.mxu0 %v470
        %v582 = vpop.f32.mrf.mxu0
        %v583 = vadd.f32 %v374, %v582
        %584 = vmatmul.f32.gmra.mxu0 %v473
        %v585 = vpop.f32.mrf.mxu0
        %v586 = vadd.f32 %v377, %v585
        %587 = vmatmul.f32.gmra.mxu0 %v476
        %v588 = vpop.f32.mrf.mxu0
        %v589 = vadd.f32 %v380, %v588
        %590 = vmatmul.f32.gmra.mxu0 %v479
        %v591 = vpop.f32.mrf.mxu0
        %v592 = vadd.f32 %v383, %v591
        %593 = vmatmul.f32.gmra.mxu0 %v482
        %v594 = vpop.f32.mrf.mxu0
        %v595 = vadd.f32 %v386, %v594
        %596 = vmatmul.f32.gmra.mxu0 %v485
        %v597 = vpop.f32.mrf.mxu0
        %v598 = vadd.f32 %v389, %v597
        %599 = vmatmul.f32.gmra.mxu0 %v488
        %v600 = vpop.f32.mrf.mxu0
        %v601 = vadd.f32 %v392, %v600
        %602 = vmatmul.f32.gmra.mxu0 %v491
        %v603 = vpop.f32.mrf.mxu0
        %v604 = vadd.f32 %v395, %v603
        %605 = vmatmul.f32.gmra.mxu0 %v494
        %v606 = vpop.f32.mrf.mxu0
        %v607 = vadd.f32 %v398, %v606
        %608 = vmatmul.f32.gmra.mxu0 %v497
        %v609 = vpop.f32.mrf.mxu0
        %v610 = vadd.f32 %v401, %v609
        %611 = vmatmul.f32.gmra.mxu0 %v500
        %v612 = vpop.f32.mrf.mxu0
        %v613 = vadd.f32 %v404, %v612
        %614 = vmatmul.f32.gmra.mxu0 %v503
        %v615 = vpop.f32.mrf.mxu0
        %v616 = vadd.f32 %v407, %v615
        %617 = vmatmul.f32.gmra.mxu0 %v506
        %v618 = vpop.f32.mrf.mxu0
        %v619 = vadd.f32 %v410, %v618
        %620 = vmatmul.f32.gmra.mxu0 %v509
        %v621 = vpop.f32.mrf.mxu0
        %v622 = vadd.f32 %v413, %v621
        %623 = vmatmul.f32.gmra.mxu0 %v512
        %v624 = vpop.f32.mrf.mxu0
        %v625 = vadd.f32 %v416, %v624
        %626 = vmatmul.f32.gmra.mxu0 %v515
        %v627 = vpop.f32.mrf.mxu0
        %v628 = vadd.f32 %v419, %v627
        %629 = vmatmul.f32.gmra.mxu0 %v518
        %v630 = vpop.f32.mrf.mxu0
        %v631 = vadd.f32 %v422, %v630
        %632 = vmatmul.f32.gmra.mxu0 %v521
        %v633 = vpop.f32.mrf.mxu0
        %v634 = vadd.f32 %v425, %v633
        %635 = vmatmul.f32.gmra.mxu0 %v524
        %v636 = vpop.f32.mrf.mxu0
        %v637 = vadd.f32 %v428, %v636
        %638 = vmatmul.f32.gmra.mxu0 %v527
        %v639 = vpop.f32.mrf.mxu0
        %v640 = vadd.f32 %v431, %v639
        %641 = vmatmul.f32.gmra.mxu0 %v530
        %v642 = vpop.f32.mrf.mxu0
        %v643 = vadd.f32 %v434, %v642
        %644 = vmatmul.f32.gmra.mxu0 %v533
        %v645 = vpop.f32.mrf.mxu0
        %v646 = vadd.f32 %v437, %v645
        %647 = vmatmul.f32.gmra.mxu0 %v536
        %v648 = vpop.f32.mrf.mxu0
        %v649 = vadd.f32 %v440, %v648
        %650 = vmatmul.f32.gmra.mxu0 %v539
        %v651 = vpop.f32.mrf.mxu0
        %v652 = vadd.f32 %v443, %v651
        %653 = vmatmul.f32.gmra.mxu0 %v542
        %v654 = vpop.f32.mrf.mxu0
        %v655 = vadd.f32 %v446, %v654
        %656 = vdwg.mxu0
        %v657 = vld [vmem:[%s168 + $0x2] sm:$0xff]
        %v658 = vld [vmem:[%s168 + $0xa] sm:$0xff]
        %v659 = vld [vmem:[%s168 + $0x1a] sm:$0xff]
        %v660 = vld [vmem:[%s168 + $0x22] sm:$0xff]
        %v661 = vld [vmem:[%s168 + $0x32] sm:$0xff]
        %v662 = vld [vmem:[%s168 + $0x3a] sm:$0xff]
        %v663 = vld [vmem:[%s168 + $0x4a] sm:$0xff]
        %v664 = vld [vmem:[%s168 + $0x52] sm:$0xff]
        %v665 = vld [vmem:[%s168 + $0x62] sm:$0xff]
        %v666 = vld [vmem:[%s168 + $0x6a] sm:$0xff]
        %v667 = vld [vmem:[%s168 + $0x7a] sm:$0xff]
        %v668 = vld [vmem:[%s168 + $0x82] sm:$0xff]
        %v669 = vld [vmem:[%s168 + $0x92] sm:$0xff]
        %v670 = vld [vmem:[%s168 + $0x9a] sm:$0xff]
        %v671 = vld [vmem:[%s168 + $0xaa] sm:$0xff]
        %v672 = vld [vmem:[%s168 + $0xb2] sm:$0xff]
        %v673 = vld [vmem:[%s168 + $0xc2] sm:$0xff]
        %v674 = vld [vmem:[%s168 + $0xca] sm:$0xff]
        %v675 = vld [vmem:[%s168 + $0xda] sm:$0xff]
        %v676 = vld [vmem:[%s168 + $0xe2] sm:$0xff]
        %v677 = vld [vmem:[%s168 + $0xf2] sm:$0xff]
        %v678 = vld [vmem:[%s168 + $0xfa] sm:$0xff]
        %v679 = vld [vmem:[%s168 + $0x10a] sm:$0xff]
        %v680 = vld [vmem:[%s168 + $0x112] sm:$0xff]
        %v681 = vld [vmem:[%s168 + $0x122] sm:$0xff]
        %v682 = vld [vmem:[%s168 + $0x12a] sm:$0xff]
        %v683 = vld [vmem:[%s168 + $0x13a] sm:$0xff]
        %v684 = vld [vmem:[%s168 + $0x142] sm:$0xff]
        %v685 = vld [vmem:[%s168 + $0x152] sm:$0xff]
        %v686 = vld [vmem:[%s168 + $0x15a] sm:$0xff]
        %v687 = vld [vmem:[%s168 + $0x16a] sm:$0xff]
        %v688 = vld [vmem:[%s168 + $0x172] sm:$0xff]
        %s689 = scalar_lea.vmem %s1, 32
        %v690 = vld [vmem:[%s689] sm:$0xff]
        %v691 = vld [vmem:[%s689 + $0x8] sm:$0xff]
        %v693 = vsel %vm238, %v657, 0
        %v696 = vsel %vm238, %v658, 0
        %v699 = vsel %vm238, %v659, 0
        %v702 = vsel %vm238, %v660, 0
        %v705 = vsel %vm238, %v661, 0
        %v708 = vsel %vm238, %v662, 0
        %v711 = vsel %vm238, %v663, 0
        %v714 = vsel %vm238, %v664, 0
        %v717 = vsel %vm238, %v665, 0
        %v720 = vsel %vm238, %v666, 0
        %v723 = vsel %vm238, %v667, 0
        %v726 = vsel %vm238, %v668, 0
        %v729 = vsel %vm238, %v669, 0
        %v732 = vsel %vm238, %v670, 0
        %v735 = vsel %vm238, %v671, 0
        %v738 = vsel %vm238, %v672, 0
        %v741 = vsel %vm238, %v673, 0
        %v744 = vsel %vm238, %v674, 0
        %v747 = vsel %vm238, %v675, 0
        %v750 = vsel %vm238, %v676, 0
        %v753 = vsel %vm238, %v677, 0
        %v756 = vsel %vm238, %v678, 0
        %v759 = vsel %vm238, %v679, 0
        %v762 = vsel %vm238, %v680, 0
        %v765 = vsel %vm238, %v681, 0
        %v768 = vsel %vm238, %v682, 0
        %v771 = vsel %vm238, %v683, 0
        %v774 = vsel %vm238, %v684, 0
        %v777 = vsel %vm238, %v685, 0
        %v780 = vsel %vm238, %v686, 0
        %v783 = vsel %vm238, %v687, 0
        %v786 = vsel %vm238, %v688, 0
        %788 = vmatpush.msra.mxu0 0.0
        %789 = vmatpush.msra.mxu0 0.0
        %790 = vmatpush.msra.mxu0 0.0
        %791 = vmatpush.msra.mxu0 0.0
        %792 = vmatpush.msra.mxu0 0.0
        %793 = vmatpush.msra.mxu0 0.0
        %794 = vmatpush.msra.mxu0 0.0
        %795 = vmatpush.msra.mxu0 0.0
        %796 = vmatpush.msra.mxu0 0.0
        %797 = vmatpush.msra.mxu0 0.0
        %798 = vmatpush.msra.mxu0 0.0
        %799 = vmatpush.msra.mxu0 0.0
        %800 = vmatpush.msra.mxu0 0.0
        %801 = vmatpush.msra.mxu0 0.0
        %802 = vmatpush.msra.mxu0 %v691
        %803 = vmatpush.msra.mxu0 %v690
        %804 = vmatmul.f32.gmra.mxu0 %v693
        %v805 = vpop.f32.mrf.mxu0
        %v806 = vadd.f32 0.0, %v805
        %807 = vmatmul.f32.gmra.mxu0 %v696
        %v808 = vpop.f32.mrf.mxu0
        %v809 = vadd.f32 0.0, %v808
        %810 = vmatmul.f32.gmra.mxu0 %v699
        %v811 = vpop.f32.mrf.mxu0
        %v812 = vadd.f32 0.0, %v811
        %813 = vmatmul.f32.gmra.mxu0 %v702
        %v814 = vpop.f32.mrf.mxu0
        %v815 = vadd.f32 0.0, %v814
        %816 = vmatmul.f32.gmra.mxu0 %v705
        %v817 = vpop.f32.mrf.mxu0
        %v818 = vadd.f32 0.0, %v817
        %819 = vmatmul.f32.gmra.mxu0 %v708
        %v820 = vpop.f32.mrf.mxu0
        %v821 = vadd.f32 0.0, %v820
        %822 = vmatmul.f32.gmra.mxu0 %v711
        %v823 = vpop.f32.mrf.mxu0
        %v824 = vadd.f32 0.0, %v823
        %825 = vmatmul.f32.gmra.mxu0 %v714
        %v826 = vpop.f32.mrf.mxu0
        %v827 = vadd.f32 0.0, %v826
        %828 = vmatmul.f32.gmra.mxu0 %v717
        %v829 = vpop.f32.mrf.mxu0
        %v830 = vadd.f32 0.0, %v829
        %831 = vmatmul.f32.gmra.mxu0 %v720
        %v832 = vpop.f32.mrf.mxu0
        %v833 = vadd.f32 0.0, %v832
        %834 = vmatmul.f32.gmra.mxu0 %v723
        %v835 = vpop.f32.mrf.mxu0
        %v836 = vadd.f32 0.0, %v835
        %837 = vmatmul.f32.gmra.mxu0 %v726
        %v838 = vpop.f32.mrf.mxu0
        %v839 = vadd.f32 0.0, %v838
        %840 = vmatmul.f32.gmra.mxu0 %v729
        %v841 = vpop.f32.mrf.mxu0
        %v842 = vadd.f32 0.0, %v841
        %843 = vmatmul.f32.gmra.mxu0 %v732
        %v844 = vpop.f32.mrf.mxu0
        %v845 = vadd.f32 0.0, %v844
        %846 = vmatmul.f32.gmra.mxu0 %v735
        %v847 = vpop.f32.mrf.mxu0
        %v848 = vadd.f32 0.0, %v847
        %849 = vmatmul.f32.gmra.mxu0 %v738
        %v850 = vpop.f32.mrf.mxu0
        %v851 = vadd.f32 0.0, %v850
        %852 = vmatmul.f32.gmra.mxu0 %v741
        %v853 = vpop.f32.mrf.mxu0
        %v854 = vadd.f32 0.0, %v853
        %855 = vmatmul.f32.gmra.mxu0 %v744
        %v856 = vpop.f32.mrf.mxu0
        %v857 = vadd.f32 0.0, %v856
        %858 = vmatmul.f32.gmra.mxu0 %v747
        %v859 = vpop.f32.mrf.mxu0
        %v860 = vadd.f32 0.0, %v859
        %861 = vmatmul.f32.gmra.mxu0 %v750
        %v862 = vpop.f32.mrf.mxu0
        %v863 = vadd.f32 0.0, %v862
        %864 = vmatmul.f32.gmra.mxu0 %v753
        %v865 = vpop.f32.mrf.mxu0
        %v866 = vadd.f32 0.0, %v865
        %867 = vmatmul.f32.gmra.mxu0 %v756
        %v868 = vpop.f32.mrf.mxu0
        %v869 = vadd.f32 0.0, %v868
        %870 = vmatmul.f32.gmra.mxu0 %v759
        %v871 = vpop.f32.mrf.mxu0
        %v872 = vadd.f32 0.0, %v871
        %873 = vmatmul.f32.gmra.mxu0 %v762
        %v874 = vpop.f32.mrf.mxu0
        %v875 = vadd.f32 0.0, %v874
        %876 = vmatmul.f32.gmra.mxu0 %v765
        %v877 = vpop.f32.mrf.mxu0
        %v878 = vadd.f32 0.0, %v877
        %879 = vmatmul.f32.gmra.mxu0 %v768
        %v880 = vpop.f32.mrf.mxu0
        %v881 = vadd.f32 0.0, %v880
        %882 = vmatmul.f32.gmra.mxu0 %v771
        %v883 = vpop.f32.mrf.mxu0
        %v884 = vadd.f32 0.0, %v883
        %885 = vmatmul.f32.gmra.mxu0 %v774
        %v886 = vpop.f32.mrf.mxu0
        %v887 = vadd.f32 0.0, %v886
        %888 = vmatmul.f32.gmra.mxu0 %v777
        %v889 = vpop.f32.mrf.mxu0
        %v890 = vadd.f32 0.0, %v889
        %891 = vmatmul.f32.gmra.mxu0 %v780
        %v892 = vpop.f32.mrf.mxu0
        %v893 = vadd.f32 0.0, %v892
        %894 = vmatmul.f32.gmra.mxu0 %v783
        %v895 = vpop.f32.mrf.mxu0
        %v896 = vadd.f32 0.0, %v895
        %897 = vmatmul.f32.gmra.mxu0 %v786
        %v898 = vpop.f32.mrf.mxu0
        %v899 = vadd.f32 0.0, %v898
        %900 = vdwg.mxu0
        %v901 = vadd.f32 %v562, %v806
        %v902 = vadd.f32 %v565, %v809
        %v903 = vadd.f32 %v568, %v812
        %v904 = vadd.f32 %v571, %v815
        %v905 = vadd.f32 %v574, %v818
        %v906 = vadd.f32 %v577, %v821
        %v907 = vadd.f32 %v580, %v824
        %v908 = vadd.f32 %v583, %v827
        %v909 = vadd.f32 %v586, %v830
        %v910 = vadd.f32 %v589, %v833
        %v911 = vadd.f32 %v592, %v836
        %v912 = vadd.f32 %v595, %v839
        %v913 = vadd.f32 %v598, %v842
        %v914 = vadd.f32 %v601, %v845
        %v915 = vadd.f32 %v604, %v848
        %v916 = vadd.f32 %v607, %v851
        %v917 = vadd.f32 %v610, %v854
        %v918 = vadd.f32 %v613, %v857
        %v919 = vadd.f32 %v616, %v860
        %v920 = vadd.f32 %v619, %v863
        %v921 = vadd.f32 %v622, %v866
        %v922 = vadd.f32 %v625, %v869
        %v923 = vadd.f32 %v628, %v872
        %v924 = vadd.f32 %v631, %v875
        %v925 = vadd.f32 %v634, %v878
        %v926 = vadd.f32 %v637, %v881
        %v927 = vadd.f32 %v640, %v884
        %v928 = vadd.f32 %v643, %v887
        %v929 = vadd.f32 %v646, %v890
        %v930 = vadd.f32 %v649, %v893
        %v931 = vadd.f32 %v652, %v896
        %v932 = vadd.f32 %v655, %v899
        %v933 = vld [vmem:[%s168 + $0x3] sm:$0xff]
        %v934 = vld [vmem:[%s168 + $0xb] sm:$0xff]
        %v935 = vld [vmem:[%s168 + $0x1b] sm:$0xff]
        %v936 = vld [vmem:[%s168 + $0x23] sm:$0xff]
        %v937 = vld [vmem:[%s168 + $0x33] sm:$0xff]
        %v938 = vld [vmem:[%s168 + $0x3b] sm:$0xff]
        %v939 = vld [vmem:[%s168 + $0x4b] sm:$0xff]
        %v940 = vld [vmem:[%s168 + $0x53] sm:$0xff]
        %v941 = vld [vmem:[%s168 + $0x63] sm:$0xff]
        %v942 = vld [vmem:[%s168 + $0x6b] sm:$0xff]
        %v943 = vld [vmem:[%s168 + $0x7b] sm:$0xff]
        %v944 = vld [vmem:[%s168 + $0x83] sm:$0xff]
        %v945 = vld [vmem:[%s168 + $0x93] sm:$0xff]
        %v946 = vld [vmem:[%s168 + $0x9b] sm:$0xff]
        %v947 = vld [vmem:[%s168 + $0xab] sm:$0xff]
        %v948 = vld [vmem:[%s168 + $0xb3] sm:$0xff]
        %v949 = vld [vmem:[%s168 + $0xc3] sm:$0xff]
        %v950 = vld [vmem:[%s168 + $0xcb] sm:$0xff]
        %v951 = vld [vmem:[%s168 + $0xdb] sm:$0xff]
        %v952 = vld [vmem:[%s168 + $0xe3] sm:$0xff]
        %v953 = vld [vmem:[%s168 + $0xf3] sm:$0xff]
        %v954 = vld [vmem:[%s168 + $0xfb] sm:$0xff]
        %v955 = vld [vmem:[%s168 + $0x10b] sm:$0xff]
        %v956 = vld [vmem:[%s168 + $0x113] sm:$0xff]
        %v957 = vld [vmem:[%s168 + $0x123] sm:$0xff]
        %v958 = vld [vmem:[%s168 + $0x12b] sm:$0xff]
        %v959 = vld [vmem:[%s168 + $0x13b] sm:$0xff]
        %v960 = vld [vmem:[%s168 + $0x143] sm:$0xff]
        %v961 = vld [vmem:[%s168 + $0x153] sm:$0xff]
        %v962 = vld [vmem:[%s168 + $0x15b] sm:$0xff]
        %v963 = vld [vmem:[%s168 + $0x16b] sm:$0xff]
        %v964 = vld [vmem:[%s168 + $0x173] sm:$0xff]
        %s965 = scalar_lea.vmem %s1, 48
        %v966 = vld [vmem:[%s965] sm:$0xff]
        %v967 = vld [vmem:[%s965 + $0x8] sm:$0xff]
        %v969 = vsel %vm238, %v933, 0
        %v972 = vsel %vm238, %v934, 0
        %v975 = vsel %vm238, %v935, 0
        %v978 = vsel %vm238, %v936, 0
        %v981 = vsel %vm238, %v937, 0
        %v984 = vsel %vm238, %v938, 0
        %v987 = vsel %vm238, %v939, 0
        %v990 = vsel %vm238, %v940, 0
        %v993 = vsel %vm238, %v941, 0
        %v996 = vsel %vm238, %v942, 0
        %v999 = vsel %vm238, %v943, 0
        %v1002 = vsel %vm238, %v944, 0
        %v1005 = vsel %vm238, %v945, 0
        %v1008 = vsel %vm238, %v946, 0
        %v1011 = vsel %vm238, %v947, 0
        %v1014 = vsel %vm238, %v948, 0
        %v1017 = vsel %vm238, %v949, 0
        %v1020 = vsel %vm238, %v950, 0
        %v1023 = vsel %vm238, %v951, 0
        %v1026 = vsel %vm238, %v952, 0
        %v1029 = vsel %vm238, %v953, 0
        %v1032 = vsel %vm238, %v954, 0
        %v1035 = vsel %vm238, %v955, 0
        %v1038 = vsel %vm238, %v956, 0
        %v1041 = vsel %vm238, %v957, 0
        %v1044 = vsel %vm238, %v958, 0
        %v1047 = vsel %vm238, %v959, 0
        %v1050 = vsel %vm238, %v960, 0
        %v1053 = vsel %vm238, %v961, 0
        %v1056 = vsel %vm238, %v962, 0
        %v1059 = vsel %vm238, %v963, 0
        %v1062 = vsel %vm238, %v964, 0
        %1064 = vmatpush.msra.mxu0 0.0
        %1065 = vmatpush.msra.mxu0 0.0
        %1066 = vmatpush.msra.mxu0 0.0
        %1067 = vmatpush.msra.mxu0 0.0
        %1068 = vmatpush.msra.mxu0 0.0
        %1069 = vmatpush.msra.mxu0 0.0
        %1070 = vmatpush.msra.mxu0 0.0
        %1071 = vmatpush.msra.mxu0 0.0
        %1072 = vmatpush.msra.mxu0 0.0
        %1073 = vmatpush.msra.mxu0 0.0
        %1074 = vmatpush.msra.mxu0 0.0
        %1075 = vmatpush.msra.mxu0 0.0
        %1076 = vmatpush.msra.mxu0 0.0
        %1077 = vmatpush.msra.mxu0 0.0
        %1078 = vmatpush.msra.mxu0 %v967
        %1079 = vmatpush.msra.mxu0 %v966
        %1080 = vmatmul.f32.gmra.mxu0 %v969
        %v1081 = vpop.f32.mrf.mxu0
        %v1082 = vadd.f32 0.0, %v1081
        %1083 = vmatmul.f32.gmra.mxu0 %v972
        %v1084 = vpop.f32.mrf.mxu0
        %v1085 = vadd.f32 0.0, %v1084
        %1086 = vmatmul.f32.gmra.mxu0 %v975
        %v1087 = vpop.f32.mrf.mxu0
        %v1088 = vadd.f32 0.0, %v1087
        %1089 = vmatmul.f32.gmra.mxu0 %v978
        %v1090 = vpop.f32.mrf.mxu0
        %v1091 = vadd.f32 0.0, %v1090
        %1092 = vmatmul.f32.gmra.mxu0 %v981
        %v1093 = vpop.f32.mrf.mxu0
        %v1094 = vadd.f32 0.0, %v1093
        %1095 = vmatmul.f32.gmra.mxu0 %v984
        %v1096 = vpop.f32.mrf.mxu0
        %v1097 = vadd.f32 0.0, %v1096
        %1098 = vmatmul.f32.gmra.mxu0 %v987
        %v1099 = vpop.f32.mrf.mxu0
        %v1100 = vadd.f32 0.0, %v1099
        %1101 = vmatmul.f32.gmra.mxu0 %v990
        %v1102 = vpop.f32.mrf.mxu0
        %v1103 = vadd.f32 0.0, %v1102
        %1104 = vmatmul.f32.gmra.mxu0 %v993
        %v1105 = vpop.f32.mrf.mxu0
        %v1106 = vadd.f32 0.0, %v1105
        %1107 = vmatmul.f32.gmra.mxu0 %v996
        %v1108 = vpop.f32.mrf.mxu0
        %v1109 = vadd.f32 0.0, %v1108
        %1110 = vmatmul.f32.gmra.mxu0 %v999
        %v1111 = vpop.f32.mrf.mxu0
        %v1112 = vadd.f32 0.0, %v1111
        %1113 = vmatmul.f32.gmra.mxu0 %v1002
        %v1114 = vpop.f32.mrf.mxu0
        %v1115 = vadd.f32 0.0, %v1114
        %1116 = vmatmul.f32.gmra.mxu0 %v1005
        %v1117 = vpop.f32.mrf.mxu0
        %v1118 = vadd.f32 0.0, %v1117
        %1119 = vmatmul.f32.gmra.mxu0 %v1008
        %v1120 = vpop.f32.mrf.mxu0
        %v1121 = vadd.f32 0.0, %v1120
        %1122 = vmatmul.f32.gmra.mxu0 %v1011
        %v1123 = vpop.f32.mrf.mxu0
        %v1124 = vadd.f32 0.0, %v1123
        %1125 = vmatmul.f32.gmra.mxu0 %v1014
        %v1126 = vpop.f32.mrf.mxu0
        %v1127 = vadd.f32 0.0, %v1126
        %1128 = vmatmul.f32.gmra.mxu0 %v1017
        %v1129 = vpop.f32.mrf.mxu0
        %v1130 = vadd.f32 0.0, %v1129
        %1131 = vmatmul.f32.gmra.mxu0 %v1020
        %v1132 = vpop.f32.mrf.mxu0
        %v1133 = vadd.f32 0.0, %v1132
        %1134 = vmatmul.f32.gmra.mxu0 %v1023
        %v1135 = vpop.f32.mrf.mxu0
        %v1136 = vadd.f32 0.0, %v1135
        %1137 = vmatmul.f32.gmra.mxu0 %v1026
        %v1138 = vpop.f32.mrf.mxu0
        %v1139 = vadd.f32 0.0, %v1138
        %1140 = vmatmul.f32.gmra.mxu0 %v1029
        %v1141 = vpop.f32.mrf.mxu0
        %v1142 = vadd.f32 0.0, %v1141
        %1143 = vmatmul.f32.gmra.mxu0 %v1032
        %v1144 = vpop.f32.mrf.mxu0
        %v1145 = vadd.f32 0.0, %v1144
        %1146 = vmatmul.f32.gmra.mxu0 %v1035
        %v1147 = vpop.f32.mrf.mxu0
        %v1148 = vadd.f32 0.0, %v1147
        %1149 = vmatmul.f32.gmra.mxu0 %v1038
        %v1150 = vpop.f32.mrf.mxu0
        %v1151 = vadd.f32 0.0, %v1150
        %1152 = vmatmul.f32.gmra.mxu0 %v1041
        %v1153 = vpop.f32.mrf.mxu0
        %v1154 = vadd.f32 0.0, %v1153
        %1155 = vmatmul.f32.gmra.mxu0 %v1044
        %v1156 = vpop.f32.mrf.mxu0
        %v1157 = vadd.f32 0.0, %v1156
        %1158 = vmatmul.f32.gmra.mxu0 %v1047
        %v1159 = vpop.f32.mrf.mxu0
        %v1160 = vadd.f32 0.0, %v1159
        %1161 = vmatmul.f32.gmra.mxu0 %v1050
        %v1162 = vpop.f32.mrf.mxu0
        %v1163 = vadd.f32 0.0, %v1162
        %1164 = vmatmul.f32.gmra.mxu0 %v1053
        %v1165 = vpop.f32.mrf.mxu0
        %v1166 = vadd.f32 0.0, %v1165
        %1167 = vmatmul.f32.gmra.mxu0 %v1056
        %v1168 = vpop.f32.mrf.mxu0
        %v1169 = vadd.f32 0.0, %v1168
        %1170 = vmatmul.f32.gmra.mxu0 %v1059
        %v1171 = vpop.f32.mrf.mxu0
        %v1172 = vadd.f32 0.0, %v1171
        %1173 = vmatmul.f32.gmra.mxu0 %v1062
        %v1174 = vpop.f32.mrf.mxu0
        %v1175 = vadd.f32 0.0, %v1174
        %1176 = vdwg.mxu0
        %v1177 = vadd.f32 %v901, %v1082
        %v1178 = vadd.f32 %v902, %v1085
        %v1179 = vadd.f32 %v903, %v1088
        %v1180 = vadd.f32 %v904, %v1091
        %v1181 = vadd.f32 %v905, %v1094
        %v1182 = vadd.f32 %v906, %v1097
        %v1183 = vadd.f32 %v907, %v1100
        %v1184 = vadd.f32 %v908, %v1103
        %v1185 = vadd.f32 %v909, %v1106
        %v1186 = vadd.f32 %v910, %v1109
        %v1187 = vadd.f32 %v911, %v1112
        %v1188 = vadd.f32 %v912, %v1115
        %v1189 = vadd.f32 %v913, %v1118
        %v1190 = vadd.f32 %v914, %v1121
        %v1191 = vadd.f32 %v915, %v1124
        %v1192 = vadd.f32 %v916, %v1127
        %v1193 = vadd.f32 %v917, %v1130
        %v1194 = vadd.f32 %v918, %v1133
        %v1195 = vadd.f32 %v919, %v1136
        %v1196 = vadd.f32 %v920, %v1139
        %v1197 = vadd.f32 %v921, %v1142
        %v1198 = vadd.f32 %v922, %v1145
        %v1199 = vadd.f32 %v923, %v1148
        %v1200 = vadd.f32 %v924, %v1151
        %v1201 = vadd.f32 %v925, %v1154
        %v1202 = vadd.f32 %v926, %v1157
        %v1203 = vadd.f32 %v927, %v1160
        %v1204 = vadd.f32 %v928, %v1163
        %v1205 = vadd.f32 %v929, %v1166
        %v1206 = vadd.f32 %v930, %v1169
        %v1207 = vadd.f32 %v931, %v1172
        %v1208 = vadd.f32 %v932, %v1175
        %s1209 = scalar_lea.vmem %s168, 24
        %v1210 = vld [vmem:[%s1209] sm:$0xff]
        %v1211 = vld [vmem:[%s1209 + $0x8] sm:$0xff]
        %v1212 = vld [vmem:[%s1209 + $0x18] sm:$0xff]
        %v1213 = vld [vmem:[%s1209 + $0x20] sm:$0xff]
        %v1214 = vld [vmem:[%s1209 + $0x30] sm:$0xff]
        %v1215 = vld [vmem:[%s1209 + $0x38] sm:$0xff]
        %v1216 = vld [vmem:[%s1209 + $0x48] sm:$0xff]
        %v1217 = vld [vmem:[%s1209 + $0x50] sm:$0xff]
        %v1218 = vld [vmem:[%s1209 + $0x60] sm:$0xff]
        %v1219 = vld [vmem:[%s1209 + $0x68] sm:$0xff]
        %v1220 = vld [vmem:[%s1209 + $0x78] sm:$0xff]
        %v1221 = vld [vmem:[%s1209 + $0x80] sm:$0xff]
        %v1222 = vld [vmem:[%s1209 + $0x90] sm:$0xff]
        %v1223 = vld [vmem:[%s1209 + $0x98] sm:$0xff]
        %v1224 = vld [vmem:[%s1209 + $0xa8] sm:$0xff]
        %v1225 = vld [vmem:[%s1209 + $0xb0] sm:$0xff]
        %v1226 = vld [vmem:[%s1209 + $0xc0] sm:$0xff]
        %v1227 = vld [vmem:[%s1209 + $0xc8] sm:$0xff]
        %v1228 = vld [vmem:[%s1209 + $0xd8] sm:$0xff]
        %v1229 = vld [vmem:[%s1209 + $0xe0] sm:$0xff]
        %v1230 = vld [vmem:[%s1209 + $0xf0] sm:$0xff]
        %v1231 = vld [vmem:[%s1209 + $0xf8] sm:$0xff]
        %v1232 = vld [vmem:[%s1209 + $0x108] sm:$0xff]
        %v1233 = vld [vmem:[%s1209 + $0x110] sm:$0xff]
        %v1234 = vld [vmem:[%s1209 + $0x120] sm:$0xff]
        %v1235 = vld [vmem:[%s1209 + $0x128] sm:$0xff]
        %v1236 = vld [vmem:[%s1209 + $0x138] sm:$0xff]
        %v1237 = vld [vmem:[%s1209 + $0x140] sm:$0xff]
        %v1238 = vld [vmem:[%s1209 + $0x150] sm:$0xff]
        %v1239 = vld [vmem:[%s1209 + $0x158] sm:$0xff]
        %v1240 = vld [vmem:[%s1209 + $0x168] sm:$0xff]
        %v1241 = vld [vmem:[%s1209 + $0x170] sm:$0xff]
        %s1242 = scalar_lea.vmem %s1, 64
        %v1243 = vld [vmem:[%s1242] sm:$0xff]
        %v1244 = vld [vmem:[%s1242 + $0x8] sm:$0xff]
        %v1246 = vsel %vm238, %v1210, 0
        %v1249 = vsel %vm238, %v1211, 0
        %v1252 = vsel %vm238, %v1212, 0
        %v1255 = vsel %vm238, %v1213, 0
        %v1258 = vsel %vm238, %v1214, 0
        %v1261 = vsel %vm238, %v1215, 0
        %v1264 = vsel %vm238, %v1216, 0
        %v1267 = vsel %vm238, %v1217, 0
        %v1270 = vsel %vm238, %v1218, 0
        %v1273 = vsel %vm238, %v1219, 0
        %v1276 = vsel %vm238, %v1220, 0
        %v1279 = vsel %vm238, %v1221, 0
        %v1282 = vsel %vm238, %v1222, 0
        %v1285 = vsel %vm238, %v1223, 0
        %v1288 = vsel %vm238, %v1224, 0
        %v1291 = vsel %vm238, %v1225, 0
        %v1294 = vsel %vm238, %v1226, 0
        %v1297 = vsel %vm238, %v1227, 0
        %v1300 = vsel %vm238, %v1228, 0
        %v1303 = vsel %vm238, %v1229, 0
        %v1306 = vsel %vm238, %v1230, 0
        %v1309 = vsel %vm238, %v1231, 0
        %v1312 = vsel %vm238, %v1232, 0
        %v1315 = vsel %vm238, %v1233, 0
        %v1318 = vsel %vm238, %v1234, 0
        %v1321 = vsel %vm238, %v1235, 0
        %v1324 = vsel %vm238, %v1236, 0
        %v1327 = vsel %vm238, %v1237, 0
        %v1330 = vsel %vm238, %v1238, 0
        %v1333 = vsel %vm238, %v1239, 0
        %v1336 = vsel %vm238, %v1240, 0
        %v1339 = vsel %vm238, %v1241, 0
        %1341 = vmatpush.msra.mxu0 0.0
        %1342 = vmatpush.msra.mxu0 0.0
        %1343 = vmatpush.msra.mxu0 0.0
        %1344 = vmatpush.msra.mxu0 0.0
        %1345 = vmatpush.msra.mxu0 0.0
        %1346 = vmatpush.msra.mxu0 0.0
        %1347 = vmatpush.msra.mxu0 0.0
        %1348 = vmatpush.msra.mxu0 0.0
        %1349 = vmatpush.msra.mxu0 0.0
        %1350 = vmatpush.msra.mxu0 0.0
        %1351 = vmatpush.msra.mxu0 0.0
        %1352 = vmatpush.msra.mxu0 0.0
        %1353 = vmatpush.msra.mxu0 0.0
        %1354 = vmatpush.msra.mxu0 0.0
        %1355 = vmatpush.msra.mxu0 %v1244
        %1356 = vmatpush.msra.mxu0 %v1243
        %1357 = vmatmul.f32.gmra.mxu0 %v1246
        %v1358 = vpop.f32.mrf.mxu0
        %v1359 = vadd.f32 0.0, %v1358
        %1360 = vmatmul.f32.gmra.mxu0 %v1249
        %v1361 = vpop.f32.mrf.mxu0
        %v1362 = vadd.f32 0.0, %v1361
        %1363 = vmatmul.f32.gmra.mxu0 %v1252
        %v1364 = vpop.f32.mrf.mxu0
        %v1365 = vadd.f32 0.0, %v1364
        %1366 = vmatmul.f32.gmra.mxu0 %v1255
        %v1367 = vpop.f32.mrf.mxu0
        %v1368 = vadd.f32 0.0, %v1367
        %1369 = vmatmul.f32.gmra.mxu0 %v1258
        %v1370 = vpop.f32.mrf.mxu0
        %v1371 = vadd.f32 0.0, %v1370
        %1372 = vmatmul.f32.gmra.mxu0 %v1261
        %v1373 = vpop.f32.mrf.mxu0
        %v1374 = vadd.f32 0.0, %v1373
        %1375 = vmatmul.f32.gmra.mxu0 %v1264
        %v1376 = vpop.f32.mrf.mxu0
        %v1377 = vadd.f32 0.0, %v1376
        %1378 = vmatmul.f32.gmra.mxu0 %v1267
        %v1379 = vpop.f32.mrf.mxu0
        %v1380 = vadd.f32 0.0, %v1379
        %1381 = vmatmul.f32.gmra.mxu0 %v1270
        %v1382 = vpop.f32.mrf.mxu0
        %v1383 = vadd.f32 0.0, %v1382
        %1384 = vmatmul.f32.gmra.mxu0 %v1273
        %v1385 = vpop.f32.mrf.mxu0
        %v1386 = vadd.f32 0.0, %v1385
        %1387 = vmatmul.f32.gmra.mxu0 %v1276
        %v1388 = vpop.f32.mrf.mxu0
        %v1389 = vadd.f32 0.0, %v1388
        %1390 = vmatmul.f32.gmra.mxu0 %v1279
        %v1391 = vpop.f32.mrf.mxu0
        %v1392 = vadd.f32 0.0, %v1391
        %1393 = vmatmul.f32.gmra.mxu0 %v1282
        %v1394 = vpop.f32.mrf.mxu0
        %v1395 = vadd.f32 0.0, %v1394
        %1396 = vmatmul.f32.gmra.mxu0 %v1285
        %v1397 = vpop.f32.mrf.mxu0
        %v1398 = vadd.f32 0.0, %v1397
        %1399 = vmatmul.f32.gmra.mxu0 %v1288
        %v1400 = vpop.f32.mrf.mxu0
        %v1401 = vadd.f32 0.0, %v1400
        %1402 = vmatmul.f32.gmra.mxu0 %v1291
        %v1403 = vpop.f32.mrf.mxu0
        %v1404 = vadd.f32 0.0, %v1403
        %1405 = vmatmul.f32.gmra.mxu0 %v1294
        %v1406 = vpop.f32.mrf.mxu0
        %v1407 = vadd.f32 0.0, %v1406
        %1408 = vmatmul.f32.gmra.mxu0 %v1297
        %v1409 = vpop.f32.mrf.mxu0
        %v1410 = vadd.f32 0.0, %v1409
        %1411 = vmatmul.f32.gmra.mxu0 %v1300
        %v1412 = vpop.f32.mrf.mxu0
        %v1413 = vadd.f32 0.0, %v1412
        %1414 = vmatmul.f32.gmra.mxu0 %v1303
        %v1415 = vpop.f32.mrf.mxu0
        %v1416 = vadd.f32 0.0, %v1415
        %1417 = vmatmul.f32.gmra.mxu0 %v1306
        %v1418 = vpop.f32.mrf.mxu0
        %v1419 = vadd.f32 0.0, %v1418
        %1420 = vmatmul.f32.gmra.mxu0 %v1309
        %v1421 = vpop.f32.mrf.mxu0
        %v1422 = vadd.f32 0.0, %v1421
        %1423 = vmatmul.f32.gmra.mxu0 %v1312
        %v1424 = vpop.f32.mrf.mxu0
        %v1425 = vadd.f32 0.0, %v1424
        %1426 = vmatmul.f32.gmra.mxu0 %v1315
        %v1427 = vpop.f32.mrf.mxu0
        %v1428 = vadd.f32 0.0, %v1427
        %1429 = vmatmul.f32.gmra.mxu0 %v1318
        %v1430 = vpop.f32.mrf.mxu0
        %v1431 = vadd.f32 0.0, %v1430
        %1432 = vmatmul.f32.gmra.mxu0 %v1321
        %v1433 = vpop.f32.mrf.mxu0
        %v1434 = vadd.f32 0.0, %v1433
        %1435 = vmatmul.f32.gmra.mxu0 %v1324
        %v1436 = vpop.f32.mrf.mxu0
        %v1437 = vadd.f32 0.0, %v1436
        %1438 = vmatmul.f32.gmra.mxu0 %v1327
        %v1439 = vpop.f32.mrf.mxu0
        %v1440 = vadd.f32 0.0, %v1439
        %1441 = vmatmul.f32.gmra.mxu0 %v1330
        %v1442 = vpop.f32.mrf.mxu0
        %v1443 = vadd.f32 0.0, %v1442
        %1444 = vmatmul.f32.gmra.mxu0 %v1333
        %v1445 = vpop.f32.mrf.mxu0
        %v1446 = vadd.f32 0.0, %v1445
        %1447 = vmatmul.f32.gmra.mxu0 %v1336
        %v1448 = vpop.f32.mrf.mxu0
        %v1449 = vadd.f32 0.0, %v1448
        %1450 = vmatmul.f32.gmra.mxu0 %v1339
        %v1451 = vpop.f32.mrf.mxu0
        %v1452 = vadd.f32 0.0, %v1451
        %1453 = vdwg.mxu0
        %v1454 = vadd.f32 %v1177, %v1359
        %v1455 = vadd.f32 %v1178, %v1362
        %v1456 = vadd.f32 %v1179, %v1365
        %v1457 = vadd.f32 %v1180, %v1368
        %v1458 = vadd.f32 %v1181, %v1371
        %v1459 = vadd.f32 %v1182, %v1374
        %v1460 = vadd.f32 %v1183, %v1377
        %v1461 = vadd.f32 %v1184, %v1380
        %v1462 = vadd.f32 %v1185, %v1383
        %v1463 = vadd.f32 %v1186, %v1386
        %v1464 = vadd.f32 %v1187, %v1389
        %v1465 = vadd.f32 %v1188, %v1392
        %v1466 = vadd.f32 %v1189, %v1395
        %v1467 = vadd.f32 %v1190, %v1398
        %v1468 = vadd.f32 %v1191, %v1401
        %v1469 = vadd.f32 %v1192, %v1404
        %v1470 = vadd.f32 %v1193, %v1407
        %v1471 = vadd.f32 %v1194, %v1410
        %v1472 = vadd.f32 %v1195, %v1413
        %v1473 = vadd.f32 %v1196, %v1416
        %v1474 = vadd.f32 %v1197, %v1419
        %v1475 = vadd.f32 %v1198, %v1422
        %v1476 = vadd.f32 %v1199, %v1425
        %v1477 = vadd.f32 %v1200, %v1428
        %v1478 = vadd.f32 %v1201, %v1431
        %v1479 = vadd.f32 %v1202, %v1434
        %v1480 = vadd.f32 %v1203, %v1437
        %v1481 = vadd.f32 %v1204, %v1440
        %v1482 = vadd.f32 %v1205, %v1443
        %v1483 = vadd.f32 %v1206, %v1446
        %v1484 = vadd.f32 %v1207, %v1449
        %v1485 = vadd.f32 %v1208, %v1452
        %v1486 = vld [vmem:[%s1209 + $0x1] sm:$0xff]
        %v1487 = vld [vmem:[%s1209 + $0x9] sm:$0xff]
        %v1488 = vld [vmem:[%s1209 + $0x19] sm:$0xff]
        %v1489 = vld [vmem:[%s1209 + $0x21] sm:$0xff]
        %v1490 = vld [vmem:[%s1209 + $0x31] sm:$0xff]
        %v1491 = vld [vmem:[%s1209 + $0x39] sm:$0xff]
        %v1492 = vld [vmem:[%s1209 + $0x49] sm:$0xff]
        %v1493 = vld [vmem:[%s1209 + $0x51] sm:$0xff]
        %v1494 = vld [vmem:[%s1209 + $0x61] sm:$0xff]
        %v1495 = vld [vmem:[%s1209 + $0x69] sm:$0xff]
        %v1496 = vld [vmem:[%s1209 + $0x79] sm:$0xff]
        %v1497 = vld [vmem:[%s1209 + $0x81] sm:$0xff]
        %v1498 = vld [vmem:[%s1209 + $0x91] sm:$0xff]
        %v1499 = vld [vmem:[%s1209 + $0x99] sm:$0xff]
        %v1500 = vld [vmem:[%s1209 + $0xa9] sm:$0xff]
        %v1501 = vld [vmem:[%s1209 + $0xb1] sm:$0xff]
        %v1502 = vld [vmem:[%s1209 + $0xc1] sm:$0xff]
        %v1503 = vld [vmem:[%s1209 + $0xc9] sm:$0xff]
        %v1504 = vld [vmem:[%s1209 + $0xd9] sm:$0xff]
        %v1505 = vld [vmem:[%s1209 + $0xe1] sm:$0xff]
        %v1506 = vld [vmem:[%s1209 + $0xf1] sm:$0xff]
        %v1507 = vld [vmem:[%s1209 + $0xf9] sm:$0xff]
        %v1508 = vld [vmem:[%s1209 + $0x109] sm:$0xff]
        %v1509 = vld [vmem:[%s1209 + $0x111] sm:$0xff]
        %v1510 = vld [vmem:[%s1209 + $0x121] sm:$0xff]
        %v1511 = vld [vmem:[%s1209 + $0x129] sm:$0xff]
        %v1512 = vld [vmem:[%s1209 + $0x139] sm:$0xff]
        %v1513 = vld [vmem:[%s1209 + $0x141] sm:$0xff]
        %v1514 = vld [vmem:[%s1209 + $0x151] sm:$0xff]
        %v1515 = vld [vmem:[%s1209 + $0x159] sm:$0xff]
        %v1516 = vld [vmem:[%s1209 + $0x169] sm:$0xff]
        %v1517 = vld [vmem:[%s1209 + $0x171] sm:$0xff]
        %s1518 = scalar_lea.vmem %s1, 80
        %v1519 = vld [vmem:[%s1518] sm:$0xff]
        %v1520 = vld [vmem:[%s1518 + $0x8] sm:$0xff]
        %v1522 = vsel %vm238, %v1486, 0
        %v1525 = vsel %vm238, %v1487, 0
        %v1528 = vsel %vm238, %v1488, 0
        %v1531 = vsel %vm238, %v1489, 0
        %v1534 = vsel %vm238, %v1490, 0
        %v1537 = vsel %vm238, %v1491, 0
        %v1540 = vsel %vm238, %v1492, 0
        %v1543 = vsel %vm238, %v1493, 0
        %v1546 = vsel %vm238, %v1494, 0
        %v1549 = vsel %vm238, %v1495, 0
        %v1552 = vsel %vm238, %v1496, 0
        %v1555 = vsel %vm238, %v1497, 0
        %v1558 = vsel %vm238, %v1498, 0
        %v1561 = vsel %vm238, %v1499, 0
        %v1564 = vsel %vm238, %v1500, 0
        %v1567 = vsel %vm238, %v1501, 0
        %v1570 = vsel %vm238, %v1502, 0
        %v1573 = vsel %vm238, %v1503, 0
        %v1576 = vsel %vm238, %v1504, 0
        %v1579 = vsel %vm238, %v1505, 0
        %v1582 = vsel %vm238, %v1506, 0
        %v1585 = vsel %vm238, %v1507, 0
        %v1588 = vsel %vm238, %v1508, 0
        %v1591 = vsel %vm238, %v1509, 0
        %v1594 = vsel %vm238, %v1510, 0
        %v1597 = vsel %vm238, %v1511, 0
        %v1600 = vsel %vm238, %v1512, 0
        %v1603 = vsel %vm238, %v1513, 0
        %v1606 = vsel %vm238, %v1514, 0
        %v1609 = vsel %vm238, %v1515, 0
        %v1612 = vsel %vm238, %v1516, 0
        %v1615 = vsel %vm238, %v1517, 0
        %1617 = vmatpush.msra.mxu0 0.0
        %1618 = vmatpush.msra.mxu0 0.0
        %1619 = vmatpush.msra.mxu0 0.0
        %1620 = vmatpush.msra.mxu0 0.0
        %1621 = vmatpush.msra.mxu0 0.0
        %1622 = vmatpush.msra.mxu0 0.0
        %1623 = vmatpush.msra.mxu0 0.0
        %1624 = vmatpush.msra.mxu0 0.0
        %1625 = vmatpush.msra.mxu0 0.0
        %1626 = vmatpush.msra.mxu0 0.0
        %1627 = vmatpush.msra.mxu0 0.0
        %1628 = vmatpush.msra.mxu0 0.0
        %1629 = vmatpush.msra.mxu0 0.0
        %1630 = vmatpush.msra.mxu0 0.0
        %1631 = vmatpush.msra.mxu0 %v1520
        %1632 = vmatpush.msra.mxu0 %v1519
        %1633 = vmatmul.f32.gmra.mxu0 %v1522
        %v1634 = vpop.f32.mrf.mxu0
        %v1635 = vadd.f32 0.0, %v1634
        %1636 = vmatmul.f32.gmra.mxu0 %v1525
        %v1637 = vpop.f32.mrf.mxu0
        %v1638 = vadd.f32 0.0, %v1637
        %1639 = vmatmul.f32.gmra.mxu0 %v1528
        %v1640 = vpop.f32.mrf.mxu0
        %v1641 = vadd.f32 0.0, %v1640
        %1642 = vmatmul.f32.gmra.mxu0 %v1531
        %v1643 = vpop.f32.mrf.mxu0
        %v1644 = vadd.f32 0.0, %v1643
        %1645 = vmatmul.f32.gmra.mxu0 %v1534
        %v1646 = vpop.f32.mrf.mxu0
        %v1647 = vadd.f32 0.0, %v1646
        %1648 = vmatmul.f32.gmra.mxu0 %v1537
        %v1649 = vpop.f32.mrf.mxu0
        %v1650 = vadd.f32 0.0, %v1649
        %1651 = vmatmul.f32.gmra.mxu0 %v1540
        %v1652 = vpop.f32.mrf.mxu0
        %v1653 = vadd.f32 0.0, %v1652
        %1654 = vmatmul.f32.gmra.mxu0 %v1543
        %v1655 = vpop.f32.mrf.mxu0
        %v1656 = vadd.f32 0.0, %v1655
        %1657 = vmatmul.f32.gmra.mxu0 %v1546
        %v1658 = vpop.f32.mrf.mxu0
        %v1659 = vadd.f32 0.0, %v1658
        %1660 = vmatmul.f32.gmra.mxu0 %v1549
        %v1661 = vpop.f32.mrf.mxu0
        %v1662 = vadd.f32 0.0, %v1661
        %1663 = vmatmul.f32.gmra.mxu0 %v1552
        %v1664 = vpop.f32.mrf.mxu0
        %v1665 = vadd.f32 0.0, %v1664
        %1666 = vmatmul.f32.gmra.mxu0 %v1555
        %v1667 = vpop.f32.mrf.mxu0
        %v1668 = vadd.f32 0.0, %v1667
        %1669 = vmatmul.f32.gmra.mxu0 %v1558
        %v1670 = vpop.f32.mrf.mxu0
        %v1671 = vadd.f32 0.0, %v1670
        %1672 = vmatmul.f32.gmra.mxu0 %v1561
        %v1673 = vpop.f32.mrf.mxu0
        %v1674 = vadd.f32 0.0, %v1673
        %1675 = vmatmul.f32.gmra.mxu0 %v1564
        %v1676 = vpop.f32.mrf.mxu0
        %v1677 = vadd.f32 0.0, %v1676
        %1678 = vmatmul.f32.gmra.mxu0 %v1567
        %v1679 = vpop.f32.mrf.mxu0
        %v1680 = vadd.f32 0.0, %v1679
        %1681 = vmatmul.f32.gmra.mxu0 %v1570
        %v1682 = vpop.f32.mrf.mxu0
        %v1683 = vadd.f32 0.0, %v1682
        %1684 = vmatmul.f32.gmra.mxu0 %v1573
        %v1685 = vpop.f32.mrf.mxu0
        %v1686 = vadd.f32 0.0, %v1685
        %1687 = vmatmul.f32.gmra.mxu0 %v1576
        %v1688 = vpop.f32.mrf.mxu0
        %v1689 = vadd.f32 0.0, %v1688
        %1690 = vmatmul.f32.gmra.mxu0 %v1579
        %v1691 = vpop.f32.mrf.mxu0
        %v1692 = vadd.f32 0.0, %v1691
        %1693 = vmatmul.f32.gmra.mxu0 %v1582
        %v1694 = vpop.f32.mrf.mxu0
        %v1695 = vadd.f32 0.0, %v1694
        %1696 = vmatmul.f32.gmra.mxu0 %v1585
        %v1697 = vpop.f32.mrf.mxu0
        %v1698 = vadd.f32 0.0, %v1697
        %1699 = vmatmul.f32.gmra.mxu0 %v1588
        %v1700 = vpop.f32.mrf.mxu0
        %v1701 = vadd.f32 0.0, %v1700
        %1702 = vmatmul.f32.gmra.mxu0 %v1591
        %v1703 = vpop.f32.mrf.mxu0
        %v1704 = vadd.f32 0.0, %v1703
        %1705 = vmatmul.f32.gmra.mxu0 %v1594
        %v1706 = vpop.f32.mrf.mxu0
        %v1707 = vadd.f32 0.0, %v1706
        %1708 = vmatmul.f32.gmra.mxu0 %v1597
        %v1709 = vpop.f32.mrf.mxu0
        %v1710 = vadd.f32 0.0, %v1709
        %1711 = vmatmul.f32.gmra.mxu0 %v1600
        %v1712 = vpop.f32.mrf.mxu0
        %v1713 = vadd.f32 0.0, %v1712
        %1714 = vmatmul.f32.gmra.mxu0 %v1603
        %v1715 = vpop.f32.mrf.mxu0
        %v1716 = vadd.f32 0.0, %v1715
        %1717 = vmatmul.f32.gmra.mxu0 %v1606
        %v1718 = vpop.f32.mrf.mxu0
        %v1719 = vadd.f32 0.0, %v1718
        %1720 = vmatmul.f32.gmra.mxu0 %v1609
        %v1721 = vpop.f32.mrf.mxu0
        %v1722 = vadd.f32 0.0, %v1721
        %1723 = vmatmul.f32.gmra.mxu0 %v1612
        %v1724 = vpop.f32.mrf.mxu0
        %v1725 = vadd.f32 0.0, %v1724
        %1726 = vmatmul.f32.gmra.mxu0 %v1615
        %v1727 = vpop.f32.mrf.mxu0
        %v1728 = vadd.f32 0.0, %v1727
        %1729 = vdwg.mxu0
        %v1730 = vadd.f32 %v1454, %v1635
        %v1731 = vadd.f32 %v1455, %v1638
        %v1732 = vadd.f32 %v1456, %v1641
        %v1733 = vadd.f32 %v1457, %v1644
        %v1734 = vadd.f32 %v1458, %v1647
        %v1735 = vadd.f32 %v1459, %v1650
        %v1736 = vadd.f32 %v1460, %v1653
        %v1737 = vadd.f32 %v1461, %v1656
        %v1738 = vadd.f32 %v1462, %v1659
        %v1739 = vadd.f32 %v1463, %v1662
        %v1740 = vadd.f32 %v1464, %v1665
        %v1741 = vadd.f32 %v1465, %v1668
        %v1742 = vadd.f32 %v1466, %v1671
        %v1743 = vadd.f32 %v1467, %v1674
        %v1744 = vadd.f32 %v1468, %v1677
        %v1745 = vadd.f32 %v1469, %v1680
        %v1746 = vadd.f32 %v1470, %v1683
        %v1747 = vadd.f32 %v1471, %v1686
        %v1748 = vadd.f32 %v1472, %v1689
        %v1749 = vadd.f32 %v1473, %v1692
        %v1750 = vadd.f32 %v1474, %v1695
        %v1751 = vadd.f32 %v1475, %v1698
        %v1752 = vadd.f32 %v1476, %v1701
        %v1753 = vadd.f32 %v1477, %v1704
        %v1754 = vadd.f32 %v1478, %v1707
        %v1755 = vadd.f32 %v1479, %v1710
        %v1756 = vadd.f32 %v1480, %v1713
        %v1757 = vadd.f32 %v1481, %v1716
        %v1758 = vadd.f32 %v1482, %v1719
        %v1759 = vadd.f32 %v1483, %v1722
        %v1760 = vadd.f32 %v1484, %v1725
        %v1761 = vadd.f32 %v1485, %v1728
        %v1762 = vld [vmem:[%s1209 + $0x2] sm:$0xff]
        %v1763 = vld [vmem:[%s1209 + $0xa] sm:$0xff]
        %v1764 = vld [vmem:[%s1209 + $0x1a] sm:$0xff]
        %v1765 = vld [vmem:[%s1209 + $0x22] sm:$0xff]
        %v1766 = vld [vmem:[%s1209 + $0x32] sm:$0xff]
        %v1767 = vld [vmem:[%s1209 + $0x3a] sm:$0xff]
        %v1768 = vld [vmem:[%s1209 + $0x4a] sm:$0xff]
        %v1769 = vld [vmem:[%s1209 + $0x52] sm:$0xff]
        %v1770 = vld [vmem:[%s1209 + $0x62] sm:$0xff]
        %v1771 = vld [vmem:[%s1209 + $0x6a] sm:$0xff]
        %v1772 = vld [vmem:[%s1209 + $0x7a] sm:$0xff]
        %v1773 = vld [vmem:[%s1209 + $0x82] sm:$0xff]
        %v1774 = vld [vmem:[%s1209 + $0x92] sm:$0xff]
        %v1775 = vld [vmem:[%s1209 + $0x9a] sm:$0xff]
        %v1776 = vld [vmem:[%s1209 + $0xaa] sm:$0xff]
        %v1777 = vld [vmem:[%s1209 + $0xb2] sm:$0xff]
        %v1778 = vld [vmem:[%s1209 + $0xc2] sm:$0xff]
        %v1779 = vld [vmem:[%s1209 + $0xca] sm:$0xff]
        %v1780 = vld [vmem:[%s1209 + $0xda] sm:$0xff]
        %v1781 = vld [vmem:[%s1209 + $0xe2] sm:$0xff]
        %v1782 = vld [vmem:[%s1209 + $0xf2] sm:$0xff]
        %v1783 = vld [vmem:[%s1209 + $0xfa] sm:$0xff]
        %v1784 = vld [vmem:[%s1209 + $0x10a] sm:$0xff]
        %v1785 = vld [vmem:[%s1209 + $0x112] sm:$0xff]
        %v1786 = vld [vmem:[%s1209 + $0x122] sm:$0xff]
        %v1787 = vld [vmem:[%s1209 + $0x12a] sm:$0xff]
        %v1788 = vld [vmem:[%s1209 + $0x13a] sm:$0xff]
        %v1789 = vld [vmem:[%s1209 + $0x142] sm:$0xff]
        %v1790 = vld [vmem:[%s1209 + $0x152] sm:$0xff]
        %v1791 = vld [vmem:[%s1209 + $0x15a] sm:$0xff]
        %v1792 = vld [vmem:[%s1209 + $0x16a] sm:$0xff]
        %v1793 = vld [vmem:[%s1209 + $0x172] sm:$0xff]
        %s1794 = scalar_lea.vmem %s1, 96
        %v1795 = vld [vmem:[%s1794] sm:$0xff]
        %v1796 = vld [vmem:[%s1794 + $0x8] sm:$0xff]
        %v1798 = vsel %vm238, %v1762, 0
        %v1801 = vsel %vm238, %v1763, 0
        %v1804 = vsel %vm238, %v1764, 0
        %v1807 = vsel %vm238, %v1765, 0
        %v1810 = vsel %vm238, %v1766, 0
        %v1813 = vsel %vm238, %v1767, 0
        %v1816 = vsel %vm238, %v1768, 0
        %v1819 = vsel %vm238, %v1769, 0
        %v1822 = vsel %vm238, %v1770, 0
        %v1825 = vsel %vm238, %v1771, 0
        %v1828 = vsel %vm238, %v1772, 0
        %v1831 = vsel %vm238, %v1773, 0
        %v1834 = vsel %vm238, %v1774, 0
        %v1837 = vsel %vm238, %v1775, 0
        %v1840 = vsel %vm238, %v1776, 0
        %v1843 = vsel %vm238, %v1777, 0
        %v1846 = vsel %vm238, %v1778, 0
        %v1849 = vsel %vm238, %v1779, 0
        %v1852 = vsel %vm238, %v1780, 0
        %v1855 = vsel %vm238, %v1781, 0
        %v1858 = vsel %vm238, %v1782, 0
        %v1861 = vsel %vm238, %v1783, 0
        %v1864 = vsel %vm238, %v1784, 0
        %v1867 = vsel %vm238, %v1785, 0
        %v1870 = vsel %vm238, %v1786, 0
        %v1873 = vsel %vm238, %v1787, 0
        %v1876 = vsel %vm238, %v1788, 0
        %v1879 = vsel %vm238, %v1789, 0
        %v1882 = vsel %vm238, %v1790, 0
        %v1885 = vsel %vm238, %v1791, 0
        %v1888 = vsel %vm238, %v1792, 0
        %v1891 = vsel %vm238, %v1793, 0
        %1893 = vmatpush.msra.mxu0 0.0
        %1894 = vmatpush.msra.mxu0 0.0
        %1895 = vmatpush.msra.mxu0 0.0
        %1896 = vmatpush.msra.mxu0 0.0
        %1897 = vmatpush.msra.mxu0 0.0
        %1898 = vmatpush.msra.mxu0 0.0
        %1899 = vmatpush.msra.mxu0 0.0
        %1900 = vmatpush.msra.mxu0 0.0
        %1901 = vmatpush.msra.mxu0 0.0
        %1902 = vmatpush.msra.mxu0 0.0
        %1903 = vmatpush.msra.mxu0 0.0
        %1904 = vmatpush.msra.mxu0 0.0
        %1905 = vmatpush.msra.mxu0 0.0
        %1906 = vmatpush.msra.mxu0 0.0
        %1907 = vmatpush.msra.mxu0 %v1796
        %1908 = vmatpush.msra.mxu0 %v1795
        %1909 = vmatmul.f32.gmra.mxu0 %v1798
        %v1910 = vpop.f32.mrf.mxu0
        %v1911 = vadd.f32 0.0, %v1910
        %1912 = vmatmul.f32.gmra.mxu0 %v1801
        %v1913 = vpop.f32.mrf.mxu0
        %v1914 = vadd.f32 0.0, %v1913
        %1915 = vmatmul.f32.gmra.mxu0 %v1804
        %v1916 = vpop.f32.mrf.mxu0
        %v1917 = vadd.f32 0.0, %v1916
        %1918 = vmatmul.f32.gmra.mxu0 %v1807
        %v1919 = vpop.f32.mrf.mxu0
        %v1920 = vadd.f32 0.0, %v1919
        %1921 = vmatmul.f32.gmra.mxu0 %v1810
        %v1922 = vpop.f32.mrf.mxu0
        %v1923 = vadd.f32 0.0, %v1922
        %1924 = vmatmul.f32.gmra.mxu0 %v1813
        %v1925 = vpop.f32.mrf.mxu0
        %v1926 = vadd.f32 0.0, %v1925
        %1927 = vmatmul.f32.gmra.mxu0 %v1816
        %v1928 = vpop.f32.mrf.mxu0
        %v1929 = vadd.f32 0.0, %v1928
        %1930 = vmatmul.f32.gmra.mxu0 %v1819
        %v1931 = vpop.f32.mrf.mxu0
        %v1932 = vadd.f32 0.0, %v1931
        %1933 = vmatmul.f32.gmra.mxu0 %v1822
        %v1934 = vpop.f32.mrf.mxu0
        %v1935 = vadd.f32 0.0, %v1934
        %1936 = vmatmul.f32.gmra.mxu0 %v1825
        %v1937 = vpop.f32.mrf.mxu0
        %v1938 = vadd.f32 0.0, %v1937
        %1939 = vmatmul.f32.gmra.mxu0 %v1828
        %v1940 = vpop.f32.mrf.mxu0
        %v1941 = vadd.f32 0.0, %v1940
        %1942 = vmatmul.f32.gmra.mxu0 %v1831
        %v1943 = vpop.f32.mrf.mxu0
        %v1944 = vadd.f32 0.0, %v1943
        %1945 = vmatmul.f32.gmra.mxu0 %v1834
        %v1946 = vpop.f32.mrf.mxu0
        %v1947 = vadd.f32 0.0, %v1946
        %1948 = vmatmul.f32.gmra.mxu0 %v1837
        %v1949 = vpop.f32.mrf.mxu0
        %v1950 = vadd.f32 0.0, %v1949
        %1951 = vmatmul.f32.gmra.mxu0 %v1840
        %v1952 = vpop.f32.mrf.mxu0
        %v1953 = vadd.f32 0.0, %v1952
        %1954 = vmatmul.f32.gmra.mxu0 %v1843
        %v1955 = vpop.f32.mrf.mxu0
        %v1956 = vadd.f32 0.0, %v1955
        %1957 = vmatmul.f32.gmra.mxu0 %v1846
        %v1958 = vpop.f32.mrf.mxu0
        %v1959 = vadd.f32 0.0, %v1958
        %1960 = vmatmul.f32.gmra.mxu0 %v1849
        %v1961 = vpop.f32.mrf.mxu0
        %v1962 = vadd.f32 0.0, %v1961
        %1963 = vmatmul.f32.gmra.mxu0 %v1852
        %v1964 = vpop.f32.mrf.mxu0
        %v1965 = vadd.f32 0.0, %v1964
        %1966 = vmatmul.f32.gmra.mxu0 %v1855
        %v1967 = vpop.f32.mrf.mxu0
        %v1968 = vadd.f32 0.0, %v1967
        %1969 = vmatmul.f32.gmra.mxu0 %v1858
        %v1970 = vpop.f32.mrf.mxu0
        %v1971 = vadd.f32 0.0, %v1970
        %1972 = vmatmul.f32.gmra.mxu0 %v1861
        %v1973 = vpop.f32.mrf.mxu0
        %v1974 = vadd.f32 0.0, %v1973
        %1975 = vmatmul.f32.gmra.mxu0 %v1864
        %v1976 = vpop.f32.mrf.mxu0
        %v1977 = vadd.f32 0.0, %v1976
        %1978 = vmatmul.f32.gmra.mxu0 %v1867
        %v1979 = vpop.f32.mrf.mxu0
        %v1980 = vadd.f32 0.0, %v1979
        %1981 = vmatmul.f32.gmra.mxu0 %v1870
        %v1982 = vpop.f32.mrf.mxu0
        %v1983 = vadd.f32 0.0, %v1982
        %1984 = vmatmul.f32.gmra.mxu0 %v1873
        %v1985 = vpop.f32.mrf.mxu0
        %v1986 = vadd.f32 0.0, %v1985
        %1987 = vmatmul.f32.gmra.mxu0 %v1876
        %v1988 = vpop.f32.mrf.mxu0
        %v1989 = vadd.f32 0.0, %v1988
        %1990 = vmatmul.f32.gmra.mxu0 %v1879
        %v1991 = vpop.f32.mrf.mxu0
        %v1992 = vadd.f32 0.0, %v1991
        %1993 = vmatmul.f32.gmra.mxu0 %v1882
        %v1994 = vpop.f32.mrf.mxu0
        %v1995 = vadd.f32 0.0, %v1994
        %1996 = vmatmul.f32.gmra.mxu0 %v1885
        %v1997 = vpop.f32.mrf.mxu0
        %v1998 = vadd.f32 0.0, %v1997
        %1999 = vmatmul.f32.gmra.mxu0 %v1888
        %v2000 = vpop.f32.mrf.mxu0
        %v2001 = vadd.f32 0.0, %v2000
        %2002 = vmatmul.f32.gmra.mxu0 %v1891
        %v2003 = vpop.f32.mrf.mxu0
        %v2004 = vadd.f32 0.0, %v2003
        %2005 = vdwg.mxu0
        %v2006 = vadd.f32 %v1730, %v1911
        %v2007 = vadd.f32 %v1731, %v1914
        %v2008 = vadd.f32 %v1732, %v1917
        %v2009 = vadd.f32 %v1733, %v1920
        %v2010 = vadd.f32 %v1734, %v1923
        %v2011 = vadd.f32 %v1735, %v1926
        %v2012 = vadd.f32 %v1736, %v1929
        %v2013 = vadd.f32 %v1737, %v1932
        %v2014 = vadd.f32 %v1738, %v1935
        %v2015 = vadd.f32 %v1739, %v1938
        %v2016 = vadd.f32 %v1740, %v1941
        %v2017 = vadd.f32 %v1741, %v1944
        %v2018 = vadd.f32 %v1742, %v1947
        %v2019 = vadd.f32 %v1743, %v1950
        %v2020 = vadd.f32 %v1744, %v1953
        %v2021 = vadd.f32 %v1745, %v1956
        %v2022 = vadd.f32 %v1746, %v1959
        %v2023 = vadd.f32 %v1747, %v1962
        %v2024 = vadd.f32 %v1748, %v1965
        %v2025 = vadd.f32 %v1749, %v1968
        %v2026 = vadd.f32 %v1750, %v1971
        %v2027 = vadd.f32 %v1751, %v1974
        %v2028 = vadd.f32 %v1752, %v1977
        %v2029 = vadd.f32 %v1753, %v1980
        %v2030 = vadd.f32 %v1754, %v1983
        %v2031 = vadd.f32 %v1755, %v1986
        %v2032 = vadd.f32 %v1756, %v1989
        %v2033 = vadd.f32 %v1757, %v1992
        %v2034 = vadd.f32 %v1758, %v1995
        %v2035 = vadd.f32 %v1759, %v1998
        %v2036 = vadd.f32 %v1760, %v2001
        %v2037 = vadd.f32 %v1761, %v2004
        %v2038 = vld [vmem:[%s1209 + $0x3] sm:$0xff]
        %v2039 = vld [vmem:[%s1209 + $0xb] sm:$0xff]
        %v2040 = vld [vmem:[%s1209 + $0x1b] sm:$0xff]
        %v2041 = vld [vmem:[%s1209 + $0x23] sm:$0xff]
        %v2042 = vld [vmem:[%s1209 + $0x33] sm:$0xff]
        %v2043 = vld [vmem:[%s1209 + $0x3b] sm:$0xff]
        %v2044 = vld [vmem:[%s1209 + $0x4b] sm:$0xff]
        %v2045 = vld [vmem:[%s1209 + $0x53] sm:$0xff]
        %v2046 = vld [vmem:[%s1209 + $0x63] sm:$0xff]
        %v2047 = vld [vmem:[%s1209 + $0x6b] sm:$0xff]
        %v2048 = vld [vmem:[%s1209 + $0x7b] sm:$0xff]
        %v2049 = vld [vmem:[%s1209 + $0x83] sm:$0xff]
        %v2050 = vld [vmem:[%s1209 + $0x93] sm:$0xff]
        %v2051 = vld [vmem:[%s1209 + $0x9b] sm:$0xff]
        %v2052 = vld [vmem:[%s1209 + $0xab] sm:$0xff]
        %v2053 = vld [vmem:[%s1209 + $0xb3] sm:$0xff]
        %v2054 = vld [vmem:[%s1209 + $0xc3] sm:$0xff]
        %v2055 = vld [vmem:[%s1209 + $0xcb] sm:$0xff]
        %v2056 = vld [vmem:[%s1209 + $0xdb] sm:$0xff]
        %v2057 = vld [vmem:[%s1209 + $0xe3] sm:$0xff]
        %v2058 = vld [vmem:[%s1209 + $0xf3] sm:$0xff]
        %v2059 = vld [vmem:[%s1209 + $0xfb] sm:$0xff]
        %v2060 = vld [vmem:[%s1209 + $0x10b] sm:$0xff]
        %v2061 = vld [vmem:[%s1209 + $0x113] sm:$0xff]
        %v2062 = vld [vmem:[%s1209 + $0x123] sm:$0xff]
        %v2063 = vld [vmem:[%s1209 + $0x12b] sm:$0xff]
        %v2064 = vld [vmem:[%s1209 + $0x13b] sm:$0xff]
        %v2065 = vld [vmem:[%s1209 + $0x143] sm:$0xff]
        %v2066 = vld [vmem:[%s1209 + $0x153] sm:$0xff]
        %v2067 = vld [vmem:[%s1209 + $0x15b] sm:$0xff]
        %v2068 = vld [vmem:[%s1209 + $0x16b] sm:$0xff]
        %v2069 = vld [vmem:[%s1209 + $0x173] sm:$0xff]
        %s2070 = scalar_lea.vmem %s1, 112
        %v2071 = vld [vmem:[%s2070] sm:$0xff]
        %v2072 = vld [vmem:[%s2070 + $0x8] sm:$0xff]
        %v2074 = vsel %vm238, %v2038, 0
        %v2077 = vsel %vm238, %v2039, 0
        %v2080 = vsel %vm238, %v2040, 0
        %v2083 = vsel %vm238, %v2041, 0
        %v2086 = vsel %vm238, %v2042, 0
        %v2089 = vsel %vm238, %v2043, 0
        %v2092 = vsel %vm238, %v2044, 0
        %v2095 = vsel %vm238, %v2045, 0
        %v2098 = vsel %vm238, %v2046, 0
        %v2101 = vsel %vm238, %v2047, 0
        %v2104 = vsel %vm238, %v2048, 0
        %v2107 = vsel %vm238, %v2049, 0
        %v2110 = vsel %vm238, %v2050, 0
        %v2113 = vsel %vm238, %v2051, 0
        %v2116 = vsel %vm238, %v2052, 0
        %v2119 = vsel %vm238, %v2053, 0
        %v2122 = vsel %vm238, %v2054, 0
        %v2125 = vsel %vm238, %v2055, 0
        %v2128 = vsel %vm238, %v2056, 0
        %v2131 = vsel %vm238, %v2057, 0
        %v2134 = vsel %vm238, %v2058, 0
        %v2137 = vsel %vm238, %v2059, 0
        %v2140 = vsel %vm238, %v2060, 0
        %v2143 = vsel %vm238, %v2061, 0
        %v2146 = vsel %vm238, %v2062, 0
        %v2149 = vsel %vm238, %v2063, 0
        %v2152 = vsel %vm238, %v2064, 0
        %v2155 = vsel %vm238, %v2065, 0
        %v2158 = vsel %vm238, %v2066, 0
        %v2161 = vsel %vm238, %v2067, 0
        %v2164 = vsel %vm238, %v2068, 0
        %v2167 = vsel %vm238, %v2069, 0
        %2169 = vmatpush.msra.mxu0 0.0
        %2170 = vmatpush.msra.mxu0 0.0
        %2171 = vmatpush.msra.mxu0 0.0
        %2172 = vmatpush.msra.mxu0 0.0
        %2173 = vmatpush.msra.mxu0 0.0
        %2174 = vmatpush.msra.mxu0 0.0
        %2175 = vmatpush.msra.mxu0 0.0
        %2176 = vmatpush.msra.mxu0 0.0
        %2177 = vmatpush.msra.mxu0 0.0
        %2178 = vmatpush.msra.mxu0 0.0
        %2179 = vmatpush.msra.mxu0 0.0
        %2180 = vmatpush.msra.mxu0 0.0
        %2181 = vmatpush.msra.mxu0 0.0
        %2182 = vmatpush.msra.mxu0 0.0
        %2183 = vmatpush.msra.mxu0 %v2072
        %2184 = vmatpush.msra.mxu0 %v2071
        %2185 = vmatmul.f32.gmra.mxu0 %v2074
        %v2186 = vpop.f32.mrf.mxu0
        %v2187 = vadd.f32 0.0, %v2186
        %2188 = vmatmul.f32.gmra.mxu0 %v2077
        %v2189 = vpop.f32.mrf.mxu0
        %v2190 = vadd.f32 0.0, %v2189
        %2191 = vmatmul.f32.gmra.mxu0 %v2080
        %v2192 = vpop.f32.mrf.mxu0
        %v2193 = vadd.f32 0.0, %v2192
        %2194 = vmatmul.f32.gmra.mxu0 %v2083
        %v2195 = vpop.f32.mrf.mxu0
        %v2196 = vadd.f32 0.0, %v2195
        %2197 = vmatmul.f32.gmra.mxu0 %v2086
        %v2198 = vpop.f32.mrf.mxu0
        %v2199 = vadd.f32 0.0, %v2198
        %2200 = vmatmul.f32.gmra.mxu0 %v2089
        %v2201 = vpop.f32.mrf.mxu0
        %v2202 = vadd.f32 0.0, %v2201
        %2203 = vmatmul.f32.gmra.mxu0 %v2092
        %v2204 = vpop.f32.mrf.mxu0
        %v2205 = vadd.f32 0.0, %v2204
        %2206 = vmatmul.f32.gmra.mxu0 %v2095
        %v2207 = vpop.f32.mrf.mxu0
        %v2208 = vadd.f32 0.0, %v2207
        %2209 = vmatmul.f32.gmra.mxu0 %v2098
        %v2210 = vpop.f32.mrf.mxu0
        %v2211 = vadd.f32 0.0, %v2210
        %2212 = vmatmul.f32.gmra.mxu0 %v2101
        %v2213 = vpop.f32.mrf.mxu0
        %v2214 = vadd.f32 0.0, %v2213
        %2215 = vmatmul.f32.gmra.mxu0 %v2104
        %v2216 = vpop.f32.mrf.mxu0
        %v2217 = vadd.f32 0.0, %v2216
        %2218 = vmatmul.f32.gmra.mxu0 %v2107
        %v2219 = vpop.f32.mrf.mxu0
        %v2220 = vadd.f32 0.0, %v2219
        %2221 = vmatmul.f32.gmra.mxu0 %v2110
        %v2222 = vpop.f32.mrf.mxu0
        %v2223 = vadd.f32 0.0, %v2222
        %2224 = vmatmul.f32.gmra.mxu0 %v2113
        %v2225 = vpop.f32.mrf.mxu0
        %v2226 = vadd.f32 0.0, %v2225
        %2227 = vmatmul.f32.gmra.mxu0 %v2116
        %v2228 = vpop.f32.mrf.mxu0
        %v2229 = vadd.f32 0.0, %v2228
        %2230 = vmatmul.f32.gmra.mxu0 %v2119
        %v2231 = vpop.f32.mrf.mxu0
        %v2232 = vadd.f32 0.0, %v2231
        %2233 = vmatmul.f32.gmra.mxu0 %v2122
        %v2234 = vpop.f32.mrf.mxu0
        %v2235 = vadd.f32 0.0, %v2234
        %2236 = vmatmul.f32.gmra.mxu0 %v2125
        %v2237 = vpop.f32.mrf.mxu0
        %v2238 = vadd.f32 0.0, %v2237
        %2239 = vmatmul.f32.gmra.mxu0 %v2128
        %v2240 = vpop.f32.mrf.mxu0
        %v2241 = vadd.f32 0.0, %v2240
        %2242 = vmatmul.f32.gmra.mxu0 %v2131
        %v2243 = vpop.f32.mrf.mxu0
        %v2244 = vadd.f32 0.0, %v2243
        %2245 = vmatmul.f32.gmra.mxu0 %v2134
        %v2246 = vpop.f32.mrf.mxu0
        %v2247 = vadd.f32 0.0, %v2246
        %2248 = vmatmul.f32.gmra.mxu0 %v2137
        %v2249 = vpop.f32.mrf.mxu0
        %v2250 = vadd.f32 0.0, %v2249
        %2251 = vmatmul.f32.gmra.mxu0 %v2140
        %v2252 = vpop.f32.mrf.mxu0
        %v2253 = vadd.f32 0.0, %v2252
        %2254 = vmatmul.f32.gmra.mxu0 %v2143
        %v2255 = vpop.f32.mrf.mxu0
        %v2256 = vadd.f32 0.0, %v2255
        %2257 = vmatmul.f32.gmra.mxu0 %v2146
        %v2258 = vpop.f32.mrf.mxu0
        %v2259 = vadd.f32 0.0, %v2258
        %2260 = vmatmul.f32.gmra.mxu0 %v2149
        %v2261 = vpop.f32.mrf.mxu0
        %v2262 = vadd.f32 0.0, %v2261
        %2263 = vmatmul.f32.gmra.mxu0 %v2152
        %v2264 = vpop.f32.mrf.mxu0
        %v2265 = vadd.f32 0.0, %v2264
        %2266 = vmatmul.f32.gmra.mxu0 %v2155
        %v2267 = vpop.f32.mrf.mxu0
        %v2268 = vadd.f32 0.0, %v2267
        %2269 = vmatmul.f32.gmra.mxu0 %v2158
        %v2270 = vpop.f32.mrf.mxu0
        %v2271 = vadd.f32 0.0, %v2270
        %2272 = vmatmul.f32.gmra.mxu0 %v2161
        %v2273 = vpop.f32.mrf.mxu0
        %v2274 = vadd.f32 0.0, %v2273
        %2275 = vmatmul.f32.gmra.mxu0 %v2164
        %v2276 = vpop.f32.mrf.mxu0
        %v2277 = vadd.f32 0.0, %v2276
        %2278 = vmatmul.f32.gmra.mxu0 %v2167
        %v2279 = vpop.f32.mrf.mxu0
        %v2280 = vadd.f32 0.0, %v2279
        %2281 = vdwg.mxu0
        %v2282 = vadd.f32 %v2006, %v2187
        %v2283 = vadd.f32 %v2007, %v2190
        %v2284 = vadd.f32 %v2008, %v2193
        %v2285 = vadd.f32 %v2009, %v2196
        %v2286 = vadd.f32 %v2010, %v2199
        %v2287 = vadd.f32 %v2011, %v2202
        %v2288 = vadd.f32 %v2012, %v2205
        %v2289 = vadd.f32 %v2013, %v2208
        %v2290 = vadd.f32 %v2014, %v2211
        %v2291 = vadd.f32 %v2015, %v2214
        %v2292 = vadd.f32 %v2016, %v2217
        %v2293 = vadd.f32 %v2017, %v2220
        %v2294 = vadd.f32 %v2018, %v2223
        %v2295 = vadd.f32 %v2019, %v2226
        %v2296 = vadd.f32 %v2020, %v2229
        %v2297 = vadd.f32 %v2021, %v2232
        %v2298 = vadd.f32 %v2022, %v2235
        %v2299 = vadd.f32 %v2023, %v2238
        %v2300 = vadd.f32 %v2024, %v2241
        %v2301 = vadd.f32 %v2025, %v2244
        %v2302 = vadd.f32 %v2026, %v2247
        %v2303 = vadd.f32 %v2027, %v2250
        %v2304 = vadd.f32 %v2028, %v2253
        %v2305 = vadd.f32 %v2029, %v2256
        %v2306 = vadd.f32 %v2030, %v2259
        %v2307 = vadd.f32 %v2031, %v2262
        %v2308 = vadd.f32 %v2032, %v2265
        %v2309 = vadd.f32 %v2033, %v2268
        %v2310 = vadd.f32 %v2034, %v2271
        %v2311 = vadd.f32 %v2035, %v2274
        %v2312 = vadd.f32 %v2036, %v2277
        %v2313 = vadd.f32 %v2037, %v2280
        %s2314 = scalar_lea.vmem %s168, 48
        %v2315 = vld [vmem:[%s2314] sm:$0xff]
        %v2316 = vld [vmem:[%s2314 + $0x8] sm:$0xff]
        %v2317 = vld [vmem:[%s2314 + $0x18] sm:$0xff]
        %v2318 = vld [vmem:[%s2314 + $0x20] sm:$0xff]
        %v2319 = vld [vmem:[%s2314 + $0x30] sm:$0xff]
        %v2320 = vld [vmem:[%s2314 + $0x38] sm:$0xff]
        %v2321 = vld [vmem:[%s2314 + $0x48] sm:$0xff]
        %v2322 = vld [vmem:[%s2314 + $0x50] sm:$0xff]
        %v2323 = vld [vmem:[%s2314 + $0x60] sm:$0xff]
        %v2324 = vld [vmem:[%s2314 + $0x68] sm:$0xff]
        %v2325 = vld [vmem:[%s2314 + $0x78] sm:$0xff]
        %v2326 = vld [vmem:[%s2314 + $0x80] sm:$0xff]
        %v2327 = vld [vmem:[%s2314 + $0x90] sm:$0xff]
        %v2328 = vld [vmem:[%s2314 + $0x98] sm:$0xff]
        %v2329 = vld [vmem:[%s2314 + $0xa8] sm:$0xff]
        %v2330 = vld [vmem:[%s2314 + $0xb0] sm:$0xff]
        %v2331 = vld [vmem:[%s2314 + $0xc0] sm:$0xff]
        %v2332 = vld [vmem:[%s2314 + $0xc8] sm:$0xff]
        %v2333 = vld [vmem:[%s2314 + $0xd8] sm:$0xff]
        %v2334 = vld [vmem:[%s2314 + $0xe0] sm:$0xff]
        %v2335 = vld [vmem:[%s2314 + $0xf0] sm:$0xff]
        %v2336 = vld [vmem:[%s2314 + $0xf8] sm:$0xff]
        %v2337 = vld [vmem:[%s2314 + $0x108] sm:$0xff]
        %v2338 = vld [vmem:[%s2314 + $0x110] sm:$0xff]
        %v2339 = vld [vmem:[%s2314 + $0x120] sm:$0xff]
        %v2340 = vld [vmem:[%s2314 + $0x128] sm:$0xff]
        %v2341 = vld [vmem:[%s2314 + $0x138] sm:$0xff]
        %v2342 = vld [vmem:[%s2314 + $0x140] sm:$0xff]
        %v2343 = vld [vmem:[%s2314 + $0x150] sm:$0xff]
        %v2344 = vld [vmem:[%s2314 + $0x158] sm:$0xff]
        %v2345 = vld [vmem:[%s2314 + $0x168] sm:$0xff]
        %v2346 = vld [vmem:[%s2314 + $0x170] sm:$0xff]
        %s2347 = scalar_lea.vmem %s1, 128
        %v2348 = vld [vmem:[%s2347] sm:$0xff]
        %v2349 = vld [vmem:[%s2347 + $0x8] sm:$0xff]
        %v2351 = vsel %vm238, %v2315, 0
        %v2354 = vsel %vm238, %v2316, 0
        %v2357 = vsel %vm238, %v2317, 0
        %v2360 = vsel %vm238, %v2318, 0
        %v2363 = vsel %vm238, %v2319, 0
        %v2366 = vsel %vm238, %v2320, 0
        %v2369 = vsel %vm238, %v2321, 0
        %v2372 = vsel %vm238, %v2322, 0
        %v2375 = vsel %vm238, %v2323, 0
        %v2378 = vsel %vm238, %v2324, 0
        %v2381 = vsel %vm238, %v2325, 0
        %v2384 = vsel %vm238, %v2326, 0
        %v2387 = vsel %vm238, %v2327, 0
        %v2390 = vsel %vm238, %v2328, 0
        %v2393 = vsel %vm238, %v2329, 0
        %v2396 = vsel %vm238, %v2330, 0
        %v2399 = vsel %vm238, %v2331, 0
        %v2402 = vsel %vm238, %v2332, 0
        %v2405 = vsel %vm238, %v2333, 0
        %v2408 = vsel %vm238, %v2334, 0
        %v2411 = vsel %vm238, %v2335, 0
        %v2414 = vsel %vm238, %v2336, 0
        %v2417 = vsel %vm238, %v2337, 0
        %v2420 = vsel %vm238, %v2338, 0
        %v2423 = vsel %vm238, %v2339, 0
        %v2426 = vsel %vm238, %v2340, 0
        %v2429 = vsel %vm238, %v2341, 0
        %v2432 = vsel %vm238, %v2342, 0
        %v2435 = vsel %vm238, %v2343, 0
        %v2438 = vsel %vm238, %v2344, 0
        %v2441 = vsel %vm238, %v2345, 0
        %v2444 = vsel %vm238, %v2346, 0
        %2446 = vmatpush.msra.mxu0 0.0
        %2447 = vmatpush.msra.mxu0 0.0
        %2448 = vmatpush.msra.mxu0 0.0
        %2449 = vmatpush.msra.mxu0 0.0
        %2450 = vmatpush.msra.mxu0 0.0
        %2451 = vmatpush.msra.mxu0 0.0
        %2452 = vmatpush.msra.mxu0 0.0
        %2453 = vmatpush.msra.mxu0 0.0
        %2454 = vmatpush.msra.mxu0 0.0
        %2455 = vmatpush.msra.mxu0 0.0
        %2456 = vmatpush.msra.mxu0 0.0
        %2457 = vmatpush.msra.mxu0 0.0
        %2458 = vmatpush.msra.mxu0 0.0
        %2459 = vmatpush.msra.mxu0 0.0
        %2460 = vmatpush.msra.mxu0 %v2349
        %2461 = vmatpush.msra.mxu0 %v2348
        %2462 = vmatmul.f32.gmra.mxu0 %v2351
        %v2463 = vpop.f32.mrf.mxu0
        %v2464 = vadd.f32 0.0, %v2463
        %2465 = vmatmul.f32.gmra.mxu0 %v2354
        %v2466 = vpop.f32.mrf.mxu0
        %v2467 = vadd.f32 0.0, %v2466
        %2468 = vmatmul.f32.gmra.mxu0 %v2357
        %v2469 = vpop.f32.mrf.mxu0
        %v2470 = vadd.f32 0.0, %v2469
        %2471 = vmatmul.f32.gmra.mxu0 %v2360
        %v2472 = vpop.f32.mrf.mxu0
        %v2473 = vadd.f32 0.0, %v2472
        %2474 = vmatmul.f32.gmra.mxu0 %v2363
        %v2475 = vpop.f32.mrf.mxu0
        %v2476 = vadd.f32 0.0, %v2475
        %2477 = vmatmul.f32.gmra.mxu0 %v2366
        %v2478 = vpop.f32.mrf.mxu0
        %v2479 = vadd.f32 0.0, %v2478
        %2480 = vmatmul.f32.gmra.mxu0 %v2369
        %v2481 = vpop.f32.mrf.mxu0
        %v2482 = vadd.f32 0.0, %v2481
        %2483 = vmatmul.f32.gmra.mxu0 %v2372
        %v2484 = vpop.f32.mrf.mxu0
        %v2485 = vadd.f32 0.0, %v2484
        %2486 = vmatmul.f32.gmra.mxu0 %v2375
        %v2487 = vpop.f32.mrf.mxu0
        %v2488 = vadd.f32 0.0, %v2487
        %2489 = vmatmul.f32.gmra.mxu0 %v2378
        %v2490 = vpop.f32.mrf.mxu0
        %v2491 = vadd.f32 0.0, %v2490
        %2492 = vmatmul.f32.gmra.mxu0 %v2381
        %v2493 = vpop.f32.mrf.mxu0
        %v2494 = vadd.f32 0.0, %v2493
        %2495 = vmatmul.f32.gmra.mxu0 %v2384
        %v2496 = vpop.f32.mrf.mxu0
        %v2497 = vadd.f32 0.0, %v2496
        %2498 = vmatmul.f32.gmra.mxu0 %v2387
        %v2499 = vpop.f32.mrf.mxu0
        %v2500 = vadd.f32 0.0, %v2499
        %2501 = vmatmul.f32.gmra.mxu0 %v2390
        %v2502 = vpop.f32.mrf.mxu0
        %v2503 = vadd.f32 0.0, %v2502
        %2504 = vmatmul.f32.gmra.mxu0 %v2393
        %v2505 = vpop.f32.mrf.mxu0
        %v2506 = vadd.f32 0.0, %v2505
        %2507 = vmatmul.f32.gmra.mxu0 %v2396
        %v2508 = vpop.f32.mrf.mxu0
        %v2509 = vadd.f32 0.0, %v2508
        %2510 = vmatmul.f32.gmra.mxu0 %v2399
        %v2511 = vpop.f32.mrf.mxu0
        %v2512 = vadd.f32 0.0, %v2511
        %2513 = vmatmul.f32.gmra.mxu0 %v2402
        %v2514 = vpop.f32.mrf.mxu0
        %v2515 = vadd.f32 0.0, %v2514
        %2516 = vmatmul.f32.gmra.mxu0 %v2405
        %v2517 = vpop.f32.mrf.mxu0
        %v2518 = vadd.f32 0.0, %v2517
        %2519 = vmatmul.f32.gmra.mxu0 %v2408
        %v2520 = vpop.f32.mrf.mxu0
        %v2521 = vadd.f32 0.0, %v2520
        %2522 = vmatmul.f32.gmra.mxu0 %v2411
        %v2523 = vpop.f32.mrf.mxu0
        %v2524 = vadd.f32 0.0, %v2523
        %2525 = vmatmul.f32.gmra.mxu0 %v2414
        %v2526 = vpop.f32.mrf.mxu0
        %v2527 = vadd.f32 0.0, %v2526
        %2528 = vmatmul.f32.gmra.mxu0 %v2417
        %v2529 = vpop.f32.mrf.mxu0
        %v2530 = vadd.f32 0.0, %v2529
        %2531 = vmatmul.f32.gmra.mxu0 %v2420
        %v2532 = vpop.f32.mrf.mxu0
        %v2533 = vadd.f32 0.0, %v2532
        %2534 = vmatmul.f32.gmra.mxu0 %v2423
        %v2535 = vpop.f32.mrf.mxu0
        %v2536 = vadd.f32 0.0, %v2535
        %2537 = vmatmul.f32.gmra.mxu0 %v2426
        %v2538 = vpop.f32.mrf.mxu0
        %v2539 = vadd.f32 0.0, %v2538
        %2540 = vmatmul.f32.gmra.mxu0 %v2429
        %v2541 = vpop.f32.mrf.mxu0
        %v2542 = vadd.f32 0.0, %v2541
        %2543 = vmatmul.f32.gmra.mxu0 %v2432
        %v2544 = vpop.f32.mrf.mxu0
        %v2545 = vadd.f32 0.0, %v2544
        %2546 = vmatmul.f32.gmra.mxu0 %v2435
        %v2547 = vpop.f32.mrf.mxu0
        %v2548 = vadd.f32 0.0, %v2547
        %2549 = vmatmul.f32.gmra.mxu0 %v2438
        %v2550 = vpop.f32.mrf.mxu0
        %v2551 = vadd.f32 0.0, %v2550
        %2552 = vmatmul.f32.gmra.mxu0 %v2441
        %v2553 = vpop.f32.mrf.mxu0
        %v2554 = vadd.f32 0.0, %v2553
        %2555 = vmatmul.f32.gmra.mxu0 %v2444
        %v2556 = vpop.f32.mrf.mxu0
        %v2557 = vadd.f32 0.0, %v2556
        %2558 = vdwg.mxu0
        %v2559 = vadd.f32 %v2282, %v2464
        %v2560 = vadd.f32 %v2283, %v2467
        %v2561 = vadd.f32 %v2284, %v2470
        %v2562 = vadd.f32 %v2285, %v2473
        %v2563 = vadd.f32 %v2286, %v2476
        %v2564 = vadd.f32 %v2287, %v2479
        %v2565 = vadd.f32 %v2288, %v2482
        %v2566 = vadd.f32 %v2289, %v2485
        %v2567 = vadd.f32 %v2290, %v2488
        %v2568 = vadd.f32 %v2291, %v2491
        %v2569 = vadd.f32 %v2292, %v2494
        %v2570 = vadd.f32 %v2293, %v2497
        %v2571 = vadd.f32 %v2294, %v2500
        %v2572 = vadd.f32 %v2295, %v2503
        %v2573 = vadd.f32 %v2296, %v2506
        %v2574 = vadd.f32 %v2297, %v2509
        %v2575 = vadd.f32 %v2298, %v2512
        %v2576 = vadd.f32 %v2299, %v2515
        %v2577 = vadd.f32 %v2300, %v2518
        %v2578 = vadd.f32 %v2301, %v2521
        %v2579 = vadd.f32 %v2302, %v2524
        %v2580 = vadd.f32 %v2303, %v2527
        %v2581 = vadd.f32 %v2304, %v2530
        %v2582 = vadd.f32 %v2305, %v2533
        %v2583 = vadd.f32 %v2306, %v2536
        %v2584 = vadd.f32 %v2307, %v2539
        %v2585 = vadd.f32 %v2308, %v2542
        %v2586 = vadd.f32 %v2309, %v2545
        %v2587 = vadd.f32 %v2310, %v2548
        %v2588 = vadd.f32 %v2311, %v2551
        %v2589 = vadd.f32 %v2312, %v2554
        %v2590 = vadd.f32 %v2313, %v2557
        %v2591 = vld [vmem:[%s2314 + $0x1] sm:$0xff]
        %v2592 = vld [vmem:[%s2314 + $0x9] sm:$0xff]
        %v2593 = vld [vmem:[%s2314 + $0x19] sm:$0xff]
        %v2594 = vld [vmem:[%s2314 + $0x21] sm:$0xff]
        %v2595 = vld [vmem:[%s2314 + $0x31] sm:$0xff]
        %v2596 = vld [vmem:[%s2314 + $0x39] sm:$0xff]
        %v2597 = vld [vmem:[%s2314 + $0x49] sm:$0xff]
        %v2598 = vld [vmem:[%s2314 + $0x51] sm:$0xff]
        %v2599 = vld [vmem:[%s2314 + $0x61] sm:$0xff]
        %v2600 = vld [vmem:[%s2314 + $0x69] sm:$0xff]
        %v2601 = vld [vmem:[%s2314 + $0x79] sm:$0xff]
        %v2602 = vld [vmem:[%s2314 + $0x81] sm:$0xff]
        %v2603 = vld [vmem:[%s2314 + $0x91] sm:$0xff]
        %v2604 = vld [vmem:[%s2314 + $0x99] sm:$0xff]
        %v2605 = vld [vmem:[%s2314 + $0xa9] sm:$0xff]
        %v2606 = vld [vmem:[%s2314 + $0xb1] sm:$0xff]
        %v2607 = vld [vmem:[%s2314 + $0xc1] sm:$0xff]
        %v2608 = vld [vmem:[%s2314 + $0xc9] sm:$0xff]
        %v2609 = vld [vmem:[%s2314 + $0xd9] sm:$0xff]
        %v2610 = vld [vmem:[%s2314 + $0xe1] sm:$0xff]
        %v2611 = vld [vmem:[%s2314 + $0xf1] sm:$0xff]
        %v2612 = vld [vmem:[%s2314 + $0xf9] sm:$0xff]
        %v2613 = vld [vmem:[%s2314 + $0x109] sm:$0xff]
        %v2614 = vld [vmem:[%s2314 + $0x111] sm:$0xff]
        %v2615 = vld [vmem:[%s2314 + $0x121] sm:$0xff]
        %v2616 = vld [vmem:[%s2314 + $0x129] sm:$0xff]
        %v2617 = vld [vmem:[%s2314 + $0x139] sm:$0xff]
        %v2618 = vld [vmem:[%s2314 + $0x141] sm:$0xff]
        %v2619 = vld [vmem:[%s2314 + $0x151] sm:$0xff]
        %v2620 = vld [vmem:[%s2314 + $0x159] sm:$0xff]
        %v2621 = vld [vmem:[%s2314 + $0x169] sm:$0xff]
        %v2622 = vld [vmem:[%s2314 + $0x171] sm:$0xff]
        %s2623 = scalar_lea.vmem %s1, 144
        %v2624 = vld [vmem:[%s2623] sm:$0xff]
        %v2625 = vld [vmem:[%s2623 + $0x8] sm:$0xff]
        %v2627 = vsel %vm238, %v2591, 0
        %v2630 = vsel %vm238, %v2592, 0
        %v2633 = vsel %vm238, %v2593, 0
        %v2636 = vsel %vm238, %v2594, 0
        %v2639 = vsel %vm238, %v2595, 0
        %v2642 = vsel %vm238, %v2596, 0
        %v2645 = vsel %vm238, %v2597, 0
        %v2648 = vsel %vm238, %v2598, 0
        %v2651 = vsel %vm238, %v2599, 0
        %v2654 = vsel %vm238, %v2600, 0
        %v2657 = vsel %vm238, %v2601, 0
        %v2660 = vsel %vm238, %v2602, 0
        %v2663 = vsel %vm238, %v2603, 0
        %v2666 = vsel %vm238, %v2604, 0
        %v2669 = vsel %vm238, %v2605, 0
        %v2672 = vsel %vm238, %v2606, 0
        %v2675 = vsel %vm238, %v2607, 0
        %v2678 = vsel %vm238, %v2608, 0
        %v2681 = vsel %vm238, %v2609, 0
        %v2684 = vsel %vm238, %v2610, 0
        %v2687 = vsel %vm238, %v2611, 0
        %v2690 = vsel %vm238, %v2612, 0
        %v2693 = vsel %vm238, %v2613, 0
        %v2696 = vsel %vm238, %v2614, 0
        %v2699 = vsel %vm238, %v2615, 0
        %v2702 = vsel %vm238, %v2616, 0
        %v2705 = vsel %vm238, %v2617, 0
        %v2708 = vsel %vm238, %v2618, 0
        %v2711 = vsel %vm238, %v2619, 0
        %v2714 = vsel %vm238, %v2620, 0
        %v2717 = vsel %vm238, %v2621, 0
        %v2720 = vsel %vm238, %v2622, 0
        %2722 = vmatpush.msra.mxu0 0.0
        %2723 = vmatpush.msra.mxu0 0.0
        %2724 = vmatpush.msra.mxu0 0.0
        %2725 = vmatpush.msra.mxu0 0.0
        %2726 = vmatpush.msra.mxu0 0.0
        %2727 = vmatpush.msra.mxu0 0.0
        %2728 = vmatpush.msra.mxu0 0.0
        %2729 = vmatpush.msra.mxu0 0.0
        %2730 = vmatpush.msra.mxu0 0.0
        %2731 = vmatpush.msra.mxu0 0.0
        %2732 = vmatpush.msra.mxu0 0.0
        %2733 = vmatpush.msra.mxu0 0.0
        %2734 = vmatpush.msra.mxu0 0.0
        %2735 = vmatpush.msra.mxu0 0.0
        %2736 = vmatpush.msra.mxu0 %v2625
        %2737 = vmatpush.msra.mxu0 %v2624
        %2738 = vmatmul.f32.gmra.mxu0 %v2627
        %v2739 = vpop.f32.mrf.mxu0
        %v2740 = vadd.f32 0.0, %v2739
        %2741 = vmatmul.f32.gmra.mxu0 %v2630
        %v2742 = vpop.f32.mrf.mxu0
        %v2743 = vadd.f32 0.0, %v2742
        %2744 = vmatmul.f32.gmra.mxu0 %v2633
        %v2745 = vpop.f32.mrf.mxu0
        %v2746 = vadd.f32 0.0, %v2745
        %2747 = vmatmul.f32.gmra.mxu0 %v2636
        %v2748 = vpop.f32.mrf.mxu0
        %v2749 = vadd.f32 0.0, %v2748
        %2750 = vmatmul.f32.gmra.mxu0 %v2639
        %v2751 = vpop.f32.mrf.mxu0
        %v2752 = vadd.f32 0.0, %v2751
        %2753 = vmatmul.f32.gmra.mxu0 %v2642
        %v2754 = vpop.f32.mrf.mxu0
        %v2755 = vadd.f32 0.0, %v2754
        %2756 = vmatmul.f32.gmra.mxu0 %v2645
        %v2757 = vpop.f32.mrf.mxu0
        %v2758 = vadd.f32 0.0, %v2757
        %2759 = vmatmul.f32.gmra.mxu0 %v2648
        %v2760 = vpop.f32.mrf.mxu0
        %v2761 = vadd.f32 0.0, %v2760
        %2762 = vmatmul.f32.gmra.mxu0 %v2651
        %v2763 = vpop.f32.mrf.mxu0
        %v2764 = vadd.f32 0.0, %v2763
        %2765 = vmatmul.f32.gmra.mxu0 %v2654
        %v2766 = vpop.f32.mrf.mxu0
        %v2767 = vadd.f32 0.0, %v2766
        %2768 = vmatmul.f32.gmra.mxu0 %v2657
        %v2769 = vpop.f32.mrf.mxu0
        %v2770 = vadd.f32 0.0, %v2769
        %2771 = vmatmul.f32.gmra.mxu0 %v2660
        %v2772 = vpop.f32.mrf.mxu0
        %v2773 = vadd.f32 0.0, %v2772
        %2774 = vmatmul.f32.gmra.mxu0 %v2663
        %v2775 = vpop.f32.mrf.mxu0
        %v2776 = vadd.f32 0.0, %v2775
        %2777 = vmatmul.f32.gmra.mxu0 %v2666
        %v2778 = vpop.f32.mrf.mxu0
        %v2779 = vadd.f32 0.0, %v2778
        %2780 = vmatmul.f32.gmra.mxu0 %v2669
        %v2781 = vpop.f32.mrf.mxu0
        %v2782 = vadd.f32 0.0, %v2781
        %2783 = vmatmul.f32.gmra.mxu0 %v2672
        %v2784 = vpop.f32.mrf.mxu0
        %v2785 = vadd.f32 0.0, %v2784
        %2786 = vmatmul.f32.gmra.mxu0 %v2675
        %v2787 = vpop.f32.mrf.mxu0
        %v2788 = vadd.f32 0.0, %v2787
        %2789 = vmatmul.f32.gmra.mxu0 %v2678
        %v2790 = vpop.f32.mrf.mxu0
        %v2791 = vadd.f32 0.0, %v2790
        %2792 = vmatmul.f32.gmra.mxu0 %v2681
        %v2793 = vpop.f32.mrf.mxu0
        %v2794 = vadd.f32 0.0, %v2793
        %2795 = vmatmul.f32.gmra.mxu0 %v2684
        %v2796 = vpop.f32.mrf.mxu0
        %v2797 = vadd.f32 0.0, %v2796
        %2798 = vmatmul.f32.gmra.mxu0 %v2687
        %v2799 = vpop.f32.mrf.mxu0
        %v2800 = vadd.f32 0.0, %v2799
        %2801 = vmatmul.f32.gmra.mxu0 %v2690
        %v2802 = vpop.f32.mrf.mxu0
        %v2803 = vadd.f32 0.0, %v2802
        %2804 = vmatmul.f32.gmra.mxu0 %v2693
        %v2805 = vpop.f32.mrf.mxu0
        %v2806 = vadd.f32 0.0, %v2805
        %2807 = vmatmul.f32.gmra.mxu0 %v2696
        %v2808 = vpop.f32.mrf.mxu0
        %v2809 = vadd.f32 0.0, %v2808
        %2810 = vmatmul.f32.gmra.mxu0 %v2699
        %v2811 = vpop.f32.mrf.mxu0
        %v2812 = vadd.f32 0.0, %v2811
        %2813 = vmatmul.f32.gmra.mxu0 %v2702
        %v2814 = vpop.f32.mrf.mxu0
        %v2815 = vadd.f32 0.0, %v2814
        %2816 = vmatmul.f32.gmra.mxu0 %v2705
        %v2817 = vpop.f32.mrf.mxu0
        %v2818 = vadd.f32 0.0, %v2817
        %2819 = vmatmul.f32.gmra.mxu0 %v2708
        %v2820 = vpop.f32.mrf.mxu0
        %v2821 = vadd.f32 0.0, %v2820
        %2822 = vmatmul.f32.gmra.mxu0 %v2711
        %v2823 = vpop.f32.mrf.mxu0
        %v2824 = vadd.f32 0.0, %v2823
        %2825 = vmatmul.f32.gmra.mxu0 %v2714
        %v2826 = vpop.f32.mrf.mxu0
        %v2827 = vadd.f32 0.0, %v2826
        %2828 = vmatmul.f32.gmra.mxu0 %v2717
        %v2829 = vpop.f32.mrf.mxu0
        %v2830 = vadd.f32 0.0, %v2829
        %2831 = vmatmul.f32.gmra.mxu0 %v2720
        %v2832 = vpop.f32.mrf.mxu0
        %v2833 = vadd.f32 0.0, %v2832
        %2834 = vdwg.mxu0
        %v2835 = vadd.f32 %v2559, %v2740
        %v2836 = vadd.f32 %v2560, %v2743
        %v2837 = vadd.f32 %v2561, %v2746
        %v2838 = vadd.f32 %v2562, %v2749
        %v2839 = vadd.f32 %v2563, %v2752
        %v2840 = vadd.f32 %v2564, %v2755
        %v2841 = vadd.f32 %v2565, %v2758
        %v2842 = vadd.f32 %v2566, %v2761
        %v2843 = vadd.f32 %v2567, %v2764
        %v2844 = vadd.f32 %v2568, %v2767
        %v2845 = vadd.f32 %v2569, %v2770
        %v2846 = vadd.f32 %v2570, %v2773
        %v2847 = vadd.f32 %v2571, %v2776
        %v2848 = vadd.f32 %v2572, %v2779
        %v2849 = vadd.f32 %v2573, %v2782
        %v2850 = vadd.f32 %v2574, %v2785
        %v2851 = vadd.f32 %v2575, %v2788
        %v2852 = vadd.f32 %v2576, %v2791
        %v2853 = vadd.f32 %v2577, %v2794
        %v2854 = vadd.f32 %v2578, %v2797
        %v2855 = vadd.f32 %v2579, %v2800
        %v2856 = vadd.f32 %v2580, %v2803
        %v2857 = vadd.f32 %v2581, %v2806
        %v2858 = vadd.f32 %v2582, %v2809
        %v2859 = vadd.f32 %v2583, %v2812
        %v2860 = vadd.f32 %v2584, %v2815
        %v2861 = vadd.f32 %v2585, %v2818
        %v2862 = vadd.f32 %v2586, %v2821
        %v2863 = vadd.f32 %v2587, %v2824
        %v2864 = vadd.f32 %v2588, %v2827
        %v2865 = vadd.f32 %v2589, %v2830
        %v2866 = vadd.f32 %v2590, %v2833
        %v2867 = vld [vmem:[%s2314 + $0x2] sm:$0xff]
        %v2868 = vld [vmem:[%s2314 + $0xa] sm:$0xff]
        %v2869 = vld [vmem:[%s2314 + $0x1a] sm:$0xff]
        %v2870 = vld [vmem:[%s2314 + $0x22] sm:$0xff]
        %v2871 = vld [vmem:[%s2314 + $0x32] sm:$0xff]
        %v2872 = vld [vmem:[%s2314 + $0x3a] sm:$0xff]
        %v2873 = vld [vmem:[%s2314 + $0x4a] sm:$0xff]
        %v2874 = vld [vmem:[%s2314 + $0x52] sm:$0xff]
        %v2875 = vld [vmem:[%s2314 + $0x62] sm:$0xff]
        %v2876 = vld [vmem:[%s2314 + $0x6a] sm:$0xff]
        %v2877 = vld [vmem:[%s2314 + $0x7a] sm:$0xff]
        %v2878 = vld [vmem:[%s2314 + $0x82] sm:$0xff]
        %v2879 = vld [vmem:[%s2314 + $0x92] sm:$0xff]
        %v2880 = vld [vmem:[%s2314 + $0x9a] sm:$0xff]
        %v2881 = vld [vmem:[%s2314 + $0xaa] sm:$0xff]
        %v2882 = vld [vmem:[%s2314 + $0xb2] sm:$0xff]
        %v2883 = vld [vmem:[%s2314 + $0xc2] sm:$0xff]
        %v2884 = vld [vmem:[%s2314 + $0xca] sm:$0xff]
        %v2885 = vld [vmem:[%s2314 + $0xda] sm:$0xff]
        %v2886 = vld [vmem:[%s2314 + $0xe2] sm:$0xff]
        %v2887 = vld [vmem:[%s2314 + $0xf2] sm:$0xff]
        %v2888 = vld [vmem:[%s2314 + $0xfa] sm:$0xff]
        %v2889 = vld [vmem:[%s2314 + $0x10a] sm:$0xff]
        %v2890 = vld [vmem:[%s2314 + $0x112] sm:$0xff]
        %v2891 = vld [vmem:[%s2314 + $0x122] sm:$0xff]
        %v2892 = vld [vmem:[%s2314 + $0x12a] sm:$0xff]
        %v2893 = vld [vmem:[%s2314 + $0x13a] sm:$0xff]
        %v2894 = vld [vmem:[%s2314 + $0x142] sm:$0xff]
        %v2895 = vld [vmem:[%s2314 + $0x152] sm:$0xff]
        %v2896 = vld [vmem:[%s2314 + $0x15a] sm:$0xff]
        %v2897 = vld [vmem:[%s2314 + $0x16a] sm:$0xff]
        %v2898 = vld [vmem:[%s2314 + $0x172] sm:$0xff]
        %s2899 = scalar_lea.vmem %s1, 160
        %v2900 = vld [vmem:[%s2899] sm:$0xff]
        %v2901 = vld [vmem:[%s2899 + $0x8] sm:$0xff]
        %v2903 = vsel %vm238, %v2867, 0
        %v2906 = vsel %vm238, %v2868, 0
        %v2909 = vsel %vm238, %v2869, 0
        %v2912 = vsel %vm238, %v2870, 0
        %v2915 = vsel %vm238, %v2871, 0
        %v2918 = vsel %vm238, %v2872, 0
        %v2921 = vsel %vm238, %v2873, 0
        %v2924 = vsel %vm238, %v2874, 0
        %v2927 = vsel %vm238, %v2875, 0
        %v2930 = vsel %vm238, %v2876, 0
        %v2933 = vsel %vm238, %v2877, 0
        %v2936 = vsel %vm238, %v2878, 0
        %v2939 = vsel %vm238, %v2879, 0
        %v2942 = vsel %vm238, %v2880, 0
        %v2945 = vsel %vm238, %v2881, 0
        %v2948 = vsel %vm238, %v2882, 0
        %v2951 = vsel %vm238, %v2883, 0
        %v2954 = vsel %vm238, %v2884, 0
        %v2957 = vsel %vm238, %v2885, 0
        %v2960 = vsel %vm238, %v2886, 0
        %v2963 = vsel %vm238, %v2887, 0
        %v2966 = vsel %vm238, %v2888, 0
        %v2969 = vsel %vm238, %v2889, 0
        %v2972 = vsel %vm238, %v2890, 0
        %v2975 = vsel %vm238, %v2891, 0
        %v2978 = vsel %vm238, %v2892, 0
        %v2981 = vsel %vm238, %v2893, 0
        %v2984 = vsel %vm238, %v2894, 0
        %v2987 = vsel %vm238, %v2895, 0
        %v2990 = vsel %vm238, %v2896, 0
        %v2993 = vsel %vm238, %v2897, 0
        %v2996 = vsel %vm238, %v2898, 0
        %2998 = vmatpush.msra.mxu0 0.0
        %2999 = vmatpush.msra.mxu0 0.0
        %3000 = vmatpush.msra.mxu0 0.0
        %3001 = vmatpush.msra.mxu0 0.0
        %3002 = vmatpush.msra.mxu0 0.0
        %3003 = vmatpush.msra.mxu0 0.0
        %3004 = vmatpush.msra.mxu0 0.0
        %3005 = vmatpush.msra.mxu0 0.0
        %3006 = vmatpush.msra.mxu0 0.0
        %3007 = vmatpush.msra.mxu0 0.0
        %3008 = vmatpush.msra.mxu0 0.0
        %3009 = vmatpush.msra.mxu0 0.0
        %3010 = vmatpush.msra.mxu0 0.0
        %3011 = vmatpush.msra.mxu0 0.0
        %3012 = vmatpush.msra.mxu0 %v2901
        %3013 = vmatpush.msra.mxu0 %v2900
        %3014 = vmatmul.f32.gmra.mxu0 %v2903
        %v3015 = vpop.f32.mrf.mxu0
        %v3016 = vadd.f32 0.0, %v3015
        %3017 = vmatmul.f32.gmra.mxu0 %v2906
        %v3018 = vpop.f32.mrf.mxu0
        %v3019 = vadd.f32 0.0, %v3018
        %3020 = vmatmul.f32.gmra.mxu0 %v2909
        %v3021 = vpop.f32.mrf.mxu0
        %v3022 = vadd.f32 0.0, %v3021
        %3023 = vmatmul.f32.gmra.mxu0 %v2912
        %v3024 = vpop.f32.mrf.mxu0
        %v3025 = vadd.f32 0.0, %v3024
        %3026 = vmatmul.f32.gmra.mxu0 %v2915
        %v3027 = vpop.f32.mrf.mxu0
        %v3028 = vadd.f32 0.0, %v3027
        %3029 = vmatmul.f32.gmra.mxu0 %v2918
        %v3030 = vpop.f32.mrf.mxu0
        %v3031 = vadd.f32 0.0, %v3030
        %3032 = vmatmul.f32.gmra.mxu0 %v2921
        %v3033 = vpop.f32.mrf.mxu0
        %v3034 = vadd.f32 0.0, %v3033
        %3035 = vmatmul.f32.gmra.mxu0 %v2924
        %v3036 = vpop.f32.mrf.mxu0
        %v3037 = vadd.f32 0.0, %v3036
        %3038 = vmatmul.f32.gmra.mxu0 %v2927
        %v3039 = vpop.f32.mrf.mxu0
        %v3040 = vadd.f32 0.0, %v3039
        %3041 = vmatmul.f32.gmra.mxu0 %v2930
        %v3042 = vpop.f32.mrf.mxu0
        %v3043 = vadd.f32 0.0, %v3042
        %3044 = vmatmul.f32.gmra.mxu0 %v2933
        %v3045 = vpop.f32.mrf.mxu0
        %v3046 = vadd.f32 0.0, %v3045
        %3047 = vmatmul.f32.gmra.mxu0 %v2936
        %v3048 = vpop.f32.mrf.mxu0
        %v3049 = vadd.f32 0.0, %v3048
        %3050 = vmatmul.f32.gmra.mxu0 %v2939
        %v3051 = vpop.f32.mrf.mxu0
        %v3052 = vadd.f32 0.0, %v3051
        %3053 = vmatmul.f32.gmra.mxu0 %v2942
        %v3054 = vpop.f32.mrf.mxu0
        %v3055 = vadd.f32 0.0, %v3054
        %3056 = vmatmul.f32.gmra.mxu0 %v2945
        %v3057 = vpop.f32.mrf.mxu0
        %v3058 = vadd.f32 0.0, %v3057
        %3059 = vmatmul.f32.gmra.mxu0 %v2948
        %v3060 = vpop.f32.mrf.mxu0
        %v3061 = vadd.f32 0.0, %v3060
        %3062 = vmatmul.f32.gmra.mxu0 %v2951
        %v3063 = vpop.f32.mrf.mxu0
        %v3064 = vadd.f32 0.0, %v3063
        %3065 = vmatmul.f32.gmra.mxu0 %v2954
        %v3066 = vpop.f32.mrf.mxu0
        %v3067 = vadd.f32 0.0, %v3066
        %3068 = vmatmul.f32.gmra.mxu0 %v2957
        %v3069 = vpop.f32.mrf.mxu0
        %v3070 = vadd.f32 0.0, %v3069
        %3071 = vmatmul.f32.gmra.mxu0 %v2960
        %v3072 = vpop.f32.mrf.mxu0
        %v3073 = vadd.f32 0.0, %v3072
        %3074 = vmatmul.f32.gmra.mxu0 %v2963
        %v3075 = vpop.f32.mrf.mxu0
        %v3076 = vadd.f32 0.0, %v3075
        %3077 = vmatmul.f32.gmra.mxu0 %v2966
        %v3078 = vpop.f32.mrf.mxu0
        %v3079 = vadd.f32 0.0, %v3078
        %3080 = vmatmul.f32.gmra.mxu0 %v2969
        %v3081 = vpop.f32.mrf.mxu0
        %v3082 = vadd.f32 0.0, %v3081
        %3083 = vmatmul.f32.gmra.mxu0 %v2972
        %v3084 = vpop.f32.mrf.mxu0
        %v3085 = vadd.f32 0.0, %v3084
        %3086 = vmatmul.f32.gmra.mxu0 %v2975
        %v3087 = vpop.f32.mrf.mxu0
        %v3088 = vadd.f32 0.0, %v3087
        %3089 = vmatmul.f32.gmra.mxu0 %v2978
        %v3090 = vpop.f32.mrf.mxu0
        %v3091 = vadd.f32 0.0, %v3090
        %3092 = vmatmul.f32.gmra.mxu0 %v2981
        %v3093 = vpop.f32.mrf.mxu0
        %v3094 = vadd.f32 0.0, %v3093
        %3095 = vmatmul.f32.gmra.mxu0 %v2984
        %v3096 = vpop.f32.mrf.mxu0
        %v3097 = vadd.f32 0.0, %v3096
        %3098 = vmatmul.f32.gmra.mxu0 %v2987
        %v3099 = vpop.f32.mrf.mxu0
        %v3100 = vadd.f32 0.0, %v3099
        %3101 = vmatmul.f32.gmra.mxu0 %v2990
        %v3102 = vpop.f32.mrf.mxu0
        %v3103 = vadd.f32 0.0, %v3102
        %3104 = vmatmul.f32.gmra.mxu0 %v2993
        %v3105 = vpop.f32.mrf.mxu0
        %v3106 = vadd.f32 0.0, %v3105
        %3107 = vmatmul.f32.gmra.mxu0 %v2996
        %v3108 = vpop.f32.mrf.mxu0
        %v3109 = vadd.f32 0.0, %v3108
        %3110 = vdwg.mxu0
        %v3111 = vadd.f32 %v2835, %v3016
        %v3112 = vadd.f32 %v2836, %v3019
        %v3113 = vadd.f32 %v2837, %v3022
        %v3114 = vadd.f32 %v2838, %v3025
        %v3115 = vadd.f32 %v2839, %v3028
        %v3116 = vadd.f32 %v2840, %v3031
        %v3117 = vadd.f32 %v2841, %v3034
        %v3118 = vadd.f32 %v2842, %v3037
        %v3119 = vadd.f32 %v2843, %v3040
        %v3120 = vadd.f32 %v2844, %v3043
        %v3121 = vadd.f32 %v2845, %v3046
        %v3122 = vadd.f32 %v2846, %v3049
        %v3123 = vadd.f32 %v2847, %v3052
        %v3124 = vadd.f32 %v2848, %v3055
        %v3125 = vadd.f32 %v2849, %v3058
        %v3126 = vadd.f32 %v2850, %v3061
        %v3127 = vadd.f32 %v2851, %v3064
        %v3128 = vadd.f32 %v2852, %v3067
        %v3129 = vadd.f32 %v2853, %v3070
        %v3130 = vadd.f32 %v2854, %v3073
        %v3131 = vadd.f32 %v2855, %v3076
        %v3132 = vadd.f32 %v2856, %v3079
        %v3133 = vadd.f32 %v2857, %v3082
        %v3134 = vadd.f32 %v2858, %v3085
        %v3135 = vadd.f32 %v2859, %v3088
        %v3136 = vadd.f32 %v2860, %v3091
        %v3137 = vadd.f32 %v2861, %v3094
        %v3138 = vadd.f32 %v2862, %v3097
        %v3139 = vadd.f32 %v2863, %v3100
        %v3140 = vadd.f32 %v2864, %v3103
        %v3141 = vadd.f32 %v2865, %v3106
        %v3142 = vadd.f32 %v2866, %v3109
        %v3143 = vld [vmem:[%s2314 + $0x3] sm:$0xff]
        %v3144 = vld [vmem:[%s2314 + $0xb] sm:$0xff]
        %v3145 = vld [vmem:[%s2314 + $0x1b] sm:$0xff]
        %v3146 = vld [vmem:[%s2314 + $0x23] sm:$0xff]
        %v3147 = vld [vmem:[%s2314 + $0x33] sm:$0xff]
        %v3148 = vld [vmem:[%s2314 + $0x3b] sm:$0xff]
        %v3149 = vld [vmem:[%s2314 + $0x4b] sm:$0xff]
        %v3150 = vld [vmem:[%s2314 + $0x53] sm:$0xff]
        %v3151 = vld [vmem:[%s2314 + $0x63] sm:$0xff]
        %v3152 = vld [vmem:[%s2314 + $0x6b] sm:$0xff]
        %v3153 = vld [vmem:[%s2314 + $0x7b] sm:$0xff]
        %v3154 = vld [vmem:[%s2314 + $0x83] sm:$0xff]
        %v3155 = vld [vmem:[%s2314 + $0x93] sm:$0xff]
        %v3156 = vld [vmem:[%s2314 + $0x9b] sm:$0xff]
        %v3157 = vld [vmem:[%s2314 + $0xab] sm:$0xff]
        %v3158 = vld [vmem:[%s2314 + $0xb3] sm:$0xff]
        %v3159 = vld [vmem:[%s2314 + $0xc3] sm:$0xff]
        %v3160 = vld [vmem:[%s2314 + $0xcb] sm:$0xff]
        %v3161 = vld [vmem:[%s2314 + $0xdb] sm:$0xff]
        %v3162 = vld [vmem:[%s2314 + $0xe3] sm:$0xff]
        %v3163 = vld [vmem:[%s2314 + $0xf3] sm:$0xff]
        %v3164 = vld [vmem:[%s2314 + $0xfb] sm:$0xff]
        %v3165 = vld [vmem:[%s2314 + $0x10b] sm:$0xff]
        %v3166 = vld [vmem:[%s2314 + $0x113] sm:$0xff]
        %v3167 = vld [vmem:[%s2314 + $0x123] sm:$0xff]
        %v3168 = vld [vmem:[%s2314 + $0x12b] sm:$0xff]
        %v3169 = vld [vmem:[%s2314 + $0x13b] sm:$0xff]
        %v3170 = vld [vmem:[%s2314 + $0x143] sm:$0xff]
        %v3171 = vld [vmem:[%s2314 + $0x153] sm:$0xff]
        %v3172 = vld [vmem:[%s2314 + $0x15b] sm:$0xff]
        %v3173 = vld [vmem:[%s2314 + $0x16b] sm:$0xff]
        %v3174 = vld [vmem:[%s2314 + $0x173] sm:$0xff]
        %s3175 = scalar_lea.vmem %s1, 176
        %v3176 = vld [vmem:[%s3175] sm:$0xff]
        %v3177 = vld [vmem:[%s3175 + $0x8] sm:$0xff]
        %v3179 = vsel %vm238, %v3143, 0
        %v3182 = vsel %vm238, %v3144, 0
        %v3185 = vsel %vm238, %v3145, 0
        %v3188 = vsel %vm238, %v3146, 0
        %v3191 = vsel %vm238, %v3147, 0
        %v3194 = vsel %vm238, %v3148, 0
        %v3197 = vsel %vm238, %v3149, 0
        %v3200 = vsel %vm238, %v3150, 0
        %v3203 = vsel %vm238, %v3151, 0
        %v3206 = vsel %vm238, %v3152, 0
        %v3209 = vsel %vm238, %v3153, 0
        %v3212 = vsel %vm238, %v3154, 0
        %v3215 = vsel %vm238, %v3155, 0
        %v3218 = vsel %vm238, %v3156, 0
        %v3221 = vsel %vm238, %v3157, 0
        %v3224 = vsel %vm238, %v3158, 0
        %v3227 = vsel %vm238, %v3159, 0
        %v3230 = vsel %vm238, %v3160, 0
        %v3233 = vsel %vm238, %v3161, 0
        %v3236 = vsel %vm238, %v3162, 0
        %v3239 = vsel %vm238, %v3163, 0
        %v3242 = vsel %vm238, %v3164, 0
        %v3245 = vsel %vm238, %v3165, 0
        %v3248 = vsel %vm238, %v3166, 0
        %v3251 = vsel %vm238, %v3167, 0
        %v3254 = vsel %vm238, %v3168, 0
        %v3257 = vsel %vm238, %v3169, 0
        %v3260 = vsel %vm238, %v3170, 0
        %v3263 = vsel %vm238, %v3171, 0
        %v3266 = vsel %vm238, %v3172, 0
        %v3269 = vsel %vm238, %v3173, 0
        %v3272 = vsel %vm238, %v3174, 0
        %3274 = vmatpush.msra.mxu0 0.0
        %3275 = vmatpush.msra.mxu0 0.0
        %3276 = vmatpush.msra.mxu0 0.0
        %3277 = vmatpush.msra.mxu0 0.0
        %3278 = vmatpush.msra.mxu0 0.0
        %3279 = vmatpush.msra.mxu0 0.0
        %3280 = vmatpush.msra.mxu0 0.0
        %3281 = vmatpush.msra.mxu0 0.0
        %3282 = vmatpush.msra.mxu0 0.0
        %3283 = vmatpush.msra.mxu0 0.0
        %3284 = vmatpush.msra.mxu0 0.0
        %3285 = vmatpush.msra.mxu0 0.0
        %3286 = vmatpush.msra.mxu0 0.0
        %3287 = vmatpush.msra.mxu0 0.0
        %3288 = vmatpush.msra.mxu0 %v3177
        %3289 = vmatpush.msra.mxu0 %v3176
        %3290 = vmatmul.f32.gmra.mxu0 %v3179
        %v3291 = vpop.f32.mrf.mxu0
        %v3292 = vadd.f32 0.0, %v3291
        %3293 = vmatmul.f32.gmra.mxu0 %v3182
        %v3294 = vpop.f32.mrf.mxu0
        %v3295 = vadd.f32 0.0, %v3294
        %3296 = vmatmul.f32.gmra.mxu0 %v3185
        %v3297 = vpop.f32.mrf.mxu0
        %v3298 = vadd.f32 0.0, %v3297
        %3299 = vmatmul.f32.gmra.mxu0 %v3188
        %v3300 = vpop.f32.mrf.mxu0
        %v3301 = vadd.f32 0.0, %v3300
        %3302 = vmatmul.f32.gmra.mxu0 %v3191
        %v3303 = vpop.f32.mrf.mxu0
        %v3304 = vadd.f32 0.0, %v3303
        %3305 = vmatmul.f32.gmra.mxu0 %v3194
        %v3306 = vpop.f32.mrf.mxu0
        %v3307 = vadd.f32 0.0, %v3306
        %3308 = vmatmul.f32.gmra.mxu0 %v3197
        %v3309 = vpop.f32.mrf.mxu0
        %v3310 = vadd.f32 0.0, %v3309
        %3311 = vmatmul.f32.gmra.mxu0 %v3200
        %v3312 = vpop.f32.mrf.mxu0
        %v3313 = vadd.f32 0.0, %v3312
        %3314 = vmatmul.f32.gmra.mxu0 %v3203
        %v3315 = vpop.f32.mrf.mxu0
        %v3316 = vadd.f32 0.0, %v3315
        %3317 = vmatmul.f32.gmra.mxu0 %v3206
        %v3318 = vpop.f32.mrf.mxu0
        %v3319 = vadd.f32 0.0, %v3318
        %3320 = vmatmul.f32.gmra.mxu0 %v3209
        %v3321 = vpop.f32.mrf.mxu0
        %v3322 = vadd.f32 0.0, %v3321
        %3323 = vmatmul.f32.gmra.mxu0 %v3212
        %v3324 = vpop.f32.mrf.mxu0
        %v3325 = vadd.f32 0.0, %v3324
        %3326 = vmatmul.f32.gmra.mxu0 %v3215
        %v3327 = vpop.f32.mrf.mxu0
        %v3328 = vadd.f32 0.0, %v3327
        %3329 = vmatmul.f32.gmra.mxu0 %v3218
        %v3330 = vpop.f32.mrf.mxu0
        %v3331 = vadd.f32 0.0, %v3330
        %3332 = vmatmul.f32.gmra.mxu0 %v3221
        %v3333 = vpop.f32.mrf.mxu0
        %v3334 = vadd.f32 0.0, %v3333
        %3335 = vmatmul.f32.gmra.mxu0 %v3224
        %v3336 = vpop.f32.mrf.mxu0
        %v3337 = vadd.f32 0.0, %v3336
        %3338 = vmatmul.f32.gmra.mxu0 %v3227
        %v3339 = vpop.f32.mrf.mxu0
        %v3340 = vadd.f32 0.0, %v3339
        %3341 = vmatmul.f32.gmra.mxu0 %v3230
        %v3342 = vpop.f32.mrf.mxu0
        %v3343 = vadd.f32 0.0, %v3342
        %3344 = vmatmul.f32.gmra.mxu0 %v3233
        %v3345 = vpop.f32.mrf.mxu0
        %v3346 = vadd.f32 0.0, %v3345
        %3347 = vmatmul.f32.gmra.mxu0 %v3236
        %v3348 = vpop.f32.mrf.mxu0
        %v3349 = vadd.f32 0.0, %v3348
        %3350 = vmatmul.f32.gmra.mxu0 %v3239
        %v3351 = vpop.f32.mrf.mxu0
        %v3352 = vadd.f32 0.0, %v3351
        %3353 = vmatmul.f32.gmra.mxu0 %v3242
        %v3354 = vpop.f32.mrf.mxu0
        %v3355 = vadd.f32 0.0, %v3354
        %3356 = vmatmul.f32.gmra.mxu0 %v3245
        %v3357 = vpop.f32.mrf.mxu0
        %v3358 = vadd.f32 0.0, %v3357
        %3359 = vmatmul.f32.gmra.mxu0 %v3248
        %v3360 = vpop.f32.mrf.mxu0
        %v3361 = vadd.f32 0.0, %v3360
        %3362 = vmatmul.f32.gmra.mxu0 %v3251
        %v3363 = vpop.f32.mrf.mxu0
        %v3364 = vadd.f32 0.0, %v3363
        %3365 = vmatmul.f32.gmra.mxu0 %v3254
        %v3366 = vpop.f32.mrf.mxu0
        %v3367 = vadd.f32 0.0, %v3366
        %3368 = vmatmul.f32.gmra.mxu0 %v3257
        %v3369 = vpop.f32.mrf.mxu0
        %v3370 = vadd.f32 0.0, %v3369
        %3371 = vmatmul.f32.gmra.mxu0 %v3260
        %v3372 = vpop.f32.mrf.mxu0
        %v3373 = vadd.f32 0.0, %v3372
        %3374 = vmatmul.f32.gmra.mxu0 %v3263
        %v3375 = vpop.f32.mrf.mxu0
        %v3376 = vadd.f32 0.0, %v3375
        %3377 = vmatmul.f32.gmra.mxu0 %v3266
        %v3378 = vpop.f32.mrf.mxu0
        %v3379 = vadd.f32 0.0, %v3378
        %3380 = vmatmul.f32.gmra.mxu0 %v3269
        %v3381 = vpop.f32.mrf.mxu0
        %v3382 = vadd.f32 0.0, %v3381
        %3383 = vmatmul.f32.gmra.mxu0 %v3272
        %v3384 = vpop.f32.mrf.mxu0
        %v3385 = vadd.f32 0.0, %v3384
        %3386 = vdwg.mxu0
        %v3387 = vadd.f32 %v3111, %v3292
        %v3388 = vadd.f32 %v3112, %v3295
        %v3389 = vadd.f32 %v3113, %v3298
        %v3390 = vadd.f32 %v3114, %v3301
        %v3391 = vadd.f32 %v3115, %v3304
        %v3392 = vadd.f32 %v3116, %v3307
        %v3393 = vadd.f32 %v3117, %v3310
        %v3394 = vadd.f32 %v3118, %v3313
        %v3395 = vadd.f32 %v3119, %v3316
        %v3396 = vadd.f32 %v3120, %v3319
        %v3397 = vadd.f32 %v3121, %v3322
        %v3398 = vadd.f32 %v3122, %v3325
        %v3399 = vadd.f32 %v3123, %v3328
        %v3400 = vadd.f32 %v3124, %v3331
        %v3401 = vadd.f32 %v3125, %v3334
        %v3402 = vadd.f32 %v3126, %v3337
        %v3403 = vadd.f32 %v3127, %v3340
        %v3404 = vadd.f32 %v3128, %v3343
        %v3405 = vadd.f32 %v3129, %v3346
        %v3406 = vadd.f32 %v3130, %v3349
        %v3407 = vadd.f32 %v3131, %v3352
        %v3408 = vadd.f32 %v3132, %v3355
        %v3409 = vadd.f32 %v3133, %v3358
        %v3410 = vadd.f32 %v3134, %v3361
        %v3411 = vadd.f32 %v3135, %v3364
        %v3412 = vadd.f32 %v3136, %v3367
        %v3413 = vadd.f32 %v3137, %v3370
        %v3414 = vadd.f32 %v3138, %v3373
        %v3415 = vadd.f32 %v3139, %v3376
        %v3416 = vadd.f32 %v3140, %v3379
        %v3417 = vadd.f32 %v3141, %v3382
        %v3418 = vadd.f32 %v3142, %v3385
        %s3419 = scalar_lea.vmem %s168, 72
        %v3420 = vld [vmem:[%s3419] sm:$0xff]
        %v3421 = vld [vmem:[%s3419 + $0x8] sm:$0xff]
        %v3422 = vld [vmem:[%s3419 + $0x18] sm:$0xff]
        %v3423 = vld [vmem:[%s3419 + $0x20] sm:$0xff]
        %v3424 = vld [vmem:[%s3419 + $0x30] sm:$0xff]
        %v3425 = vld [vmem:[%s3419 + $0x38] sm:$0xff]
        %v3426 = vld [vmem:[%s3419 + $0x48] sm:$0xff]
        %v3427 = vld [vmem:[%s3419 + $0x50] sm:$0xff]
        %v3428 = vld [vmem:[%s3419 + $0x60] sm:$0xff]
        %v3429 = vld [vmem:[%s3419 + $0x68] sm:$0xff]
        %v3430 = vld [vmem:[%s3419 + $0x78] sm:$0xff]
        %v3431 = vld [vmem:[%s3419 + $0x80] sm:$0xff]
        %v3432 = vld [vmem:[%s3419 + $0x90] sm:$0xff]
        %v3433 = vld [vmem:[%s3419 + $0x98] sm:$0xff]
        %v3434 = vld [vmem:[%s3419 + $0xa8] sm:$0xff]
        %v3435 = vld [vmem:[%s3419 + $0xb0] sm:$0xff]
        %v3436 = vld [vmem:[%s3419 + $0xc0] sm:$0xff]
        %v3437 = vld [vmem:[%s3419 + $0xc8] sm:$0xff]
        %v3438 = vld [vmem:[%s3419 + $0xd8] sm:$0xff]
        %v3439 = vld [vmem:[%s3419 + $0xe0] sm:$0xff]
        %v3440 = vld [vmem:[%s3419 + $0xf0] sm:$0xff]
        %v3441 = vld [vmem:[%s3419 + $0xf8] sm:$0xff]
        %v3442 = vld [vmem:[%s3419 + $0x108] sm:$0xff]
        %v3443 = vld [vmem:[%s3419 + $0x110] sm:$0xff]
        %v3444 = vld [vmem:[%s3419 + $0x120] sm:$0xff]
        %v3445 = vld [vmem:[%s3419 + $0x128] sm:$0xff]
        %v3446 = vld [vmem:[%s3419 + $0x138] sm:$0xff]
        %v3447 = vld [vmem:[%s3419 + $0x140] sm:$0xff]
        %v3448 = vld [vmem:[%s3419 + $0x150] sm:$0xff]
        %v3449 = vld [vmem:[%s3419 + $0x158] sm:$0xff]
        %v3450 = vld [vmem:[%s3419 + $0x168] sm:$0xff]
        %v3451 = vld [vmem:[%s3419 + $0x170] sm:$0xff]
        %s3452 = scalar_lea.vmem %s1, 192
        %v3453 = vld [vmem:[%s3452] sm:$0xff]
        %v3454 = vld [vmem:[%s3452 + $0x8] sm:$0xff]
        %v3456 = vsel %vm238, %v3420, 0
        %v3459 = vsel %vm238, %v3421, 0
        %v3462 = vsel %vm238, %v3422, 0
        %v3465 = vsel %vm238, %v3423, 0
        %v3468 = vsel %vm238, %v3424, 0
        %v3471 = vsel %vm238, %v3425, 0
        %v3474 = vsel %vm238, %v3426, 0
        %v3477 = vsel %vm238, %v3427, 0
        %v3480 = vsel %vm238, %v3428, 0
        %v3483 = vsel %vm238, %v3429, 0
        %v3486 = vsel %vm238, %v3430, 0
        %v3489 = vsel %vm238, %v3431, 0
        %v3492 = vsel %vm238, %v3432, 0
        %v3495 = vsel %vm238, %v3433, 0
        %v3498 = vsel %vm238, %v3434, 0
        %v3501 = vsel %vm238, %v3435, 0
        %v3504 = vsel %vm238, %v3436, 0
        %v3507 = vsel %vm238, %v3437, 0
        %v3510 = vsel %vm238, %v3438, 0
        %v3513 = vsel %vm238, %v3439, 0
        %v3516 = vsel %vm238, %v3440, 0
        %v3519 = vsel %vm238, %v3441, 0
        %v3522 = vsel %vm238, %v3442, 0
        %v3525 = vsel %vm238, %v3443, 0
        %v3528 = vsel %vm238, %v3444, 0
        %v3531 = vsel %vm238, %v3445, 0
        %v3534 = vsel %vm238, %v3446, 0
        %v3537 = vsel %vm238, %v3447, 0
        %v3540 = vsel %vm238, %v3448, 0
        %v3543 = vsel %vm238, %v3449, 0
        %v3546 = vsel %vm238, %v3450, 0
        %v3549 = vsel %vm238, %v3451, 0
        %3551 = vmatpush.msra.mxu0 0.0
        %3552 = vmatpush.msra.mxu0 0.0
        %3553 = vmatpush.msra.mxu0 0.0
        %3554 = vmatpush.msra.mxu0 0.0
        %3555 = vmatpush.msra.mxu0 0.0
        %3556 = vmatpush.msra.mxu0 0.0
        %3557 = vmatpush.msra.mxu0 0.0
        %3558 = vmatpush.msra.mxu0 0.0
        %3559 = vmatpush.msra.mxu0 0.0
        %3560 = vmatpush.msra.mxu0 0.0
        %3561 = vmatpush.msra.mxu0 0.0
        %3562 = vmatpush.msra.mxu0 0.0
        %3563 = vmatpush.msra.mxu0 0.0
        %3564 = vmatpush.msra.mxu0 0.0
        %3565 = vmatpush.msra.mxu0 %v3454
        %3566 = vmatpush.msra.mxu0 %v3453
        %3567 = vmatmul.f32.gmra.mxu0 %v3456
        %v3568 = vpop.f32.mrf.mxu0
        %v3569 = vadd.f32 0.0, %v3568
        %3570 = vmatmul.f32.gmra.mxu0 %v3459
        %v3571 = vpop.f32.mrf.mxu0
        %v3572 = vadd.f32 0.0, %v3571
        %3573 = vmatmul.f32.gmra.mxu0 %v3462
        %v3574 = vpop.f32.mrf.mxu0
        %v3575 = vadd.f32 0.0, %v3574
        %3576 = vmatmul.f32.gmra.mxu0 %v3465
        %v3577 = vpop.f32.mrf.mxu0
        %v3578 = vadd.f32 0.0, %v3577
        %3579 = vmatmul.f32.gmra.mxu0 %v3468
        %v3580 = vpop.f32.mrf.mxu0
        %v3581 = vadd.f32 0.0, %v3580
        %3582 = vmatmul.f32.gmra.mxu0 %v3471
        %v3583 = vpop.f32.mrf.mxu0
        %v3584 = vadd.f32 0.0, %v3583
        %3585 = vmatmul.f32.gmra.mxu0 %v3474
        %v3586 = vpop.f32.mrf.mxu0
        %v3587 = vadd.f32 0.0, %v3586
        %3588 = vmatmul.f32.gmra.mxu0 %v3477
        %v3589 = vpop.f32.mrf.mxu0
        %v3590 = vadd.f32 0.0, %v3589
        %3591 = vmatmul.f32.gmra.mxu0 %v3480
        %v3592 = vpop.f32.mrf.mxu0
        %v3593 = vadd.f32 0.0, %v3592
        %3594 = vmatmul.f32.gmra.mxu0 %v3483
        %v3595 = vpop.f32.mrf.mxu0
        %v3596 = vadd.f32 0.0, %v3595
        %3597 = vmatmul.f32.gmra.mxu0 %v3486
        %v3598 = vpop.f32.mrf.mxu0
        %v3599 = vadd.f32 0.0, %v3598
        %3600 = vmatmul.f32.gmra.mxu0 %v3489
        %v3601 = vpop.f32.mrf.mxu0
        %v3602 = vadd.f32 0.0, %v3601
        %3603 = vmatmul.f32.gmra.mxu0 %v3492
        %v3604 = vpop.f32.mrf.mxu0
        %v3605 = vadd.f32 0.0, %v3604
        %3606 = vmatmul.f32.gmra.mxu0 %v3495
        %v3607 = vpop.f32.mrf.mxu0
        %v3608 = vadd.f32 0.0, %v3607
        %3609 = vmatmul.f32.gmra.mxu0 %v3498
        %v3610 = vpop.f32.mrf.mxu0
        %v3611 = vadd.f32 0.0, %v3610
        %3612 = vmatmul.f32.gmra.mxu0 %v3501
        %v3613 = vpop.f32.mrf.mxu0
        %v3614 = vadd.f32 0.0, %v3613
        %3615 = vmatmul.f32.gmra.mxu0 %v3504
        %v3616 = vpop.f32.mrf.mxu0
        %v3617 = vadd.f32 0.0, %v3616
        %3618 = vmatmul.f32.gmra.mxu0 %v3507
        %v3619 = vpop.f32.mrf.mxu0
        %v3620 = vadd.f32 0.0, %v3619
        %3621 = vmatmul.f32.gmra.mxu0 %v3510
        %v3622 = vpop.f32.mrf.mxu0
        %v3623 = vadd.f32 0.0, %v3622
        %3624 = vmatmul.f32.gmra.mxu0 %v3513
        %v3625 = vpop.f32.mrf.mxu0
        %v3626 = vadd.f32 0.0, %v3625
        %3627 = vmatmul.f32.gmra.mxu0 %v3516
        %v3628 = vpop.f32.mrf.mxu0
        %v3629 = vadd.f32 0.0, %v3628
        %3630 = vmatmul.f32.gmra.mxu0 %v3519
        %v3631 = vpop.f32.mrf.mxu0
        %v3632 = vadd.f32 0.0, %v3631
        %3633 = vmatmul.f32.gmra.mxu0 %v3522
        %v3634 = vpop.f32.mrf.mxu0
        %v3635 = vadd.f32 0.0, %v3634
        %3636 = vmatmul.f32.gmra.mxu0 %v3525
        %v3637 = vpop.f32.mrf.mxu0
        %v3638 = vadd.f32 0.0, %v3637
        %3639 = vmatmul.f32.gmra.mxu0 %v3528
        %v3640 = vpop.f32.mrf.mxu0
        %v3641 = vadd.f32 0.0, %v3640
        %3642 = vmatmul.f32.gmra.mxu0 %v3531
        %v3643 = vpop.f32.mrf.mxu0
        %v3644 = vadd.f32 0.0, %v3643
        %3645 = vmatmul.f32.gmra.mxu0 %v3534
        %v3646 = vpop.f32.mrf.mxu0
        %v3647 = vadd.f32 0.0, %v3646
        %3648 = vmatmul.f32.gmra.mxu0 %v3537
        %v3649 = vpop.f32.mrf.mxu0
        %v3650 = vadd.f32 0.0, %v3649
        %3651 = vmatmul.f32.gmra.mxu0 %v3540
        %v3652 = vpop.f32.mrf.mxu0
        %v3653 = vadd.f32 0.0, %v3652
        %3654 = vmatmul.f32.gmra.mxu0 %v3543
        %v3655 = vpop.f32.mrf.mxu0
        %v3656 = vadd.f32 0.0, %v3655
        %3657 = vmatmul.f32.gmra.mxu0 %v3546
        %v3658 = vpop.f32.mrf.mxu0
        %v3659 = vadd.f32 0.0, %v3658
        %3660 = vmatmul.f32.gmra.mxu0 %v3549
        %v3661 = vpop.f32.mrf.mxu0
        %v3662 = vadd.f32 0.0, %v3661
        %3663 = vdwg.mxu0
        %v3664 = vadd.f32 %v3387, %v3569
        %v3665 = vadd.f32 %v3388, %v3572
        %v3666 = vadd.f32 %v3389, %v3575
        %v3667 = vadd.f32 %v3390, %v3578
        %v3668 = vadd.f32 %v3391, %v3581
        %v3669 = vadd.f32 %v3392, %v3584
        %v3670 = vadd.f32 %v3393, %v3587
        %v3671 = vadd.f32 %v3394, %v3590
        %v3672 = vadd.f32 %v3395, %v3593
        %v3673 = vadd.f32 %v3396, %v3596
        %v3674 = vadd.f32 %v3397, %v3599
        %v3675 = vadd.f32 %v3398, %v3602
        %v3676 = vadd.f32 %v3399, %v3605
        %v3677 = vadd.f32 %v3400, %v3608
        %v3678 = vadd.f32 %v3401, %v3611
        %v3679 = vadd.f32 %v3402, %v3614
        %v3680 = vadd.f32 %v3403, %v3617
        %v3681 = vadd.f32 %v3404, %v3620
        %v3682 = vadd.f32 %v3405, %v3623
        %v3683 = vadd.f32 %v3406, %v3626
        %v3684 = vadd.f32 %v3407, %v3629
        %v3685 = vadd.f32 %v3408, %v3632
        %v3686 = vadd.f32 %v3409, %v3635
        %v3687 = vadd.f32 %v3410, %v3638
        %v3688 = vadd.f32 %v3411, %v3641
        %v3689 = vadd.f32 %v3412, %v3644
        %v3690 = vadd.f32 %v3413, %v3647
        %v3691 = vadd.f32 %v3414, %v3650
        %v3692 = vadd.f32 %v3415, %v3653
        %v3693 = vadd.f32 %v3416, %v3656
        %v3694 = vadd.f32 %v3417, %v3659
        %v3695 = vadd.f32 %v3418, %v3662
        %v3696 = vld [vmem:[%s3419 + $0x1] sm:$0xff]
        %v3697 = vld [vmem:[%s3419 + $0x9] sm:$0xff]
        %v3698 = vld [vmem:[%s3419 + $0x19] sm:$0xff]
        %v3699 = vld [vmem:[%s3419 + $0x21] sm:$0xff]
        %v3700 = vld [vmem:[%s3419 + $0x31] sm:$0xff]
        %v3701 = vld [vmem:[%s3419 + $0x39] sm:$0xff]
        %v3702 = vld [vmem:[%s3419 + $0x49] sm:$0xff]
        %v3703 = vld [vmem:[%s3419 + $0x51] sm:$0xff]
        %v3704 = vld [vmem:[%s3419 + $0x61] sm:$0xff]
        %v3705 = vld [vmem:[%s3419 + $0x69] sm:$0xff]
        %v3706 = vld [vmem:[%s3419 + $0x79] sm:$0xff]
        %v3707 = vld [vmem:[%s3419 + $0x81] sm:$0xff]
        %v3708 = vld [vmem:[%s3419 + $0x91] sm:$0xff]
        %v3709 = vld [vmem:[%s3419 + $0x99] sm:$0xff]
        %v3710 = vld [vmem:[%s3419 + $0xa9] sm:$0xff]
        %v3711 = vld [vmem:[%s3419 + $0xb1] sm:$0xff]
        %v3712 = vld [vmem:[%s3419 + $0xc1] sm:$0xff]
        %v3713 = vld [vmem:[%s3419 + $0xc9] sm:$0xff]
        %v3714 = vld [vmem:[%s3419 + $0xd9] sm:$0xff]
        %v3715 = vld [vmem:[%s3419 + $0xe1] sm:$0xff]
        %v3716 = vld [vmem:[%s3419 + $0xf1] sm:$0xff]
        %v3717 = vld [vmem:[%s3419 + $0xf9] sm:$0xff]
        %v3718 = vld [vmem:[%s3419 + $0x109] sm:$0xff]
        %v3719 = vld [vmem:[%s3419 + $0x111] sm:$0xff]
        %v3720 = vld [vmem:[%s3419 + $0x121] sm:$0xff]
        %v3721 = vld [vmem:[%s3419 + $0x129] sm:$0xff]
        %v3722 = vld [vmem:[%s3419 + $0x139] sm:$0xff]
        %v3723 = vld [vmem:[%s3419 + $0x141] sm:$0xff]
        %v3724 = vld [vmem:[%s3419 + $0x151] sm:$0xff]
        %v3725 = vld [vmem:[%s3419 + $0x159] sm:$0xff]
        %v3726 = vld [vmem:[%s3419 + $0x169] sm:$0xff]
        %v3727 = vld [vmem:[%s3419 + $0x171] sm:$0xff]
        %s3728 = scalar_lea.vmem %s1, 208
        %v3729 = vld [vmem:[%s3728] sm:$0xff]
        %v3730 = vld [vmem:[%s3728 + $0x8] sm:$0xff]
        %v3732 = vsel %vm238, %v3696, 0
        %v3735 = vsel %vm238, %v3697, 0
        %v3738 = vsel %vm238, %v3698, 0
        %v3741 = vsel %vm238, %v3699, 0
        %v3744 = vsel %vm238, %v3700, 0
        %v3747 = vsel %vm238, %v3701, 0
        %v3750 = vsel %vm238, %v3702, 0
        %v3753 = vsel %vm238, %v3703, 0
        %v3756 = vsel %vm238, %v3704, 0
        %v3759 = vsel %vm238, %v3705, 0
        %v3762 = vsel %vm238, %v3706, 0
        %v3765 = vsel %vm238, %v3707, 0
        %v3768 = vsel %vm238, %v3708, 0
        %v3771 = vsel %vm238, %v3709, 0
        %v3774 = vsel %vm238, %v3710, 0
        %v3777 = vsel %vm238, %v3711, 0
        %v3780 = vsel %vm238, %v3712, 0
        %v3783 = vsel %vm238, %v3713, 0
        %v3786 = vsel %vm238, %v3714, 0
        %v3789 = vsel %vm238, %v3715, 0
        %v3792 = vsel %vm238, %v3716, 0
        %v3795 = vsel %vm238, %v3717, 0
        %v3798 = vsel %vm238, %v3718, 0
        %v3801 = vsel %vm238, %v3719, 0
        %v3804 = vsel %vm238, %v3720, 0
        %v3807 = vsel %vm238, %v3721, 0
        %v3810 = vsel %vm238, %v3722, 0
        %v3813 = vsel %vm238, %v3723, 0
        %v3816 = vsel %vm238, %v3724, 0
        %v3819 = vsel %vm238, %v3725, 0
        %v3822 = vsel %vm238, %v3726, 0
        %v3825 = vsel %vm238, %v3727, 0
        %3827 = vmatpush.msra.mxu0 0.0
        %3828 = vmatpush.msra.mxu0 0.0
        %3829 = vmatpush.msra.mxu0 0.0
        %3830 = vmatpush.msra.mxu0 0.0
        %3831 = vmatpush.msra.mxu0 0.0
        %3832 = vmatpush.msra.mxu0 0.0
        %3833 = vmatpush.msra.mxu0 0.0
        %3834 = vmatpush.msra.mxu0 0.0
        %3835 = vmatpush.msra.mxu0 0.0
        %3836 = vmatpush.msra.mxu0 0.0
        %3837 = vmatpush.msra.mxu0 0.0
        %3838 = vmatpush.msra.mxu0 0.0
        %3839 = vmatpush.msra.mxu0 0.0
        %3840 = vmatpush.msra.mxu0 0.0
        %3841 = vmatpush.msra.mxu0 %v3730
        %3842 = vmatpush.msra.mxu0 %v3729
        %3843 = vmatmul.f32.gmra.mxu0 %v3732
        %v3844 = vpop.f32.mrf.mxu0
        %v3845 = vadd.f32 0.0, %v3844
        %3846 = vmatmul.f32.gmra.mxu0 %v3735
        %v3847 = vpop.f32.mrf.mxu0
        %v3848 = vadd.f32 0.0, %v3847
        %3849 = vmatmul.f32.gmra.mxu0 %v3738
        %v3850 = vpop.f32.mrf.mxu0
        %v3851 = vadd.f32 0.0, %v3850
        %3852 = vmatmul.f32.gmra.mxu0 %v3741
        %v3853 = vpop.f32.mrf.mxu0
        %v3854 = vadd.f32 0.0, %v3853
        %3855 = vmatmul.f32.gmra.mxu0 %v3744
        %v3856 = vpop.f32.mrf.mxu0
        %v3857 = vadd.f32 0.0, %v3856
        %3858 = vmatmul.f32.gmra.mxu0 %v3747
        %v3859 = vpop.f32.mrf.mxu0
        %v3860 = vadd.f32 0.0, %v3859
        %3861 = vmatmul.f32.gmra.mxu0 %v3750
        %v3862 = vpop.f32.mrf.mxu0
        %v3863 = vadd.f32 0.0, %v3862
        %3864 = vmatmul.f32.gmra.mxu0 %v3753
        %v3865 = vpop.f32.mrf.mxu0
        %v3866 = vadd.f32 0.0, %v3865
        %3867 = vmatmul.f32.gmra.mxu0 %v3756
        %v3868 = vpop.f32.mrf.mxu0
        %v3869 = vadd.f32 0.0, %v3868
        %3870 = vmatmul.f32.gmra.mxu0 %v3759
        %v3871 = vpop.f32.mrf.mxu0
        %v3872 = vadd.f32 0.0, %v3871
        %3873 = vmatmul.f32.gmra.mxu0 %v3762
        %v3874 = vpop.f32.mrf.mxu0
        %v3875 = vadd.f32 0.0, %v3874
        %3876 = vmatmul.f32.gmra.mxu0 %v3765
        %v3877 = vpop.f32.mrf.mxu0
        %v3878 = vadd.f32 0.0, %v3877
        %3879 = vmatmul.f32.gmra.mxu0 %v3768
        %v3880 = vpop.f32.mrf.mxu0
        %v3881 = vadd.f32 0.0, %v3880
        %3882 = vmatmul.f32.gmra.mxu0 %v3771
        %v3883 = vpop.f32.mrf.mxu0
        %v3884 = vadd.f32 0.0, %v3883
        %3885 = vmatmul.f32.gmra.mxu0 %v3774
        %v3886 = vpop.f32.mrf.mxu0
        %v3887 = vadd.f32 0.0, %v3886
        %3888 = vmatmul.f32.gmra.mxu0 %v3777
        %v3889 = vpop.f32.mrf.mxu0
        %v3890 = vadd.f32 0.0, %v3889
        %3891 = vmatmul.f32.gmra.mxu0 %v3780
        %v3892 = vpop.f32.mrf.mxu0
        %v3893 = vadd.f32 0.0, %v3892
        %3894 = vmatmul.f32.gmra.mxu0 %v3783
        %v3895 = vpop.f32.mrf.mxu0
        %v3896 = vadd.f32 0.0, %v3895
        %3897 = vmatmul.f32.gmra.mxu0 %v3786
        %v3898 = vpop.f32.mrf.mxu0
        %v3899 = vadd.f32 0.0, %v3898
        %3900 = vmatmul.f32.gmra.mxu0 %v3789
        %v3901 = vpop.f32.mrf.mxu0
        %v3902 = vadd.f32 0.0, %v3901
        %3903 = vmatmul.f32.gmra.mxu0 %v3792
        %v3904 = vpop.f32.mrf.mxu0
        %v3905 = vadd.f32 0.0, %v3904
        %3906 = vmatmul.f32.gmra.mxu0 %v3795
        %v3907 = vpop.f32.mrf.mxu0
        %v3908 = vadd.f32 0.0, %v3907
        %3909 = vmatmul.f32.gmra.mxu0 %v3798
        %v3910 = vpop.f32.mrf.mxu0
        %v3911 = vadd.f32 0.0, %v3910
        %3912 = vmatmul.f32.gmra.mxu0 %v3801
        %v3913 = vpop.f32.mrf.mxu0
        %v3914 = vadd.f32 0.0, %v3913
        %3915 = vmatmul.f32.gmra.mxu0 %v3804
        %v3916 = vpop.f32.mrf.mxu0
        %v3917 = vadd.f32 0.0, %v3916
        %3918 = vmatmul.f32.gmra.mxu0 %v3807
        %v3919 = vpop.f32.mrf.mxu0
        %v3920 = vadd.f32 0.0, %v3919
        %3921 = vmatmul.f32.gmra.mxu0 %v3810
        %v3922 = vpop.f32.mrf.mxu0
        %v3923 = vadd.f32 0.0, %v3922
        %3924 = vmatmul.f32.gmra.mxu0 %v3813
        %v3925 = vpop.f32.mrf.mxu0
        %v3926 = vadd.f32 0.0, %v3925
        %3927 = vmatmul.f32.gmra.mxu0 %v3816
        %v3928 = vpop.f32.mrf.mxu0
        %v3929 = vadd.f32 0.0, %v3928
        %3930 = vmatmul.f32.gmra.mxu0 %v3819
        %v3931 = vpop.f32.mrf.mxu0
        %v3932 = vadd.f32 0.0, %v3931
        %3933 = vmatmul.f32.gmra.mxu0 %v3822
        %v3934 = vpop.f32.mrf.mxu0
        %v3935 = vadd.f32 0.0, %v3934
        %3936 = vmatmul.f32.gmra.mxu0 %v3825
        %v3937 = vpop.f32.mrf.mxu0
        %v3938 = vadd.f32 0.0, %v3937
        %3939 = vdwg.mxu0
        %v3940 = vadd.f32 %v3664, %v3845
        %v3941 = vadd.f32 %v3665, %v3848
        %v3942 = vadd.f32 %v3666, %v3851
        %v3943 = vadd.f32 %v3667, %v3854
        %v3944 = vadd.f32 %v3668, %v3857
        %v3945 = vadd.f32 %v3669, %v3860
        %v3946 = vadd.f32 %v3670, %v3863
        %v3947 = vadd.f32 %v3671, %v3866
        %v3948 = vadd.f32 %v3672, %v3869
        %v3949 = vadd.f32 %v3673, %v3872
        %v3950 = vadd.f32 %v3674, %v3875
        %v3951 = vadd.f32 %v3675, %v3878
        %v3952 = vadd.f32 %v3676, %v3881
        %v3953 = vadd.f32 %v3677, %v3884
        %v3954 = vadd.f32 %v3678, %v3887
        %v3955 = vadd.f32 %v3679, %v3890
        %v3956 = vadd.f32 %v3680, %v3893
        %v3957 = vadd.f32 %v3681, %v3896
        %v3958 = vadd.f32 %v3682, %v3899
        %v3959 = vadd.f32 %v3683, %v3902
        %v3960 = vadd.f32 %v3684, %v3905
        %v3961 = vadd.f32 %v3685, %v3908
        %v3962 = vadd.f32 %v3686, %v3911
        %v3963 = vadd.f32 %v3687, %v3914
        %v3964 = vadd.f32 %v3688, %v3917
        %v3965 = vadd.f32 %v3689, %v3920
        %v3966 = vadd.f32 %v3690, %v3923
        %v3967 = vadd.f32 %v3691, %v3926
        %v3968 = vadd.f32 %v3692, %v3929
        %v3969 = vadd.f32 %v3693, %v3932
        %v3970 = vadd.f32 %v3694, %v3935
        %v3971 = vadd.f32 %v3695, %v3938
        %v3972 = vld [vmem:[%s3419 + $0x2] sm:$0xff]
        %v3973 = vld [vmem:[%s3419 + $0xa] sm:$0xff]
        %v3974 = vld [vmem:[%s3419 + $0x1a] sm:$0xff]
        %v3975 = vld [vmem:[%s3419 + $0x22] sm:$0xff]
        %v3976 = vld [vmem:[%s3419 + $0x32] sm:$0xff]
        %v3977 = vld [vmem:[%s3419 + $0x3a] sm:$0xff]
        %v3978 = vld [vmem:[%s3419 + $0x4a] sm:$0xff]
        %v3979 = vld [vmem:[%s3419 + $0x52] sm:$0xff]
        %v3980 = vld [vmem:[%s3419 + $0x62] sm:$0xff]
        %v3981 = vld [vmem:[%s3419 + $0x6a] sm:$0xff]
        %v3982 = vld [vmem:[%s3419 + $0x7a] sm:$0xff]
        %v3983 = vld [vmem:[%s3419 + $0x82] sm:$0xff]
        %v3984 = vld [vmem:[%s3419 + $0x92] sm:$0xff]
        %v3985 = vld [vmem:[%s3419 + $0x9a] sm:$0xff]
        %v3986 = vld [vmem:[%s3419 + $0xaa] sm:$0xff]
        %v3987 = vld [vmem:[%s3419 + $0xb2] sm:$0xff]
        %v3988 = vld [vmem:[%s3419 + $0xc2] sm:$0xff]
        %v3989 = vld [vmem:[%s3419 + $0xca] sm:$0xff]
        %v3990 = vld [vmem:[%s3419 + $0xda] sm:$0xff]
        %v3991 = vld [vmem:[%s3419 + $0xe2] sm:$0xff]
        %v3992 = vld [vmem:[%s3419 + $0xf2] sm:$0xff]
        %v3993 = vld [vmem:[%s3419 + $0xfa] sm:$0xff]
        %v3994 = vld [vmem:[%s3419 + $0x10a] sm:$0xff]
        %v3995 = vld [vmem:[%s3419 + $0x112] sm:$0xff]
        %v3996 = vld [vmem:[%s3419 + $0x122] sm:$0xff]
        %v3997 = vld [vmem:[%s3419 + $0x12a] sm:$0xff]
        %v3998 = vld [vmem:[%s3419 + $0x13a] sm:$0xff]
        %v3999 = vld [vmem:[%s3419 + $0x142] sm:$0xff]
        %v4000 = vld [vmem:[%s3419 + $0x152] sm:$0xff]
        %v4001 = vld [vmem:[%s3419 + $0x15a] sm:$0xff]
        %v4002 = vld [vmem:[%s3419 + $0x16a] sm:$0xff]
        %v4003 = vld [vmem:[%s3419 + $0x172] sm:$0xff]
        %s4004 = scalar_lea.vmem %s1, 224
        %v4005 = vld [vmem:[%s4004] sm:$0xff]
        %v4006 = vld [vmem:[%s4004 + $0x8] sm:$0xff]
        %v4008 = vsel %vm238, %v3972, 0
        %v4011 = vsel %vm238, %v3973, 0
        %v4014 = vsel %vm238, %v3974, 0
        %v4017 = vsel %vm238, %v3975, 0
        %v4020 = vsel %vm238, %v3976, 0
        %v4023 = vsel %vm238, %v3977, 0
        %v4026 = vsel %vm238, %v3978, 0
        %v4029 = vsel %vm238, %v3979, 0
        %v4032 = vsel %vm238, %v3980, 0
        %v4035 = vsel %vm238, %v3981, 0
        %v4038 = vsel %vm238, %v3982, 0
        %v4041 = vsel %vm238, %v3983, 0
        %v4044 = vsel %vm238, %v3984, 0
        %v4047 = vsel %vm238, %v3985, 0
        %v4050 = vsel %vm238, %v3986, 0
        %v4053 = vsel %vm238, %v3987, 0
        %v4056 = vsel %vm238, %v3988, 0
        %v4059 = vsel %vm238, %v3989, 0
        %v4062 = vsel %vm238, %v3990, 0
        %v4065 = vsel %vm238, %v3991, 0
        %v4068 = vsel %vm238, %v3992, 0
        %v4071 = vsel %vm238, %v3993, 0
        %v4074 = vsel %vm238, %v3994, 0
        %v4077 = vsel %vm238, %v3995, 0
        %v4080 = vsel %vm238, %v3996, 0
        %v4083 = vsel %vm238, %v3997, 0
        %v4086 = vsel %vm238, %v3998, 0
        %v4089 = vsel %vm238, %v3999, 0
        %v4092 = vsel %vm238, %v4000, 0
        %v4095 = vsel %vm238, %v4001, 0
        %v4098 = vsel %vm238, %v4002, 0
        %v4101 = vsel %vm238, %v4003, 0
        %4103 = vmatpush.msra.mxu0 0.0
        %4104 = vmatpush.msra.mxu0 0.0
        %4105 = vmatpush.msra.mxu0 0.0
        %4106 = vmatpush.msra.mxu0 0.0
        %4107 = vmatpush.msra.mxu0 0.0
        %4108 = vmatpush.msra.mxu0 0.0
        %4109 = vmatpush.msra.mxu0 0.0
        %4110 = vmatpush.msra.mxu0 0.0
        %4111 = vmatpush.msra.mxu0 0.0
        %4112 = vmatpush.msra.mxu0 0.0
        %4113 = vmatpush.msra.mxu0 0.0
        %4114 = vmatpush.msra.mxu0 0.0
        %4115 = vmatpush.msra.mxu0 0.0
        %4116 = vmatpush.msra.mxu0 0.0
        %4117 = vmatpush.msra.mxu0 %v4006
        %4118 = vmatpush.msra.mxu0 %v4005
        %4119 = vmatmul.f32.gmra.mxu0 %v4008
        %v4120 = vpop.f32.mrf.mxu0
        %v4121 = vadd.f32 0.0, %v4120
        %4122 = vmatmul.f32.gmra.mxu0 %v4011
        %v4123 = vpop.f32.mrf.mxu0
        %v4124 = vadd.f32 0.0, %v4123
        %4125 = vmatmul.f32.gmra.mxu0 %v4014
        %v4126 = vpop.f32.mrf.mxu0
        %v4127 = vadd.f32 0.0, %v4126
        %4128 = vmatmul.f32.gmra.mxu0 %v4017
        %v4129 = vpop.f32.mrf.mxu0
        %v4130 = vadd.f32 0.0, %v4129
        %4131 = vmatmul.f32.gmra.mxu0 %v4020
        %v4132 = vpop.f32.mrf.mxu0
        %v4133 = vadd.f32 0.0, %v4132
        %4134 = vmatmul.f32.gmra.mxu0 %v4023
        %v4135 = vpop.f32.mrf.mxu0
        %v4136 = vadd.f32 0.0, %v4135
        %4137 = vmatmul.f32.gmra.mxu0 %v4026
        %v4138 = vpop.f32.mrf.mxu0
        %v4139 = vadd.f32 0.0, %v4138
        %4140 = vmatmul.f32.gmra.mxu0 %v4029
        %v4141 = vpop.f32.mrf.mxu0
        %v4142 = vadd.f32 0.0, %v4141
        %4143 = vmatmul.f32.gmra.mxu0 %v4032
        %v4144 = vpop.f32.mrf.mxu0
        %v4145 = vadd.f32 0.0, %v4144
        %4146 = vmatmul.f32.gmra.mxu0 %v4035
        %v4147 = vpop.f32.mrf.mxu0
        %v4148 = vadd.f32 0.0, %v4147
        %4149 = vmatmul.f32.gmra.mxu0 %v4038
        %v4150 = vpop.f32.mrf.mxu0
        %v4151 = vadd.f32 0.0, %v4150
        %4152 = vmatmul.f32.gmra.mxu0 %v4041
        %v4153 = vpop.f32.mrf.mxu0
        %v4154 = vadd.f32 0.0, %v4153
        %4155 = vmatmul.f32.gmra.mxu0 %v4044
        %v4156 = vpop.f32.mrf.mxu0
        %v4157 = vadd.f32 0.0, %v4156
        %4158 = vmatmul.f32.gmra.mxu0 %v4047
        %v4159 = vpop.f32.mrf.mxu0
        %v4160 = vadd.f32 0.0, %v4159
        %4161 = vmatmul.f32.gmra.mxu0 %v4050
        %v4162 = vpop.f32.mrf.mxu0
        %v4163 = vadd.f32 0.0, %v4162
        %4164 = vmatmul.f32.gmra.mxu0 %v4053
        %v4165 = vpop.f32.mrf.mxu0
        %v4166 = vadd.f32 0.0, %v4165
        %4167 = vmatmul.f32.gmra.mxu0 %v4056
        %v4168 = vpop.f32.mrf.mxu0
        %v4169 = vadd.f32 0.0, %v4168
        %4170 = vmatmul.f32.gmra.mxu0 %v4059
        %v4171 = vpop.f32.mrf.mxu0
        %v4172 = vadd.f32 0.0, %v4171
        %4173 = vmatmul.f32.gmra.mxu0 %v4062
        %v4174 = vpop.f32.mrf.mxu0
        %v4175 = vadd.f32 0.0, %v4174
        %4176 = vmatmul.f32.gmra.mxu0 %v4065
        %v4177 = vpop.f32.mrf.mxu0
        %v4178 = vadd.f32 0.0, %v4177
        %4179 = vmatmul.f32.gmra.mxu0 %v4068
        %v4180 = vpop.f32.mrf.mxu0
        %v4181 = vadd.f32 0.0, %v4180
        %4182 = vmatmul.f32.gmra.mxu0 %v4071
        %v4183 = vpop.f32.mrf.mxu0
        %v4184 = vadd.f32 0.0, %v4183
        %4185 = vmatmul.f32.gmra.mxu0 %v4074
        %v4186 = vpop.f32.mrf.mxu0
        %v4187 = vadd.f32 0.0, %v4186
        %4188 = vmatmul.f32.gmra.mxu0 %v4077
        %v4189 = vpop.f32.mrf.mxu0
        %v4190 = vadd.f32 0.0, %v4189
        %4191 = vmatmul.f32.gmra.mxu0 %v4080
        %v4192 = vpop.f32.mrf.mxu0
        %v4193 = vadd.f32 0.0, %v4192
        %4194 = vmatmul.f32.gmra.mxu0 %v4083
        %v4195 = vpop.f32.mrf.mxu0
        %v4196 = vadd.f32 0.0, %v4195
        %4197 = vmatmul.f32.gmra.mxu0 %v4086
        %v4198 = vpop.f32.mrf.mxu0
        %v4199 = vadd.f32 0.0, %v4198
        %4200 = vmatmul.f32.gmra.mxu0 %v4089
        %v4201 = vpop.f32.mrf.mxu0
        %v4202 = vadd.f32 0.0, %v4201
        %4203 = vmatmul.f32.gmra.mxu0 %v4092
        %v4204 = vpop.f32.mrf.mxu0
        %v4205 = vadd.f32 0.0, %v4204
        %4206 = vmatmul.f32.gmra.mxu0 %v4095
        %v4207 = vpop.f32.mrf.mxu0
        %v4208 = vadd.f32 0.0, %v4207
        %4209 = vmatmul.f32.gmra.mxu0 %v4098
        %v4210 = vpop.f32.mrf.mxu0
        %v4211 = vadd.f32 0.0, %v4210
        %4212 = vmatmul.f32.gmra.mxu0 %v4101
        %v4213 = vpop.f32.mrf.mxu0
        %v4214 = vadd.f32 0.0, %v4213
        %4215 = vdwg.mxu0
        %v4216 = vadd.f32 %v3940, %v4121
        %v4217 = vadd.f32 %v3941, %v4124
        %v4218 = vadd.f32 %v3942, %v4127
        %v4219 = vadd.f32 %v3943, %v4130
        %v4220 = vadd.f32 %v3944, %v4133
        %v4221 = vadd.f32 %v3945, %v4136
        %v4222 = vadd.f32 %v3946, %v4139
        %v4223 = vadd.f32 %v3947, %v4142
        %v4224 = vadd.f32 %v3948, %v4145
        %v4225 = vadd.f32 %v3949, %v4148
        %v4226 = vadd.f32 %v3950, %v4151
        %v4227 = vadd.f32 %v3951, %v4154
        %v4228 = vadd.f32 %v3952, %v4157
        %v4229 = vadd.f32 %v3953, %v4160
        %v4230 = vadd.f32 %v3954, %v4163
        %v4231 = vadd.f32 %v3955, %v4166
        %v4232 = vadd.f32 %v3956, %v4169
        %v4233 = vadd.f32 %v3957, %v4172
        %v4234 = vadd.f32 %v3958, %v4175
        %v4235 = vadd.f32 %v3959, %v4178
        %v4236 = vadd.f32 %v3960, %v4181
        %v4237 = vadd.f32 %v3961, %v4184
        %v4238 = vadd.f32 %v3962, %v4187
        %v4239 = vadd.f32 %v3963, %v4190
        %v4240 = vadd.f32 %v3964, %v4193
        %v4241 = vadd.f32 %v3965, %v4196
        %v4242 = vadd.f32 %v3966, %v4199
        %v4243 = vadd.f32 %v3967, %v4202
        %v4244 = vadd.f32 %v3968, %v4205
        %v4245 = vadd.f32 %v3969, %v4208
        %v4246 = vadd.f32 %v3970, %v4211
        %v4247 = vadd.f32 %v3971, %v4214
        %v4248 = vld [vmem:[%s3419 + $0x3] sm:$0xff]
        %v4249 = vld [vmem:[%s3419 + $0xb] sm:$0xff]
        %v4250 = vld [vmem:[%s3419 + $0x1b] sm:$0xff]
        %v4251 = vld [vmem:[%s3419 + $0x23] sm:$0xff]
        %v4252 = vld [vmem:[%s3419 + $0x33] sm:$0xff]
        %v4253 = vld [vmem:[%s3419 + $0x3b] sm:$0xff]
        %v4254 = vld [vmem:[%s3419 + $0x4b] sm:$0xff]
        %v4255 = vld [vmem:[%s3419 + $0x53] sm:$0xff]
        %v4256 = vld [vmem:[%s3419 + $0x63] sm:$0xff]
        %v4257 = vld [vmem:[%s3419 + $0x6b] sm:$0xff]
        %v4258 = vld [vmem:[%s3419 + $0x7b] sm:$0xff]
        %v4259 = vld [vmem:[%s3419 + $0x83] sm:$0xff]
        %v4260 = vld [vmem:[%s3419 + $0x93] sm:$0xff]
        %v4261 = vld [vmem:[%s3419 + $0x9b] sm:$0xff]
        %v4262 = vld [vmem:[%s3419 + $0xab] sm:$0xff]
        %v4263 = vld [vmem:[%s3419 + $0xb3] sm:$0xff]
        %v4264 = vld [vmem:[%s3419 + $0xc3] sm:$0xff]
        %v4265 = vld [vmem:[%s3419 + $0xcb] sm:$0xff]
        %v4266 = vld [vmem:[%s3419 + $0xdb] sm:$0xff]
        %v4267 = vld [vmem:[%s3419 + $0xe3] sm:$0xff]
        %v4268 = vld [vmem:[%s3419 + $0xf3] sm:$0xff]
        %v4269 = vld [vmem:[%s3419 + $0xfb] sm:$0xff]
        %v4270 = vld [vmem:[%s3419 + $0x10b] sm:$0xff]
        %v4271 = vld [vmem:[%s3419 + $0x113] sm:$0xff]
        %v4272 = vld [vmem:[%s3419 + $0x123] sm:$0xff]
        %v4273 = vld [vmem:[%s3419 + $0x12b] sm:$0xff]
        %v4274 = vld [vmem:[%s3419 + $0x13b] sm:$0xff]
        %v4275 = vld [vmem:[%s3419 + $0x143] sm:$0xff]
        %v4276 = vld [vmem:[%s3419 + $0x153] sm:$0xff]
        %v4277 = vld [vmem:[%s3419 + $0x15b] sm:$0xff]
        %v4278 = vld [vmem:[%s3419 + $0x16b] sm:$0xff]
        %v4279 = vld [vmem:[%s3419 + $0x173] sm:$0xff]
        %s4280 = scalar_lea.vmem %s1, 240
        %v4281 = vld [vmem:[%s4280] sm:$0xff]
        %v4282 = vld [vmem:[%s4280 + $0x8] sm:$0xff]
        %v4284 = vsel %vm238, %v4248, 0
        %v4287 = vsel %vm238, %v4249, 0
        %v4290 = vsel %vm238, %v4250, 0
        %v4293 = vsel %vm238, %v4251, 0
        %v4296 = vsel %vm238, %v4252, 0
        %v4299 = vsel %vm238, %v4253, 0
        %v4302 = vsel %vm238, %v4254, 0
        %v4305 = vsel %vm238, %v4255, 0
        %v4308 = vsel %vm238, %v4256, 0
        %v4311 = vsel %vm238, %v4257, 0
        %v4314 = vsel %vm238, %v4258, 0
        %v4317 = vsel %vm238, %v4259, 0
        %v4320 = vsel %vm238, %v4260, 0
        %v4323 = vsel %vm238, %v4261, 0
        %v4326 = vsel %vm238, %v4262, 0
        %v4329 = vsel %vm238, %v4263, 0
        %v4332 = vsel %vm238, %v4264, 0
        %v4335 = vsel %vm238, %v4265, 0
        %v4338 = vsel %vm238, %v4266, 0
        %v4341 = vsel %vm238, %v4267, 0
        %v4344 = vsel %vm238, %v4268, 0
        %v4347 = vsel %vm238, %v4269, 0
        %v4350 = vsel %vm238, %v4270, 0
        %v4353 = vsel %vm238, %v4271, 0
        %v4356 = vsel %vm238, %v4272, 0
        %v4359 = vsel %vm238, %v4273, 0
        %v4362 = vsel %vm238, %v4274, 0
        %v4365 = vsel %vm238, %v4275, 0
        %v4368 = vsel %vm238, %v4276, 0
        %v4371 = vsel %vm238, %v4277, 0
        %v4374 = vsel %vm238, %v4278, 0
        %v4377 = vsel %vm238, %v4279, 0
        %4379 = vmatpush.msra.mxu0 0.0
        %4380 = vmatpush.msra.mxu0 0.0
        %4381 = vmatpush.msra.mxu0 0.0
        %4382 = vmatpush.msra.mxu0 0.0
        %4383 = vmatpush.msra.mxu0 0.0
        %4384 = vmatpush.msra.mxu0 0.0
        %4385 = vmatpush.msra.mxu0 0.0
        %4386 = vmatpush.msra.mxu0 0.0
        %4387 = vmatpush.msra.mxu0 0.0
        %4388 = vmatpush.msra.mxu0 0.0
        %4389 = vmatpush.msra.mxu0 0.0
        %4390 = vmatpush.msra.mxu0 0.0
        %4391 = vmatpush.msra.mxu0 0.0
        %4392 = vmatpush.msra.mxu0 0.0
        %4393 = vmatpush.msra.mxu0 %v4282
        %4394 = vmatpush.msra.mxu0 %v4281
        %4395 = vmatmul.f32.gmra.mxu0 %v4284
        %v4396 = vpop.f32.mrf.mxu0
        %v4397 = vadd.f32 0.0, %v4396
        %4398 = vmatmul.f32.gmra.mxu0 %v4287
        %v4399 = vpop.f32.mrf.mxu0
        %v4400 = vadd.f32 0.0, %v4399
        %4401 = vmatmul.f32.gmra.mxu0 %v4290
        %v4402 = vpop.f32.mrf.mxu0
        %v4403 = vadd.f32 0.0, %v4402
        %4404 = vmatmul.f32.gmra.mxu0 %v4293
        %v4405 = vpop.f32.mrf.mxu0
        %v4406 = vadd.f32 0.0, %v4405
        %4407 = vmatmul.f32.gmra.mxu0 %v4296
        %v4408 = vpop.f32.mrf.mxu0
        %v4409 = vadd.f32 0.0, %v4408
        %4410 = vmatmul.f32.gmra.mxu0 %v4299
        %v4411 = vpop.f32.mrf.mxu0
        %v4412 = vadd.f32 0.0, %v4411
        %4413 = vmatmul.f32.gmra.mxu0 %v4302
        %v4414 = vpop.f32.mrf.mxu0
        %v4415 = vadd.f32 0.0, %v4414
        %4416 = vmatmul.f32.gmra.mxu0 %v4305
        %v4417 = vpop.f32.mrf.mxu0
        %v4418 = vadd.f32 0.0, %v4417
        %4419 = vmatmul.f32.gmra.mxu0 %v4308
        %v4420 = vpop.f32.mrf.mxu0
        %v4421 = vadd.f32 0.0, %v4420
        %4422 = vmatmul.f32.gmra.mxu0 %v4311
        %v4423 = vpop.f32.mrf.mxu0
        %v4424 = vadd.f32 0.0, %v4423
        %4425 = vmatmul.f32.gmra.mxu0 %v4314
        %v4426 = vpop.f32.mrf.mxu0
        %v4427 = vadd.f32 0.0, %v4426
        %4428 = vmatmul.f32.gmra.mxu0 %v4317
        %v4429 = vpop.f32.mrf.mxu0
        %v4430 = vadd.f32 0.0, %v4429
        %4431 = vmatmul.f32.gmra.mxu0 %v4320
        %v4432 = vpop.f32.mrf.mxu0
        %v4433 = vadd.f32 0.0, %v4432
        %4434 = vmatmul.f32.gmra.mxu0 %v4323
        %v4435 = vpop.f32.mrf.mxu0
        %v4436 = vadd.f32 0.0, %v4435
        %4437 = vmatmul.f32.gmra.mxu0 %v4326
        %v4438 = vpop.f32.mrf.mxu0
        %v4439 = vadd.f32 0.0, %v4438
        %4440 = vmatmul.f32.gmra.mxu0 %v4329
        %v4441 = vpop.f32.mrf.mxu0
        %v4442 = vadd.f32 0.0, %v4441
        %4443 = vmatmul.f32.gmra.mxu0 %v4332
        %v4444 = vpop.f32.mrf.mxu0
        %v4445 = vadd.f32 0.0, %v4444
        %4446 = vmatmul.f32.gmra.mxu0 %v4335
        %v4447 = vpop.f32.mrf.mxu0
        %v4448 = vadd.f32 0.0, %v4447
        %4449 = vmatmul.f32.gmra.mxu0 %v4338
        %v4450 = vpop.f32.mrf.mxu0
        %v4451 = vadd.f32 0.0, %v4450
        %4452 = vmatmul.f32.gmra.mxu0 %v4341
        %v4453 = vpop.f32.mrf.mxu0
        %v4454 = vadd.f32 0.0, %v4453
        %4455 = vmatmul.f32.gmra.mxu0 %v4344
        %v4456 = vpop.f32.mrf.mxu0
        %v4457 = vadd.f32 0.0, %v4456
        %4458 = vmatmul.f32.gmra.mxu0 %v4347
        %v4459 = vpop.f32.mrf.mxu0
        %v4460 = vadd.f32 0.0, %v4459
        %4461 = vmatmul.f32.gmra.mxu0 %v4350
        %v4462 = vpop.f32.mrf.mxu0
        %v4463 = vadd.f32 0.0, %v4462
        %4464 = vmatmul.f32.gmra.mxu0 %v4353
        %v4465 = vpop.f32.mrf.mxu0
        %v4466 = vadd.f32 0.0, %v4465
        %4467 = vmatmul.f32.gmra.mxu0 %v4356
        %v4468 = vpop.f32.mrf.mxu0
        %v4469 = vadd.f32 0.0, %v4468
        %4470 = vmatmul.f32.gmra.mxu0 %v4359
        %v4471 = vpop.f32.mrf.mxu0
        %v4472 = vadd.f32 0.0, %v4471
        %4473 = vmatmul.f32.gmra.mxu0 %v4362
        %v4474 = vpop.f32.mrf.mxu0
        %v4475 = vadd.f32 0.0, %v4474
        %4476 = vmatmul.f32.gmra.mxu0 %v4365
        %v4477 = vpop.f32.mrf.mxu0
        %v4478 = vadd.f32 0.0, %v4477
        %4479 = vmatmul.f32.gmra.mxu0 %v4368
        %v4480 = vpop.f32.mrf.mxu0
        %v4481 = vadd.f32 0.0, %v4480
        %4482 = vmatmul.f32.gmra.mxu0 %v4371
        %v4483 = vpop.f32.mrf.mxu0
        %v4484 = vadd.f32 0.0, %v4483
        %4485 = vmatmul.f32.gmra.mxu0 %v4374
        %v4486 = vpop.f32.mrf.mxu0
        %v4487 = vadd.f32 0.0, %v4486
        %4488 = vmatmul.f32.gmra.mxu0 %v4377
        %v4489 = vpop.f32.mrf.mxu0
        %v4490 = vadd.f32 0.0, %v4489
        %4491 = vdwg.mxu0
        %v4492 = vadd.f32 %v4216, %v4397
        %v4493 = vadd.f32 %v4217, %v4400
        %v4494 = vadd.f32 %v4218, %v4403
        %v4495 = vadd.f32 %v4219, %v4406
        %v4496 = vadd.f32 %v4220, %v4409
        %v4497 = vadd.f32 %v4221, %v4412
        %v4498 = vadd.f32 %v4222, %v4415
        %v4499 = vadd.f32 %v4223, %v4418
        %v4500 = vadd.f32 %v4224, %v4421
        %v4501 = vadd.f32 %v4225, %v4424
        %v4502 = vadd.f32 %v4226, %v4427
        %v4503 = vadd.f32 %v4227, %v4430
        %v4504 = vadd.f32 %v4228, %v4433
        %v4505 = vadd.f32 %v4229, %v4436
        %v4506 = vadd.f32 %v4230, %v4439
        %v4507 = vadd.f32 %v4231, %v4442
        %v4508 = vadd.f32 %v4232, %v4445
        %v4509 = vadd.f32 %v4233, %v4448
        %v4510 = vadd.f32 %v4234, %v4451
        %v4511 = vadd.f32 %v4235, %v4454
        %v4512 = vadd.f32 %v4236, %v4457
        %v4513 = vadd.f32 %v4237, %v4460
        %v4514 = vadd.f32 %v4238, %v4463
        %v4515 = vadd.f32 %v4239, %v4466
        %v4516 = vadd.f32 %v4240, %v4469
        %v4517 = vadd.f32 %v4241, %v4472
        %v4518 = vadd.f32 %v4242, %v4475
        %v4519 = vadd.f32 %v4243, %v4478
        %v4520 = vadd.f32 %v4244, %v4481
        %v4521 = vadd.f32 %v4245, %v4484
        %v4522 = vadd.f32 %v4246, %v4487
        %v4523 = vadd.f32 %v4247, %v4490
        %v4524 = vmul.f32 %v4492, 0.0625
        %v4525 = vmul.f32 %v4493, 0.0625
        %v4526 = vmul.f32 %v4494, 0.0625
        %v4527 = vmul.f32 %v4495, 0.0625
        %v4528 = vmul.f32 %v4496, 0.0625
        %v4529 = vmul.f32 %v4497, 0.0625
        %v4530 = vmul.f32 %v4498, 0.0625
        %v4531 = vmul.f32 %v4499, 0.0625
        %v4532 = vmul.f32 %v4500, 0.0625
        %v4533 = vmul.f32 %v4501, 0.0625
        %v4534 = vmul.f32 %v4502, 0.0625
        %v4535 = vmul.f32 %v4503, 0.0625
        %v4536 = vmul.f32 %v4504, 0.0625
        %v4537 = vmul.f32 %v4505, 0.0625
        %v4538 = vmul.f32 %v4506, 0.0625
        %v4539 = vmul.f32 %v4507, 0.0625
        %v4540 = vmul.f32 %v4508, 0.0625
        %v4541 = vmul.f32 %v4509, 0.0625
        %v4542 = vmul.f32 %v4510, 0.0625
        %v4543 = vmul.f32 %v4511, 0.0625
        %v4544 = vmul.f32 %v4512, 0.0625
        %v4545 = vmul.f32 %v4513, 0.0625
        %v4546 = vmul.f32 %v4514, 0.0625
        %v4547 = vmul.f32 %v4515, 0.0625
        %v4548 = vmul.f32 %v4516, 0.0625
        %v4549 = vmul.f32 %v4517, 0.0625
        %v4550 = vmul.f32 %v4518, 0.0625
        %v4551 = vmul.f32 %v4519, 0.0625
        %v4552 = vmul.f32 %v4520, 0.0625
        %v4553 = vmul.f32 %v4521, 0.0625
        %v4554 = vmul.f32 %v4522, 0.0625
        %v4555 = vmul.f32 %v4523, 0.0625
        %v4556 = vld [vmem:[%s2] sm:$0x1]
        %v4558 = vperm.slane %v4556, 0
        %v4560 = vadd.f32 %v4524, %v4558
        %v4561 = vadd.f32 %v4525, %v4558
        %v4562 = vadd.f32 %v4526, %v4558
        %v4563 = vadd.f32 %v4527, %v4558
        %v4564 = vadd.f32 %v4528, %v4558
        %v4565 = vadd.f32 %v4529, %v4558
        %v4566 = vadd.f32 %v4530, %v4558
        %v4567 = vadd.f32 %v4531, %v4558
        %v4568 = vadd.f32 %v4532, %v4558
        %v4569 = vadd.f32 %v4533, %v4558
        %v4570 = vadd.f32 %v4534, %v4558
        %v4571 = vadd.f32 %v4535, %v4558
        %v4572 = vadd.f32 %v4536, %v4558
        %v4573 = vadd.f32 %v4537, %v4558
        %v4574 = vadd.f32 %v4538, %v4558
        %v4575 = vadd.f32 %v4539, %v4558
        %v4576 = vadd.f32 %v4540, %v4558
        %v4577 = vadd.f32 %v4541, %v4558
        %v4578 = vadd.f32 %v4542, %v4558
        %v4579 = vadd.f32 %v4543, %v4558
        %v4580 = vadd.f32 %v4544, %v4558
        %v4581 = vadd.f32 %v4545, %v4558
        %v4582 = vadd.f32 %v4546, %v4558
        %v4583 = vadd.f32 %v4547, %v4558
        %v4584 = vadd.f32 %v4548, %v4558
        %v4585 = vadd.f32 %v4549, %v4558
        %v4586 = vadd.f32 %v4550, %v4558
        %v4587 = vadd.f32 %v4551, %v4558
        %v4588 = vadd.f32 %v4552, %v4558
        %v4589 = vadd.f32 %v4553, %v4558
        %v4590 = vadd.f32 %v4554, %v4558
        %v4591 = vadd.f32 %v4555, %v4558
        %vm4592 = vcmask 261120
        %4593 = vst.msk [vmem:[%s163] sm:$0xff] %vm4592, %v4560
        %4594 = vst.msk [vmem:[%s163 + $0x8] sm:$0xff] %vm4592, %v4561
        %4595 = vst.msk [vmem:[%s163 + $0x10] sm:$0xff] %vm4592, %v4562
        %4596 = vst.msk [vmem:[%s163 + $0x18] sm:$0xff] %vm4592, %v4563
        %4597 = vst.msk [vmem:[%s163 + $0x20] sm:$0xff] %vm4592, %v4564
        %4598 = vst.msk [vmem:[%s163 + $0x28] sm:$0xff] %vm4592, %v4565
        %4599 = vst.msk [vmem:[%s163 + $0x30] sm:$0xff] %vm4592, %v4566
        %4600 = vst.msk [vmem:[%s163 + $0x38] sm:$0xff] %vm4592, %v4567
        %4601 = vst.msk [vmem:[%s163 + $0x40] sm:$0xff] %vm4592, %v4568
        %4602 = vst.msk [vmem:[%s163 + $0x48] sm:$0xff] %vm4592, %v4569
        %4603 = vst.msk [vmem:[%s163 + $0x50] sm:$0xff] %vm4592, %v4570
        %4604 = vst.msk [vmem:[%s163 + $0x58] sm:$0xff] %vm4592, %v4571
        %4605 = vst.msk [vmem:[%s163 + $0x60] sm:$0xff] %vm4592, %v4572
        %4606 = vst.msk [vmem:[%s163 + $0x68] sm:$0xff] %vm4592, %v4573
        %4607 = vst.msk [vmem:[%s163 + $0x70] sm:$0xff] %vm4592, %v4574
        %4608 = vst.msk [vmem:[%s163 + $0x78] sm:$0xff] %vm4592, %v4575
        %4609 = vst.msk [vmem:[%s163 + $0x80] sm:$0xff] %vm4592, %v4576
        %4610 = vst.msk [vmem:[%s163 + $0x88] sm:$0xff] %vm4592, %v4577
        %4611 = vst.msk [vmem:[%s163 + $0x90] sm:$0xff] %vm4592, %v4578
        %4612 = vst.msk [vmem:[%s163 + $0x98] sm:$0xff] %vm4592, %v4579
        %4613 = vst.msk [vmem:[%s163 + $0xa0] sm:$0xff] %vm4592, %v4580
        %4614 = vst.msk [vmem:[%s163 + $0xa8] sm:$0xff] %vm4592, %v4581
        %4615 = vst.msk [vmem:[%s163 + $0xb0] sm:$0xff] %vm4592, %v4582
        %4616 = vst.msk [vmem:[%s163 + $0xb8] sm:$0xff] %vm4592, %v4583
        %4617 = vst.msk [vmem:[%s163 + $0xc0] sm:$0xff] %vm4592, %v4584
        %4618 = vst.msk [vmem:[%s163 + $0xc8] sm:$0xff] %vm4592, %v4585
        %4619 = vst.msk [vmem:[%s163 + $0xd0] sm:$0xff] %vm4592, %v4586
        %4620 = vst.msk [vmem:[%s163 + $0xd8] sm:$0xff] %vm4592, %v4587
        %4621 = vst.msk [vmem:[%s163 + $0xe0] sm:$0xff] %vm4592, %v4588
        %4622 = vst.msk [vmem:[%s163 + $0xe8] sm:$0xff] %vm4592, %v4589
        %4623 = vst.msk [vmem:[%s163 + $0xf0] sm:$0xff] %vm4592, %v4590
        %4624 = vst.msk [vmem:[%s163 + $0xf8] sm:$0xff] %vm4592, %v4591
        %s4625 = sand.u32 %s93, 1
        %s4626 = scalar_lea.sflag [#allocation3], %s4625
        %s4627 = sand.u32 %s93, 1
        %s4628 = smul.addr %s4627, 256
        %s4629 = scalar_lea.vmem [#allocation2], %s4628
        // Predicated region
        $region33: #{tpu_custom_call.1} parent=31 // pred_check
          %p4630 = pneg %p103
        $region34: #{tpu_custom_call.1} parent=31 // pred_check_branch
          %4632 = sbr.rel (%p4630) target = $region36
        $region35: #{tpu_custom_call.1} parent=31 // pred_region
          %4634 = vsyncadd %s4626, 0
          %s4635 = smul.addr %s17, 32
          %s4636 = smul.addr %s4635, 8
          %s4637 = scalar_lea.hbm %s3, %s4636
          %s4638 = sshll.u32 %s4629, 4
          %s4639 = int_to_ptr.vmem [resolvable:$true] %s4638
          %s4640 = sshll.u32 %s4637, 4
          %s4641 = int_to_ptr.hbm [resolvable:$true] %s4640
          %4646 = dma.vmem_to_hbm [thread:$0]  %s4639, 4096, %s4641, %s4626, 128, 128, 8
        $region36: #{tpu_custom_call.1} parent=31 // pred_fallthru
          _
      $region32: #{tpu_custom_call.1} parent=5 // pred_fallthru
        _
      %p4647 = scmp.le.s32.totalorder 2, %s12
      // Predicated region
      $region37: #{tpu_custom_call.1} parent=5 // pred_check
        %p4648 = pneg %p4647
      $region38: #{tpu_custom_call.1} parent=5 // pred_check_branch
        %4650 = sbr.rel (%p4648) target = $region40
      $region39: #{tpu_custom_call.1} parent=5 // pred_region
        %s4651 = ssub.s32 %s12, 2
        // Predicated region
        $region41: #{tpu_custom_call.1} parent=39 // pred_check
          %p4652 = pneg %p109
        $region42: #{tpu_custom_call.1} parent=39 // pred_check_branch
          %4654 = sbr.rel (%p4652) target = $region44
        $region43: #{tpu_custom_call.1} parent=39 // pred_region
          %s4655 = sand.u32 %s94, 1
          %s4656 = scalar_lea.sflag [#allocation3], %s4655
          %s4657 = sand.u32 %s94, 1
          %s4658 = smul.addr %s4657, 256
          %s4659 = scalar_lea.vmem [#allocation2], %s4658
          %4661 = dma.done %s4656, 4096
        $region44: #{tpu_custom_call.1} parent=39 // pred_fallthru
          _
      $region40: #{tpu_custom_call.1} parent=5 // pred_fallthru
        _
    $region6: #{tpu_custom_call.1} parent=1 // loop_footer
      %s16 = sadd.s32 1, %s12
    $region7: #{tpu_custom_call.1} parent=1 // loop_footer_branch
      %11 = sbr.rel target = $region3
    $region8: #{tpu_custom_call.1} parent=1 // loop_exit
      _
    %4662 = vsyncpa [#allocation3], 1
    %s4663 = scalar_lea.sflag [#allocation3], 1
    %4664 = vsyncpa %s4663, 1

</llo_original>
